<compile_context>
chip_gen: v7x
topology: tpu7x:2x2x1
jax: 0.10.0
libtpu: 0.0.40
codegen_flags: <defaults>
</compile_context>

<pallas_src>
import functools

import jax
import jax.numpy as jnp
from jax import lax
from jax.experimental import pallas as pl
from jax.experimental.pallas import tpu as pltpu

BF16 = jnp.bfloat16
F32 = jnp.float32

# Row layout of the per-layer packed vector table.
(ROW_FF1_LNG, ROW_FF1_LNB, ROW_FF1_B1, ROW_FF1_B2,
 ROW_AT_LNG, ROW_AT_LNB, ROW_AT_BQKV, ROW_AT_BO,
 ROW_CV_LNG, ROW_CV_LNB, ROW_CV_B1A, ROW_CV_B1G,
 ROW_CV_DWB, ROW_CV_BNS, ROW_CV_BNB, ROW_CV_B2,
 ROW_FF2_LNG, ROW_FF2_LNB, ROW_FF2_B1, ROW_FF2_B2,
 ROW_LNG, ROW_LNB, ROW_DWW0) = range(23)


# ----------------------------- in-kernel helpers -----------------------------

def _ln(x, g, b, eps=1e-5):
    m = jnp.mean(x, axis=-1, keepdims=True)
    v = jnp.mean(jnp.square(x - m), axis=-1, keepdims=True)
    return (x - m) * lax.rsqrt(v + eps) * g + b


def _mm(a, w_ref, b):
    """bf16 x bf16 matmul with f32 accumulation + f32 bias (value)."""
    return jnp.dot(a.astype(BF16), w_ref[...], preferred_element_type=F32) + b


# ----------------------------- Pallas kernels -----------------------------

def _in_proj_pe_kernel(x_ref, w_ref, pe_ref, o_ref, *, bt, seq, din, dim):
    x = x_ref[...].astype(F32).reshape(bt * seq, din)
    y = jnp.dot(x.astype(BF16), w_ref[...], preferred_element_type=F32)
    y = y.reshape(bt, seq, dim) + pe_ref[...]        # pe has the bias folded in
    o_ref[...] = y.astype(o_ref.dtype)


def _conformer_block_kernel(
        x_ref,
        ff1_w1, ff1_w2, at_wqkv, at_wo,
        cv_w1a, cv_w1g, cv_w2, ff2_w1, ff2_w2,
        vec_ref,
        o_ref,
        hpad_ref,
        *, bt, seq, dim, heads, dim_head, ksize, ff_inner, conv_inner):
    hdh = heads * dim_head
    pad = (ksize - 1) // 2
    top = ((pad + 7) // 8) * 8                       # 8-aligned store offset
    scale = dim_head ** -0.5

    def vrow(i, w):                                  # (1, w) slice of the table
        return vec_ref[i:i + 1, :w]

    x = x_ref[...].astype(F32).reshape(bt * seq, dim)

    # ---- FeedForward 1 (0.5x residual) -------------------------------------
    xn = _ln(x, vrow(ROW_FF1_LNG, dim), vrow(ROW_FF1_LNB, dim))
    h = _mm(xn, ff1_w1, vrow(ROW_FF1_B1, ff_inner))
    h = h * jax.nn.sigmoid(h)                        # SiLU
    x = x + 0.5 * _mm(h, ff1_w2, vrow(ROW_FF1_B2, dim))

    # ---- Multi-head self attention (fused QKV, one K-transpose / sequence,
    # ---- single fused output projection) ------------------------------------
    xn = _ln(x, vrow(ROW_AT_LNG, dim), vrow(ROW_AT_LNB, dim))
    qkv = _mm(xn, at_wqkv, vrow(ROW_AT_BQKV, 3 * hdh)).reshape(bt, seq, 3 * hdh)
    per_seq = []
    for b in range(bt):                              # static unroll, bt small
        qkv_b = qkv[b]                               # (S, 3*H*Dh)
        q_b = qkv_b[:, :hdh].astype(BF16)
        kt_b = jnp.transpose(qkv_b[:, hdh:2 * hdh]).astype(BF16)   # (H*Dh, S)
        v_b = qkv_b[:, 2 * hdh:].astype(BF16)
        head_outs = []
        for hh in range(heads):                      # static unroll, H small
            sl = slice(hh * dim_head, (hh + 1) * dim_head)
            s = jnp.dot(q_b[:, sl], kt_b[sl, :],
                        preferred_element_type=F32) * scale
            s = s - jnp.max(s, axis=-1, keepdims=True)
            p = jnp.exp(s)
            p = p * pl.reciprocal(jnp.sum(p, axis=-1, keepdims=True),
                                  approx=True)
            head_outs.append(jnp.dot(p.astype(BF16), v_b[:, sl],
                                     preferred_element_type=F32))
        per_seq.append(jnp.concatenate(head_outs, axis=-1))        # (S, H*Dh)
    o_all = per_seq[0] if bt == 1 else jnp.concatenate(per_seq, axis=0)
    x = x + _mm(o_all, at_wo, vrow(ROW_AT_BO, dim))  # one (Bt*S,HDh)@(HDh,D)

    # ---- Conformer convolution module (pw1+GLU fused, depthwise conv as
    # ---- K static row-slices of a zero-padded VMEM scratch + VPU MAC) -------
    xn = _ln(x, vrow(ROW_CV_LNG, dim), vrow(ROW_CV_LNB, dim))
    xnb = xn.astype(BF16)
    a = (jnp.dot(xnb, cv_w1a[...], preferred_element_type=F32)
         + vrow(ROW_CV_B1A, conv_inner))
    g = (jnp.dot(xnb, cv_w1g[...], preferred_element_type=F32)
         + vrow(ROW_CV_B1G, conv_inner))
    hg = a * jax.nn.sigmoid(g)                       # GLU
    hpad_ref[...] = jnp.zeros(hpad_ref.shape, F32)
    hpad_ref[:, top:top + seq, :] = hg.reshape(bt, seq, conv_inner)
    acc = jnp.zeros((bt, seq, conv_inner), F32)
    for k in range(ksize):                           # static unrolled taps
        start = top - pad + k
        acc = acc + (hpad_ref[:, start:start + seq, :]
                     * vrow(ROW_DWW0 + k, conv_inner))
    y = acc.reshape(bt * seq, conv_inner) + vrow(ROW_CV_DWB, conv_inner)
    y = y * vrow(ROW_CV_BNS, conv_inner) + vrow(ROW_CV_BNB, conv_inner)  # BN(eval)
    y = y * jax.nn.sigmoid(y)                        # SiLU
    x = x + _mm(y, cv_w2, vrow(ROW_CV_B2, dim))      # pointwise conv2 + residual

    # ---- FeedForward 2 (0.5x residual) + final LayerNorm --------------------
    xn = _ln(x, vrow(ROW_FF2_LNG, dim), vrow(ROW_FF2_LNB, dim))
    h = _mm(xn, ff2_w1, vrow(ROW_FF2_B1, ff_inner))
    h = h * jax.nn.sigmoid(h)
    x = x + 0.5 * _mm(h, ff2_w2, vrow(ROW_FF2_B2, dim))
    out = _ln(x, vrow(ROW_LNG, dim), vrow(ROW_LNB, dim))
    o_ref[...] = out.reshape(bt, seq, dim).astype(o_ref.dtype)


def _pool_cls_kernel(x_ref, pw1, pb1, pw2t, pb2,
                     cw1, cb1, clng, clnb, cw2, cb2, o_ref, *, bt, seq, dim):
    x = x_ref[...].astype(F32)                                     # (Bt, S, D)
    xf = x.reshape(bt * seq, dim)
    h = jnp.tanh(_mm(xf, pw1, pb1[...]))                           # (Bt*S, D/2)
    s = jnp.sum(h * pw2t[...], axis=-1, keepdims=True) + pb2[...]  # (Bt*S, 1)
    s3 = s.reshape(bt, seq, 1)
    pooled_rows = []
    for b in range(bt):                                            # static
        sb = s3[b] - jnp.max(s3[b], axis=0, keepdims=True)
        pb = jnp.exp(sb)
        pb = pb / jnp.sum(pb, axis=0, keepdims=True)   # exact: feeds classifier
        pooled_rows.append(jnp.sum(pb * x[b], axis=0, keepdims=True))  # (1, D)
    pooled = (pooled_rows[0] if bt == 1
              else jnp.concatenate(pooled_rows, axis=0))           # (Bt, D)
    c = _mm(pooled, cw1, cb1[...])
    c = jnp.maximum(_ln(c, clng[...], clnb[...]), 0.0)             # LN + ReLU
    logits = _mm(c, cw2, cb2[...])                                 # (Bt, ncls)
    o_ref[...] = logits.reshape(o_ref.shape)


# ----------------------------- pallas_call wrappers -----------------------------

def _const_spec(a):
    nd = a.ndim
    return pl.BlockSpec(a.shape, lambda *_g, _nd=nd: (0,) * _nd,
                        pipeline_mode=pl.Buffered(1))


def _nbytes(a):
    return int(a.size) * jnp.dtype(a.dtype).itemsize


def _compiler_params(vmem_est):
    return pltpu.CompilerParams(
        dimension_semantics=("parallel",),
        vmem_limit_bytes=int(min(64 << 20, max(32 << 20, vmem_est))),
    )


def _choose_bt(batch, seq, target_rows=256):
    """Sequences per grid step: fill MXU rows but keep >=2 steps for dual-TC."""
    bt = max(1, min(batch, max(1, target_rows // max(seq, 1))))
    while batch % bt:
        bt -= 1
    if batch // bt < 2 and batch >= 2:
        bt = max(1, batch // 2)
        while batch % bt:
            bt -= 1
    return bt


def input_projection(params, pe_b, x, bt):
    batch, seq, din = x.shape
    dim = pe_b.shape[-1]
    w = params["in_proj_w"]
    kern = functools.partial(_in_proj_pe_kernel, bt=bt, seq=seq, din=din, dim=dim)
    est = 4 * bt * seq * (din * 4 + dim * 2) + 2 * (_nbytes(w) + _nbytes(pe_b)) \
        + (8 << 20)
    return pl.pallas_call(
        kern,
        out_shape=jax.ShapeDtypeStruct((batch, seq, dim), BF16),
        grid=(batch // bt,),
        in_specs=[pl.BlockSpec((bt, seq, din), lambda g: (g, 0, 0)),
                  _const_spec(w), _const_spec(pe_b)],
        out_specs=pl.BlockSpec((bt, seq, dim), lambda g: (g, 0, 0)),
        compiler_params=_compiler_params(est),
    )(x, w, pe_b)


def conformer_block(cfg, lp, x, bt):
    batch, seq, dim = x.shape
    heads, dim_head = cfg["heads"], cfg["dim_head"]
    ksize = cfg["kernel_size"]
    ff_inner, conv_inner = cfg["ff_inner"], cfg["conv_inner"]
    pad = (ksize - 1) // 2
    top = ((pad + 7) // 8) * 8
    hdh = heads * dim_head

    weights = [lp["ff1_w1"], lp["ff1_w2"], lp["at_wqkv"], lp["at_wo"],
               lp["cv_w1a"], lp["cv_w1g"], lp["cv_w2"],
               lp["ff2_w1"], lp["ff2_w2"], lp["vecs"]]
    w_bytes = sum(_nbytes(w) for w in weights)
    act_bytes = bt * seq * dim * 2
    scratch_bytes = bt * (top + seq + pad) * conv_inner * 4
    est = 2 * w_bytes + 4 * act_bytes + scratch_bytes + (16 << 20)

    toks = batch * seq
    macs = toks * (4 * dim * ff_inner + 4 * dim * hdh + 3 * dim * conv_inner
                   + ksize * conv_inner) + 2 * batch * heads * seq * seq * dim_head
    cost = pl.CostEstimate(
        flops=int(2 * macs),
        transcendentals=int(toks * (2 * ff_inner + 3 * conv_inner)
                            + batch * heads * seq * seq),
        bytes_accessed=int(w_bytes + 2 * batch * seq * dim * 2))

    kern = functools.partial(_conformer_block_kernel, bt=bt, seq=seq, dim=dim,
                             heads=heads, dim_head=dim_head, ksize=ksize,
                             ff_inner=ff_inner, conv_inner=conv_inner)
    blk = pl.BlockSpec((bt, seq, dim), lambda g: (g, 0, 0))
    # TODO(synk): layer-(l+1) weight prefetch / two-layer fusion to hide the
    # per-layer weight DMA prologue is not implemented.
    return pl.pallas_call(
        kern,
        out_shape=jax.ShapeDtypeStruct((batch, seq, dim), BF16),
        grid=(batch // bt,),
        in_specs=[blk] + [_const_spec(w) for w in weights],
        out_specs=blk,
        scratch_shapes=[pltpu.VMEM((bt, top + seq + pad, conv_inner), F32)],
        compiler_params=_compiler_params(est),
        cost_estimate=cost,
    )(x, *weights)


def pool_classify(params, x, bt):
    batch, seq, dim = x.shape
    nc = params["cls_b2"].shape[-1]
    weights = [params["pool_w1"], params["pool_b1"], params["pool_w2t"],
               params["pool_b2"], params["cls_w1"], params["cls_b1"],
               params["cls_ln_g"], params["cls_ln_b"],
               params["cls_w2"], params["cls_b2"]]
    est = 2 * sum(_nbytes(w) for w in weights) + 4 * bt * seq * dim * 2 + (8 << 20)
    kern = functools.partial(_pool_cls_kernel, bt=bt, seq=seq, dim=dim)
    out = pl.pallas_call(
        kern,
        out_shape=jax.ShapeDtypeStruct((batch, 1, nc), F32),
        grid=(batch // bt,),
        in_specs=[pl.BlockSpec((bt, seq, dim), lambda g: (g, 0, 0))]
                 + [_const_spec(w) for w in weights],
        out_specs=pl.BlockSpec((bt, 1, nc), lambda g: (g, 0, 0)),
        compiler_params=_compiler_params(est),
    )(x, *weights)
    return out[:, 0, :]


# ----------------------------- model (JAX glue) -----------------------------

def streaming_conformer_forward(cfg, params, x):
    batch, seq, _ = x.shape
    bt = _choose_bt(batch, seq)
    pe_b = params["pe"][:seq, :] + params["in_proj_b"]   # fold bias into PE
    h = input_projection(params, pe_b, x, bt)
    for lp in params["layers"]:
        h = conformer_block(cfg, lp, h, bt)
    return pool_classify(params, h, bt)


def make_positional_encoding(max_len, d_model):
    position = jnp.arange(max_len, dtype=F32)[:, None]
    div_term = jnp.exp(jnp.arange(0, d_model, 2, dtype=F32)
                       * (-jnp.log(10000.0) / d_model))
    pe = jnp.zeros((max_len, d_model), F32)
    pe = pe.at[:, 0::2].set(jnp.sin(position * div_term))
    pe = pe.at[:, 1::2].set(jnp.cos(position * div_term))
    return pe


def _pack_rows(rows, width):
    out = []
    for r in rows:
        r = jnp.asarray(r, F32).reshape(1, -1)
        out.append(jnp.pad(r, ((0, 0), (0, width - r.shape[1]))))
    return jnp.concatenate(out, axis=0)


def init_params(key, input_dim, hidden_dim, num_classes, num_layers,
                num_heads, kernel_size, expansion_factor):
    # Replicate the constructor's dimension adjustment logic.
    hidden_dim = hidden_dim // 16 * 16
    dim_head = hidden_dim // num_heads
    dim_head = dim_head // 8 * 8
    if dim_head < 16:
        dim_head = 16
    hidden_dim = dim_head * num_heads

    keys = iter(jax.random.split(key, 4096))

    def w32(shape, scale=0.05):
        return (scale * jax.random.normal(next(keys), shape)).astype(F32)

    def wbf(shape, scale=0.05):                      # matmul weights in bf16
        return w32(shape, scale).astype(BF16)

    zeros = lambda s: jnp.zeros(s, F32)
    ones = lambda s: jnp.ones(s, F32)

    D = hidden_dim
    ff_mult = expansion_factor // 2                  # FeedForward(mult=ff_mult//2)
    ff_inner = int(D * ff_mult)
    hdh = dim_head * num_heads
    conv_inner = D * 1                               # conv_expansion_factor = 1
    bn_eps = 1e-5
    vec_w = max(D, ff_inner, 3 * hdh, conv_inner)

    def layer_params():
        dww = w32((kernel_size, conv_inner))
        running_mean, running_var = zeros((conv_inner,)), ones((conv_inner,))
        bn_g, bn_b = ones((conv_inner,)), zeros((conv_inner,))
        bns = bn_g / jnp.sqrt(running_var + bn_eps)
        bnb = bn_b - running_mean * bns
        rows = [ones((D,)), zeros((D,)), zeros((ff_inner,)), zeros((D,)),        # ff1
                ones((D,)), zeros((D,)), zeros((3 * hdh,)), zeros((D,)),          # attn
                ones((D,)), zeros((D,)), zeros((conv_inner,)), zeros((conv_inner,)),
                zeros((conv_inner,)), bns, bnb, zeros((D,)),                      # conv
                ones((D,)), zeros((D,)), zeros((ff_inner,)), zeros((D,)),         # ff2
                ones((D,)), zeros((D,))]                                          # final LN
        rows += [dww[k] for k in range(kernel_size)]                              # dw taps
        return {
            "ff1_w1": wbf((D, ff_inner)), "ff1_w2": wbf((ff_inner, D)),
            "at_wqkv": wbf((D, 3 * hdh)), "at_wo": wbf((hdh, D)),
            "cv_w1a": wbf((D, conv_inner)), "cv_w1g": wbf((D, conv_inner)),
            "cv_w2": wbf((conv_inner, D)),
            "ff2_w1": wbf((D, ff_inner)), "ff2_w2": wbf((ff_inner, D)),
            "vecs": _pack_rows(rows, vec_w),
        }

    cls_hidden = (D // 2) // 16 * 16
    params = {
        "in_proj_w": wbf((input_dim, D)), "in_proj_b": zeros((1, D)),
        "pe": make_positional_encoding(1000, D),
        "layers": [layer_params() for _ in range(num_layers)],
        "pool_w1": wbf((D, D // 2)), "pool_b1": zeros((1, D // 2)),
        "pool_w2t": w32((1, D // 2)), "pool_b2": zeros((1, 1)),
        "cls_w1": wbf((D, cls_hidden)), "cls_b1": zeros((1, cls_hidden)),
        "cls_ln_g": ones((1, cls_hidden)), "cls_ln_b": zeros((1, cls_hidden)),
        "cls_w2": wbf((cls_hidden, num_classes)), "cls_b2": zeros((1, num_classes)),
    }
    cfg = {"hidden_dim": hidden_dim, "heads": num_heads, "dim_head": dim_head,
           "kernel_size": kernel_size, "ff_inner": ff_inner,
           "conv_inner": conv_inner}
    return cfg, params


if __name__ == "__main__":
    key = jax.random.PRNGKey(0)
    kp, kx = jax.random.split(key)

    # Small shapes consistent with the module's forward().
    B, S = 2, 16
    input_dim, hidden_dim, num_classes = 32, 64, 4
    num_layers, num_heads = 2, 4
    kernel_size, expansion_factor = 15, 4

    cfg, params = init_params(kp, input_dim, hidden_dim, num_classes,
                              num_layers, num_heads, kernel_size,
                              expansion_factor)
    x = jax.random.normal(kx, (B, S, input_dim), dtype=F32)

    fwd = jax.jit(functools.partial(streaming_conformer_forward, cfg))
    logits = fwd(params, x)
    jax.block_until_ready(logits)
    assert logits.shape == (B, num_classes), logits.shape
    assert bool(jnp.all(jnp.isfinite(logits)))
    print("KERNEL_OK")
</pallas_src>

<mosaic_0001>
module attributes {stable_mosaic.version = 11 : i64} {
  func.func @_in_proj_pe_kernel(%arg0: i32, %arg1: memref<1x16x32xf32, #tpu.memory_space<vmem>>, %arg2: memref<32x64xbf16, #tpu.memory_space<vmem>>, %arg3: memref<16x64xf32, #tpu.memory_space<vmem>>, %arg4: memref<1x16x64xbf16, #tpu.memory_space<vmem>>) attributes {dimension_semantics = [#tpu.dimension_semantics<parallel>], iteration_bounds = array<i64: 2>, scalar_prefetch = 0 : i64, scratch_operands = 0 : i64, tpu.core_type = #tpu.core_type<tc>, window_params = [{transform_indices = @transform_0, window_bounds = array<i64: 1, 16, 32>}, {pipeline_mode = #tpu.pipeline_mode<synchronous>, transform_indices = @transform_1, window_bounds = array<i64: 32, 64>}, {pipeline_mode = #tpu.pipeline_mode<synchronous>, transform_indices = @transform_2, window_bounds = array<i64: 16, 64>}, {transform_indices = @transform_3, window_bounds = array<i64: 1, 16, 64>}]} {
    %c0 = arith.constant 0 : index
    %c0_0 = arith.constant 0 : index
    %c0_1 = arith.constant 0 : index
    %0 = vector.load %arg1[%c0, %c0_0, %c0_1] : memref<1x16x32xf32, #tpu.memory_space<vmem>>, vector<1x16x32xf32>
    %1 = vector.shape_cast %0 : vector<1x16x32xf32> to vector<16x32xf32>
    %2 = arith.truncf %1 : vector<16x32xf32> to vector<16x32xbf16>
    %c0_2 = arith.constant 0 : index
    %c0_3 = arith.constant 0 : index
    %3 = vector.load %arg2[%c0_2, %c0_3] : memref<32x64xbf16, #tpu.memory_space<vmem>>, vector<32x64xbf16>
    %cst = arith.constant dense<0.000000e+00> : vector<16x64xf32>
    %4 = tpu.matmul %2, %3, %cst {dimension_numbers = #tpu.dot_dimension_numbers<[1], [0], [0], [1], [0, 0, 1, 1], [], []>} : vector<16x32xbf16>, vector<32x64xbf16>, vector<16x64xf32> -> vector<16x64xf32>
    %5 = vector.shape_cast %4 : vector<16x64xf32> to vector<1x16x64xf32>
    %c0_4 = arith.constant 0 : index
    %c0_5 = arith.constant 0 : index
    %6 = vector.load %arg3[%c0_4, %c0_5] : memref<16x64xf32, #tpu.memory_space<vmem>>, vector<16x64xf32>
    %7 = vector.shape_cast %6 : vector<16x64xf32> to vector<1x16x64xf32>
    %8 = arith.addf %5, %7 : vector<1x16x64xf32>
    %9 = arith.truncf %8 : vector<1x16x64xf32> to vector<1x16x64xbf16>
    %c0_6 = arith.constant 0 : index
    %c0_7 = arith.constant 0 : index
    %c0_8 = arith.constant 0 : index
    %10 = vector.load %arg4[%c0_6, %c0_7, %c0_8] : memref<1x16x64xbf16, #tpu.memory_space<vmem>>, vector<1x16x64xbf16>
    tpu.vector_store %arg4[%c0_6, %c0_7, %c0_8], %9 {strides = array<i32>} : memref<1x16x64xbf16, #tpu.memory_space<vmem>>, vector<1x16x64xbf16>,
    return
  }
  func.func @transform_0(%arg0: i32) -> (i32, i32, i32) {
    %c0_i32 = arith.constant 0 : i32
    %c0_i32_0 = arith.constant 0 : i32
    %c0_i32_1 = arith.constant 0 : i32
    return %arg0, %c0_i32, %c0_i32_0 : i32, i32, i32
  }
  func.func @transform_1(%arg0: i32) -> (i32, i32) {
    %c0_i32 = arith.constant 0 : i32
    %c0_i32_0 = arith.constant 0 : i32
    %c0_i32_1 = arith.constant 0 : i32
    return %c0_i32, %c0_i32_0 : i32, i32
  }
  func.func @transform_2(%arg0: i32) -> (i32, i32) {
    %c0_i32 = arith.constant 0 : i32
    %c0_i32_0 = arith.constant 0 : i32
    %c0_i32_1 = arith.constant 0 : i32
    return %c0_i32, %c0_i32_0 : i32, i32
  }
  func.func @transform_3(%arg0: i32) -> (i32, i32, i32) {
    %c0_i32 = arith.constant 0 : i32
    %c0_i32_0 = arith.constant 0 : i32
    %c0_i32_1 = arith.constant 0 : i32
    return %arg0, %c0_i32, %c0_i32_0 : i32, i32, i32
  }
}

module attributes {stable_mosaic.version = 11 : i64} {
  func.func @_pool_cls_kernel(%arg0: i32, %arg1: memref<1x16x64xbf16, #tpu.memory_space<vmem>>, %arg2: memref<64x32xbf16, #tpu.memory_space<vmem>>, %arg3: memref<1x32xf32, #tpu.memory_space<vmem>>, %arg4: memref<1x32xf32, #tpu.memory_space<vmem>>, %arg5: memref<1x1xf32, #tpu.memory_space<vmem>>, %arg6: memref<64x32xbf16, #tpu.memory_space<vmem>>, %arg7: memref<1x32xf32, #tpu.memory_space<vmem>>, %arg8: memref<1x32xf32, #tpu.memory_space<vmem>>, %arg9: memref<1x32xf32, #tpu.memory_space<vmem>>, %arg10: memref<32x4xbf16, #tpu.memory_space<vmem>>, %arg11: memref<1x4xf32, #tpu.memory_space<vmem>>, %arg12: memref<1x1x4xf32, #tpu.memory_space<vmem>>) attributes {dimension_semantics = [#tpu.dimension_semantics<parallel>], iteration_bounds = array<i64: 2>, scalar_prefetch = 0 : i64, scratch_operands = 0 : i64, tpu.core_type = #tpu.core_type<tc>, window_params = [{transform_indices = @transform_0, window_bounds = array<i64: 1, 16, 64>}, {pipeline_mode = #tpu.pipeline_mode<synchronous>, transform_indices = @transform_1, window_bounds = array<i64: 64, 32>}, {pipeline_mode = #tpu.pipeline_mode<synchronous>, transform_indices = @transform_2, window_bounds = array<i64: 1, 32>}, {pipeline_mode = #tpu.pipeline_mode<synchronous>, transform_indices = @transform_3, window_bounds = array<i64: 1, 32>}, {pipeline_mode = #tpu.pipeline_mode<synchronous>, transform_indices = @transform_4, window_bounds = array<i64: 1, 1>}, {pipeline_mode = #tpu.pipeline_mode<synchronous>, transform_indices = @transform_5, window_bounds = array<i64: 64, 32>}, {pipeline_mode = #tpu.pipeline_mode<synchronous>, transform_indices = @transform_6, window_bounds = array<i64: 1, 32>}, {pipeline_mode = #tpu.pipeline_mode<synchronous>, transform_indices = @transform_7, window_bounds = array<i64: 1, 32>}, {pipeline_mode = #tpu.pipeline_mode<synchronous>, transform_indices = @transform_8, window_bounds = array<i64: 1, 32>}, {pipeline_mode = #tpu.pipeline_mode<synchronous>, transform_indices = @transform_9, window_bounds = array<i64: 32, 4>}, {pipeline_mode = #tpu.pipeline_mode<synchronous>, transform_indices = @transform_10, window_bounds = array<i64: 1, 4>}, {transform_indices = @transform_11, window_bounds = array<i64: 1, 1, 4>}]} {
    %c0 = arith.constant 0 : index
    %c0_0 = arith.constant 0 : index
    %c0_1 = arith.constant 0 : index
    %0 = vector.load %arg1[%c0, %c0_0, %c0_1] : memref<1x16x64xbf16, #tpu.memory_space<vmem>>, vector<1x16x64xbf16>
    %1 = arith.extf %0 : vector<1x16x64xbf16> to vector<1x16x64xf32>
    %2 = vector.shape_cast %1 : vector<1x16x64xf32> to vector<16x64xf32>
    %c0_2 = arith.constant 0 : index
    %c0_3 = arith.constant 0 : index
    %3 = vector.load %arg3[%c0_2, %c0_3] : memref<1x32xf32, #tpu.memory_space<vmem>>, vector<1x32xf32>
    %4 = arith.truncf %2 : vector<16x64xf32> to vector<16x64xbf16>
    %c0_4 = arith.constant 0 : index
    %c0_5 = arith.constant 0 : index
    %5 = vector.load %arg2[%c0_4, %c0_5] : memref<64x32xbf16, #tpu.memory_space<vmem>>, vector<64x32xbf16>
    %cst = arith.constant dense<0.000000e+00> : vector<16x32xf32>
    %6 = tpu.matmul %4, %5, %cst {dimension_numbers = #tpu.dot_dimension_numbers<[1], [0], [0], [1], [0, 0, 1, 1], [], []>} : vector<16x64xbf16>, vector<64x32xbf16>, vector<16x32xf32> -> vector<16x32xf32>
    %7 = vector.broadcast %3 : vector<1x32xf32> to vector<16x32xf32>
    %8 = arith.addf %6, %7 : vector<16x32xf32>
    %9 = math.tanh %8 : vector<16x32xf32>
    %c0_6 = arith.constant 0 : index
    %c0_7 = arith.constant 0 : index
    %10 = vector.load %arg4[%c0_6, %c0_7] : memref<1x32xf32, #tpu.memory_space<vmem>>, vector<1x32xf32>
    %11 = vector.broadcast %10 : vector<1x32xf32> to vector<16x32xf32>
    %12 = arith.mulf %9, %11 : vector<16x32xf32>
    %cst_8 = arith.constant dense<0.000000e+00> : vector<16xf32>
    %13 = vector.multi_reduction <add>, %12, %cst_8 [1] : vector<16x32xf32> to vector<16xf32>
    %14 = vector.shape_cast %13 : vector<16xf32> to vector<16x1xf32>
    %c0_9 = arith.constant 0 : index
    %c0_10 = arith.constant 0 : index
    %15 = vector.load %arg5[%c0_9, %c0_10] : memref<1x1xf32, #tpu.memory_space<vmem>>, vector<1x1xf32>
    %16 = vector.broadcast %15 : vector<1x1xf32> to vector<16x1xf32>
    %17 = arith.addf %14, %16 : vector<16x1xf32>
    %18 = vector.shape_cast %17 : vector<16x1xf32> to vector<1x16x1xf32>
    %19 = vector.shape_cast %18 : vector<1x16x1xf32> to vector<16x1xf32>
    %20 = vector.shape_cast %18 : vector<1x16x1xf32> to vector<16x1xf32>
    %cst_11 = arith.constant dense<0xFF800000> : vector<1xf32>
    %21 = vector.multi_reduction <maximumf>, %20, %cst_11 [0] : vector<16x1xf32> to vector<1xf32>
    %22 = vector.shape_cast %21 : vector<1xf32> to vector<1x1xf32>
    %23 = vector.broadcast %22 : vector<1x1xf32> to vector<16x1xf32>
    %24 = arith.subf %19, %23 : vector<16x1xf32>
    %25 = math.exp %24 : vector<16x1xf32>
    %cst_12 = arith.constant dense<0.000000e+00> : vector<1xf32>
    %26 = vector.multi_reduction <add>, %25, %cst_12 [0] : vector<16x1xf32> to vector<1xf32>
    %27 = vector.shape_cast %26 : vector<1xf32> to vector<1x1xf32>
    %28 = vector.broadcast %27 : vector<1x1xf32> to vector<16x1xf32>
    %29 = arith.divf %25, %28 : vector<16x1xf32>
    %30 = vector.shape_cast %1 : vector<1x16x64xf32> to vector<16x64xf32>
    %31 = vector.broadcast %29 : vector<16x1xf32> to vector<16x64xf32>
    %32 = arith.mulf %31, %30 : vector<16x64xf32>
    %cst_13 = arith.constant dense<0.000000e+00> : vector<64xf32>
    %33 = vector.multi_reduction <add>, %32, %cst_13 [0] : vector<16x64xf32> to vector<64xf32>
    %34 = vector.shape_cast %33 : vector<64xf32> to vector<1x64xf32>
    %c0_14 = arith.constant 0 : index
    %c0_15 = arith.constant 0 : index
    %35 = vector.load %arg7[%c0_14, %c0_15] : memref<1x32xf32, #tpu.memory_space<vmem>>, vector<1x32xf32>
    %36 = arith.truncf %34 : vector<1x64xf32> to vector<1x64xbf16>
    %c0_16 = arith.constant 0 : index
    %c0_17 = arith.constant 0 : index
    %37 = vector.load %arg6[%c0_16, %c0_17] : memref<64x32xbf16, #tpu.memory_space<vmem>>, vector<64x32xbf16>
    %cst_18 = arith.constant dense<0.000000e+00> : vector<1x32xf32>
    %38 = tpu.matmul %36, %37, %cst_18 {dimension_numbers = #tpu.dot_dimension_numbers<[1], [0], [0], [1], [0, 0, 1, 1], [], []>} : vector<1x64xbf16>, vector<64x32xbf16>, vector<1x32xf32> -> vector<1x32xf32>
    %39 = arith.addf %38, %35 : vector<1x32xf32>
    %c0_19 = arith.constant 0 : index
    %c0_20 = arith.constant 0 : index
    %40 = vector.load %arg8[%c0_19, %c0_20] : memref<1x32xf32, #tpu.memory_space<vmem>>, vector<1x32xf32>
    %c0_21 = arith.constant 0 : index
    %c0_22 = arith.constant 0 : index
    %41 = vector.load %arg9[%c0_21, %c0_22] : memref<1x32xf32, #tpu.memory_space<vmem>>, vector<1x32xf32>
    %cst_23 = arith.constant dense<0.000000e+00> : vector<1xf32>
    %42 = vector.multi_reduction <add>, %39, %cst_23 [1] : vector<1x32xf32> to vector<1xf32>
    %43 = vector.shape_cast %42 : vector<1xf32> to vector<1x1xf32>
    %cst_24 = arith.constant 3.200000e+01 : f32
    %44 = vector.broadcast %cst_24 : f32 to vector<1x1xf32>
    %45 = arith.divf %43, %44 : vector<1x1xf32>
    %46 = vector.broadcast %45 : vector<1x1xf32> to vector<1x32xf32>
    %47 = arith.subf %39, %46 : vector<1x32xf32>
    %48 = arith.mulf %47, %47 : vector<1x32xf32>
    %cst_25 = arith.constant dense<0.000000e+00> : vector<1xf32>
    %49 = vector.multi_reduction <add>, %48, %cst_25 [1] : vector<1x32xf32> to vector<1xf32>
    %50 = vector.shape_cast %49 : vector<1xf32> to vector<1x1xf32>
    %cst_26 = arith.constant 3.200000e+01 : f32
    %51 = vector.broadcast %cst_26 : f32 to vector<1x1xf32>
    %52 = arith.divf %50, %51 : vector<1x1xf32>
    %53 = vector.broadcast %45 : vector<1x1xf32> to vector<1x32xf32>
    %54 = arith.subf %39, %53 : vector<1x32xf32>
    %cst_27 = arith.constant 9.99999974E-6 : f32
    %55 = vector.broadcast %cst_27 : f32 to vector<1x1xf32>
    %56 = arith.addf %52, %55 : vector<1x1xf32>
    %57 = math.rsqrt %56 : vector<1x1xf32>
    %58 = vector.broadcast %57 : vector<1x1xf32> to vector<1x32xf32>
    %59 = arith.mulf %54, %58 : vector<1x32xf32>
    %60 = arith.mulf %59, %40 : vector<1x32xf32>
    %61 = arith.addf %60, %41 : vector<1x32xf32>
    %cst_28 = arith.constant 0.000000e+00 : f32
    %62 = vector.broadcast %cst_28 : f32 to vector<1x32xf32>
    %63 = arith.maximumf %61, %62 : vector<1x32xf32>
    %c0_29 = arith.constant 0 : index
    %c0_30 = arith.constant 0 : index
    %64 = vector.load %arg11[%c0_29, %c0_30] : memref<1x4xf32, #tpu.memory_space<vmem>>, vector<1x4xf32>
    %65 = arith.truncf %63 : vector<1x32xf32> to vector<1x32xbf16>
    %c0_31 = arith.constant 0 : index
    %c0_32 = arith.constant 0 : index
    %66 = vector.load %arg10[%c0_31, %c0_32] : memref<32x4xbf16, #tpu.memory_space<vmem>>, vector<32x4xbf16>
    %cst_33 = arith.constant dense<0.000000e+00> : vector<1x4xf32>
    %67 = tpu.matmul %65, %66, %cst_33 {dimension_numbers = #tpu.dot_dimension_numbers<[1], [0], [0], [1], [0, 0, 1, 1], [], []>} : vector<1x32xbf16>, vector<32x4xbf16>, vector<1x4xf32> -> vector<1x4xf32>
    %68 = arith.addf %67, %64 : vector<1x4xf32>
    %69 = vector.shape_cast %68 : vector<1x4xf32> to vector<1x1x4xf32>
    %c0_34 = arith.constant 0 : index
    %c0_35 = arith.constant 0 : index
    %c0_36 = arith.constant 0 : index
    %70 = vector.load %arg12[%c0_34, %c0_35, %c0_36] : memref<1x1x4xf32, #tpu.memory_space<vmem>>, vector<1x1x4xf32>
    tpu.vector_store %arg12[%c0_34, %c0_35, %c0_36], %69 {strides = array<i32>} : memref<1x1x4xf32, #tpu.memory_space<vmem>>, vector<1x1x4xf32>,
    return
  }
  func.func @transform_0(%arg0: i32) -> (i32, i32, i32) {
    %c0_i32 = arith.constant 0 : i32
    %c0_i32_0 = arith.constant 0 : i32
    %c0_i32_1 = arith.constant 0 : i32
    return %arg0, %c0_i32, %c0_i32_0 : i32, i32, i32
  }
  func.func @transform_1(%arg0: i32) -> (i32, i32) {
    %c0_i32 = arith.constant 0 : i32
    %c0_i32_0 = arith.constant 0 : i32
    %c0_i32_1 = arith.constant 0 : i32
    return %c0_i32, %c0_i32_0 : i32, i32
  }
  func.func @transform_2(%arg0: i32) -> (i32, i32) {
    %c0_i32 = arith.constant 0 : i32
    %c0_i32_0 = arith.constant 0 : i32
    %c0_i32_1 = arith.constant 0 : i32
    return %c0_i32, %c0_i32_0 : i32, i32
  }
  func.func @transform_3(%arg0: i32) -> (i32, i32) {
    %c0_i32 = arith.constant 0 : i32
    %c0_i32_0 = arith.constant 0 : i32
    %c0_i32_1 = arith.constant 0 : i32
    return %c0_i32, %c0_i32_0 : i32, i32
  }
  func.func @transform_4(%arg0: i32) -> (i32, i32) {
    %c0_i32 = arith.constant 0 : i32
    %c0_i32_0 = arith.constant 0 : i32
    %c0_i32_1 = arith.constant 0 : i32
    return %c0_i32, %c0_i32_0 : i32, i32
  }
  func.func @transform_5(%arg0: i32) -> (i32, i32) {
    %c0_i32 = arith.constant 0 : i32
    %c0_i32_0 = arith.constant 0 : i32
    %c0_i32_1 = arith.constant 0 : i32
    return %c0_i32, %c0_i32_0 : i32, i32
  }
  func.func @transform_6(%arg0: i32) -> (i32, i32) {
    %c0_i32 = arith.constant 0 : i32
    %c0_i32_0 = arith.constant 0 : i32
    %c0_i32_1 = arith.constant 0 : i32
    return %c0_i32, %c0_i32_0 : i32, i32
  }
  func.func @transform_7(%arg0: i32) -> (i32, i32) {
    %c0_i32 = arith.constant 0 : i32
    %c0_i32_0 = arith.constant 0 : i32
    %c0_i32_1 = arith.constant 0 : i32
    return %c0_i32, %c0_i32_0 : i32, i32
  }
  func.func @transform_8(%arg0: i32) -> (i32, i32) {
    %c0_i32 = arith.constant 0 : i32
    %c0_i32_0 = arith.constant 0 : i32
    %c0_i32_1 = arith.constant 0 : i32
    return %c0_i32, %c0_i32_0 : i32, i32
  }
  func.func @transform_9(%arg0: i32) -> (i32, i32) {
    %c0_i32 = arith.constant 0 : i32
    %c0_i32_0 = arith.constant 0 : i32
    %c0_i32_1 = arith.constant 0 : i32
    return %c0_i32, %c0_i32_0 : i32, i32
  }
  func.func @transform_10(%arg0: i32) -> (i32, i32) {
    %c0_i32 = arith.constant 0 : i32
    %c0_i32_0 = arith.constant 0 : i32
    %c0_i32_1 = arith.constant 0 : i32
    return %c0_i32, %c0_i32_0 : i32, i32
  }
  func.func @transform_11(%arg0: i32) -> (i32, i32, i32) {
    %c0_i32 = arith.constant 0 : i32
    %c0_i32_0 = arith.constant 0 : i32
    %c0_i32_1 = arith.constant 0 : i32
    return %arg0, %c0_i32, %c0_i32_0 : i32, i32, i32
  }
}

module attributes {stable_mosaic.version = 11 : i64} {
  func.func @_conformer_block_kernel(%arg0: i32, %arg1: memref<1x16x64xbf16, #tpu.memory_space<vmem>>, %arg2: memref<64x128xbf16, #tpu.memory_space<vmem>>, %arg3: memref<128x64xbf16, #tpu.memory_space<vmem>>, %arg4: memref<64x192xbf16, #tpu.memory_space<vmem>>, %arg5: memref<64x64xbf16, #tpu.memory_space<vmem>>, %arg6: memref<64x64xbf16, #tpu.memory_space<vmem>>, %arg7: memref<64x64xbf16, #tpu.memory_space<vmem>>, %arg8: memref<64x64xbf16, #tpu.memory_space<vmem>>, %arg9: memref<64x128xbf16, #tpu.memory_space<vmem>>, %arg10: memref<128x64xbf16, #tpu.memory_space<vmem>>, %arg11: memref<37x192xf32, #tpu.memory_space<vmem>>, %arg12: memref<1x16x64xbf16, #tpu.memory_space<vmem>>, %arg13: memref<1x31x64xf32, #tpu.memory_space<vmem>>) attributes {dimension_semantics = [#tpu.dimension_semantics<parallel>], iteration_bounds = array<i64: 2>, scalar_prefetch = 0 : i64, scratch_operands = 1 : i64, tpu.core_type = #tpu.core_type<tc>, window_params = [{transform_indices = @transform_0, window_bounds = array<i64: 1, 16, 64>}, {pipeline_mode = #tpu.pipeline_mode<synchronous>, transform_indices = @transform_1, window_bounds = array<i64: 64, 128>}, {pipeline_mode = #tpu.pipeline_mode<synchronous>, transform_indices = @transform_2, window_bounds = array<i64: 128, 64>}, {pipeline_mode = #tpu.pipeline_mode<synchronous>, transform_indices = @transform_3, window_bounds = array<i64: 64, 192>}, {pipeline_mode = #tpu.pipeline_mode<synchronous>, transform_indices = @transform_4, window_bounds = array<i64: 64, 64>}, {pipeline_mode = #tpu.pipeline_mode<synchronous>, transform_indices = @transform_5, window_bounds = array<i64: 64, 64>}, {pipeline_mode = #tpu.pipeline_mode<synchronous>, transform_indices = @transform_6, window_bounds = array<i64: 64, 64>}, {pipeline_mode = #tpu.pipeline_mode<synchronous>, transform_indices = @transform_7, window_bounds = array<i64: 64, 64>}, {pipeline_mode = #tpu.pipeline_mode<synchronous>, transform_indices = @transform_8, window_bounds = array<i64: 64, 128>}, {pipeline_mode = #tpu.pipeline_mode<synchronous>, transform_indices = @transform_9, window_bounds = array<i64: 128, 64>}, {pipeline_mode = #tpu.pipeline_mode<synchronous>, transform_indices = @transform_10, window_bounds = array<i64: 37, 192>}, {transform_indices = @transform_11, window_bounds = array<i64: 1, 16, 64>}]} {
    %c0 = arith.constant 0 : index
    %c0_0 = arith.constant 0 : index
    %c0_1 = arith.constant 0 : index
    %0 = vector.load %arg1[%c0, %c0_0, %c0_1] : memref<1x16x64xbf16, #tpu.memory_space<vmem>>, vector<1x16x64xbf16>
    %1 = arith.extf %0 : vector<1x16x64xbf16> to vector<1x16x64xf32>
    %2 = vector.shape_cast %1 : vector<1x16x64xf32> to vector<16x64xf32>
    %c0_2 = arith.constant 0 : index
    %c0_3 = arith.constant 0 : index
    %3 = vector.load %arg11[%c0_2, %c0_3] : memref<37x192xf32, #tpu.memory_space<vmem>>, vector<1x64xf32>
    %c1 = arith.constant 1 : index
    %c0_4 = arith.constant 0 : index
    %4 = vector.load %arg11[%c1, %c0_4] : memref<37x192xf32, #tpu.memory_space<vmem>>, vector<1x64xf32>
    %cst = arith.constant dense<0.000000e+00> : vector<16xf32>
    %5 = vector.multi_reduction <add>, %2, %cst [1] : vector<16x64xf32> to vector<16xf32>
    %6 = vector.shape_cast %5 : vector<16xf32> to vector<16x1xf32>
    %cst_5 = arith.constant 6.400000e+01 : f32
    %7 = vector.broadcast %cst_5 : f32 to vector<16x1xf32>
    %8 = arith.divf %6, %7 : vector<16x1xf32>
    %9 = vector.broadcast %8 : vector<16x1xf32> to vector<16x64xf32>
    %10 = arith.subf %2, %9 : vector<16x64xf32>
    %11 = arith.mulf %10, %10 : vector<16x64xf32>
    %cst_6 = arith.constant dense<0.000000e+00> : vector<16xf32>
    %12 = vector.multi_reduction <add>, %11, %cst_6 [1] : vector<16x64xf32> to vector<16xf32>
    %13 = vector.shape_cast %12 : vector<16xf32> to vector<16x1xf32>
    %cst_7 = arith.constant 6.400000e+01 : f32
    %14 = vector.broadcast %cst_7 : f32 to vector<16x1xf32>
    %15 = arith.divf %13, %14 : vector<16x1xf32>
    %16 = vector.broadcast %8 : vector<16x1xf32> to vector<16x64xf32>
    %17 = arith.subf %2, %16 : vector<16x64xf32>
    %cst_8 = arith.constant 9.99999974E-6 : f32
    %18 = vector.broadcast %cst_8 : f32 to vector<16x1xf32>
    %19 = arith.addf %15, %18 : vector<16x1xf32>
    %20 = math.rsqrt %19 : vector<16x1xf32>
    %21 = vector.broadcast %20 : vector<16x1xf32> to vector<16x64xf32>
    %22 = arith.mulf %17, %21 : vector<16x64xf32>
    %23 = vector.broadcast %3 : vector<1x64xf32> to vector<16x64xf32>
    %24 = arith.mulf %22, %23 : vector<16x64xf32>
    %25 = vector.broadcast %4 : vector<1x64xf32> to vector<16x64xf32>
    %26 = arith.addf %24, %25 : vector<16x64xf32>
    %c2 = arith.constant 2 : index
    %c0_9 = arith.constant 0 : index
    %27 = vector.load %arg11[%c2, %c0_9] : memref<37x192xf32, #tpu.memory_space<vmem>>, vector<1x128xf32>
    %28 = arith.truncf %26 : vector<16x64xf32> to vector<16x64xbf16>
    %c0_10 = arith.constant 0 : index
    %c0_11 = arith.constant 0 : index
    %29 = vector.load %arg2[%c0_10, %c0_11] : memref<64x128xbf16, #tpu.memory_space<vmem>>, vector<64x128xbf16>
    %cst_12 = arith.constant dense<0.000000e+00> : vector<16x128xf32>
    %30 = tpu.matmul %28, %29, %cst_12 {dimension_numbers = #tpu.dot_dimension_numbers<[1], [0], [0], [1], [0, 0, 1, 1], [], []>} : vector<16x64xbf16>, vector<64x128xbf16>, vector<16x128xf32> -> vector<16x128xf32>
    %31 = vector.broadcast %27 : vector<1x128xf32> to vector<16x128xf32>
    %32 = arith.addf %30, %31 : vector<16x128xf32>
    %33 = arith.negf %32 : vector<16x128xf32>
    %34 = math.exp %33 : vector<16x128xf32>
    %cst_13 = arith.constant 1.000000e+00 : f32
    %35 = vector.broadcast %cst_13 : f32 to vector<16x128xf32>
    %36 = arith.addf %35, %34 : vector<16x128xf32>
    %37 = arith.divf %35, %36 : vector<16x128xf32>
    %38 = arith.mulf %32, %37 : vector<16x128xf32>
    %c3 = arith.constant 3 : index
    %c0_14 = arith.constant 0 : index
    %39 = vector.load %arg11[%c3, %c0_14] : memref<37x192xf32, #tpu.memory_space<vmem>>, vector<1x64xf32>
    %40 = arith.truncf %38 : vector<16x128xf32> to vector<16x128xbf16>
    %c0_15 = arith.constant 0 : index
    %c0_16 = arith.constant 0 : index
    %41 = vector.load %arg3[%c0_15, %c0_16] : memref<128x64xbf16, #tpu.memory_space<vmem>>, vector<128x64xbf16>
    %cst_17 = arith.constant dense<0.000000e+00> : vector<16x64xf32>
    %42 = tpu.matmul %40, %41, %cst_17 {dimension_numbers = #tpu.dot_dimension_numbers<[1], [0], [0], [1], [0, 0, 1, 1], [], []>} : vector<16x128xbf16>, vector<128x64xbf16>, vector<16x64xf32> -> vector<16x64xf32>
    %43 = vector.broadcast %39 : vector<1x64xf32> to vector<16x64xf32>
    %44 = arith.addf %42, %43 : vector<16x64xf32>
    %cst_18 = arith.constant 5.000000e-01 : f32
    %45 = vector.broadcast %cst_18 : f32 to vector<16x64xf32>
    %46 = arith.mulf %45, %44 : vector<16x64xf32>
    %47 = arith.addf %2, %46 : vector<16x64xf32>
    %c4 = arith.constant 4 : index
    %c0_19 = arith.constant 0 : index
    %48 = vector.load %arg11[%c4, %c0_19] : memref<37x192xf32, #tpu.memory_space<vmem>>, vector<1x64xf32>
    %c5 = arith.constant 5 : index
    %c0_20 = arith.constant 0 : index
    %49 = vector.load %arg11[%c5, %c0_20] : memref<37x192xf32, #tpu.memory_space<vmem>>, vector<1x64xf32>
    %cst_21 = arith.constant dense<0.000000e+00> : vector<16xf32>
    %50 = vector.multi_reduction <add>, %47, %cst_21 [1] : vector<16x64xf32> to vector<16xf32>
    %51 = vector.shape_cast %50 : vector<16xf32> to vector<16x1xf32>
    %cst_22 = arith.constant 6.400000e+01 : f32
    %52 = vector.broadcast %cst_22 : f32 to vector<16x1xf32>
    %53 = arith.divf %51, %52 : vector<16x1xf32>
    %54 = vector.broadcast %53 : vector<16x1xf32> to vector<16x64xf32>
    %55 = arith.subf %47, %54 : vector<16x64xf32>
    %56 = arith.mulf %55, %55 : vector<16x64xf32>
    %cst_23 = arith.constant dense<0.000000e+00> : vector<16xf32>
    %57 = vector.multi_reduction <add>, %56, %cst_23 [1] : vector<16x64xf32> to vector<16xf32>
    %58 = vector.shape_cast %57 : vector<16xf32> to vector<16x1xf32>
    %cst_24 = arith.constant 6.400000e+01 : f32
    %59 = vector.broadcast %cst_24 : f32 to vector<16x1xf32>
    %60 = arith.divf %58, %59 : vector<16x1xf32>
    %61 = vector.broadcast %53 : vector<16x1xf32> to vector<16x64xf32>
    %62 = arith.subf %47, %61 : vector<16x64xf32>
    %cst_25 = arith.constant 9.99999974E-6 : f32
    %63 = vector.broadcast %cst_25 : f32 to vector<16x1xf32>
    %64 = arith.addf %60, %63 : vector<16x1xf32>
    %65 = math.rsqrt %64 : vector<16x1xf32>
    %66 = vector.broadcast %65 : vector<16x1xf32> to vector<16x64xf32>
    %67 = arith.mulf %62, %66 : vector<16x64xf32>
    %68 = vector.broadcast %48 : vector<1x64xf32> to vector<16x64xf32>
    %69 = arith.mulf %67, %68 : vector<16x64xf32>
    %70 = vector.broadcast %49 : vector<1x64xf32> to vector<16x64xf32>
    %71 = arith.addf %69, %70 : vector<16x64xf32>
    %c6 = arith.constant 6 : index
    %c0_26 = arith.constant 0 : index
    %72 = vector.load %arg11[%c6, %c0_26] : memref<37x192xf32, #tpu.memory_space<vmem>>, vector<1x192xf32>
    %73 = arith.truncf %71 : vector<16x64xf32> to vector<16x64xbf16>
    %c0_27 = arith.constant 0 : index
    %c0_28 = arith.constant 0 : index
    %74 = vector.load %arg4[%c0_27, %c0_28] : memref<64x192xbf16, #tpu.memory_space<vmem>>, vector<64x192xbf16>
    %cst_29 = arith.constant dense<0.000000e+00> : vector<16x192xf32>
    %75 = tpu.matmul %73, %74, %cst_29 {dimension_numbers = #tpu.dot_dimension_numbers<[1], [0], [0], [1], [0, 0, 1, 1], [], []>} : vector<16x64xbf16>, vector<64x192xbf16>, vector<16x192xf32> -> vector<16x192xf32>
    %76 = vector.broadcast %72 : vector<1x192xf32> to vector<16x192xf32>
    %77 = arith.addf %75, %76 : vector<16x192xf32>
    %78 = vector.shape_cast %77 : vector<16x192xf32> to vector<1x16x192xf32>
    %79 = vector.shape_cast %78 : vector<1x16x192xf32> to vector<16x192xf32>
    %80 = vector.extract_strided_slice %79 {offsets = [0, 0], sizes = [16, 64], strides = [1, 1]} : vector<16x192xf32> to vector<16x64xf32>
    %81 = arith.truncf %80 : vector<16x64xf32> to vector<16x64xbf16>
    %82 = vector.extract_strided_slice %79 {offsets = [0, 64], sizes = [16, 64], strides = [1, 1]} : vector<16x192xf32> to vector<16x64xf32>
    %83 = tpu.transpose %82, [1, 0] : vector<16x64xf32> -> vector<64x16xf32>
    %84 = arith.truncf %83 : vector<64x16xf32> to vector<64x16xbf16>
    %85 = vector.extract_strided_slice %79 {offsets = [0, 128], sizes = [16, 64], strides = [1, 1]} : vector<16x192xf32> to vector<16x64xf32>
    %86 = arith.truncf %85 : vector<16x64xf32> to vector<16x64xbf16>
    %87 = vector.extract_strided_slice %81 {offsets = [0, 0], sizes = [16, 16], strides = [1, 1]} : vector<16x64xbf16> to vector<16x16xbf16>
    %88 = vector.extract_strided_slice %84 {offsets = [0, 0], sizes = [16, 16], strides = [1, 1]} : vector<64x16xbf16> to vector<16x16xbf16>
    %cst_30 = arith.constant dense<0.000000e+00> : vector<16x16xf32>
    %89 = tpu.matmul %87, %88, %cst_30 {dimension_numbers = #tpu.dot_dimension_numbers<[1], [0], [0], [1], [0, 0, 1, 1], [], []>} : vector<16x16xbf16>, vector<16x16xbf16>, vector<16x16xf32> -> vector<16x16xf32>
    %cst_31 = arith.constant 2.500000e-01 : f32
    %90 = vector.broadcast %cst_31 : f32 to vector<16x16xf32>
    %91 = arith.mulf %89, %90 : vector<16x16xf32>
    %cst_32 = arith.constant dense<0xFF800000> : vector<16xf32>
    %92 = vector.multi_reduction <maximumf>, %91, %cst_32 [1] : vector<16x16xf32> to vector<16xf32>
    %93 = vector.shape_cast %92 : vector<16xf32> to vector<16x1xf32>
    %94 = vector.broadcast %93 : vector<16x1xf32> to vector<16x16xf32>
    %95 = arith.subf %91, %94 : vector<16x16xf32>
    %96 = math.exp %95 : vector<16x16xf32>
    %cst_33 = arith.constant dense<0.000000e+00> : vector<16xf32>
    %97 = vector.multi_reduction <add>, %96, %cst_33 [1] : vector<16x16xf32> to vector<16xf32>
    %98 = vector.shape_cast %97 : vector<16xf32> to vector<16x1xf32>
    %99 = tpu.reciprocal %98 {approx = true} : vector<16x1xf32> -> vector<16x1xf32>
    %100 = vector.broadcast %99 : vector<16x1xf32> to vector<16x16xf32>
    %101 = arith.mulf %96, %100 : vector<16x16xf32>
    %102 = arith.truncf %101 : vector<16x16xf32> to vector<16x16xbf16>
    %103 = vector.extract_strided_slice %86 {offsets = [0, 0], sizes = [16, 16], strides = [1, 1]} : vector<16x64xbf16> to vector<16x16xbf16>
    %cst_34 = arith.constant dense<0.000000e+00> : vector<16x16xf32>
    %104 = tpu.matmul %102, %103, %cst_34 {dimension_numbers = #tpu.dot_dimension_numbers<[1], [0], [0], [1], [0, 0, 1, 1], [], []>} : vector<16x16xbf16>, vector<16x16xbf16>, vector<16x16xf32> -> vector<16x16xf32>
    %105 = vector.extract_strided_slice %81 {offsets = [0, 16], sizes = [16, 16], strides = [1, 1]} : vector<16x64xbf16> to vector<16x16xbf16>
    %106 = vector.extract_strided_slice %84 {offsets = [16, 0], sizes = [16, 16], strides = [1, 1]} : vector<64x16xbf16> to vector<16x16xbf16>
    %cst_35 = arith.constant dense<0.000000e+00> : vector<16x16xf32>
    %107 = tpu.matmul %105, %106, %cst_35 {dimension_numbers = #tpu.dot_dimension_numbers<[1], [0], [0], [1], [0, 0, 1, 1], [], []>} : vector<16x16xbf16>, vector<16x16xbf16>, vector<16x16xf32> -> vector<16x16xf32>
    %cst_36 = arith.constant 2.500000e-01 : f32
    %108 = vector.broadcast %cst_36 : f32 to vector<16x16xf32>
    %109 = arith.mulf %107, %108 : vector<16x16xf32>
    %cst_37 = arith.constant dense<0xFF800000> : vector<16xf32>
    %110 = vector.multi_reduction <maximumf>, %109, %cst_37 [1] : vector<16x16xf32> to vector<16xf32>
    %111 = vector.shape_cast %110 : vector<16xf32> to vector<16x1xf32>
    %112 = vector.broadcast %111 : vector<16x1xf32> to vector<16x16xf32>
    %113 = arith.subf %109, %112 : vector<16x16xf32>
    %114 = math.exp %113 : vector<16x16xf32>
    %cst_38 = arith.constant dense<0.000000e+00> : vector<16xf32>
    %115 = vector.multi_reduction <add>, %114, %cst_38 [1] : vector<16x16xf32> to vector<16xf32>
    %116 = vector.shape_cast %115 : vector<16xf32> to vector<16x1xf32>
    %117 = tpu.reciprocal %116 {approx = true} : vector<16x1xf32> -> vector<16x1xf32>
    %118 = vector.broadcast %117 : vector<16x1xf32> to vector<16x16xf32>
    %119 = arith.mulf %114, %118 : vector<16x16xf32>
    %120 = arith.truncf %119 : vector<16x16xf32> to vector<16x16xbf16>
    %121 = vector.extract_strided_slice %86 {offsets = [0, 16], sizes = [16, 16], strides = [1, 1]} : vector<16x64xbf16> to vector<16x16xbf16>
    %cst_39 = arith.constant dense<0.000000e+00> : vector<16x16xf32>
    %122 = tpu.matmul %120, %121, %cst_39 {dimension_numbers = #tpu.dot_dimension_numbers<[1], [0], [0], [1], [0, 0, 1, 1], [], []>} : vector<16x16xbf16>, vector<16x16xbf16>, vector<16x16xf32> -> vector<16x16xf32>
    %123 = vector.extract_strided_slice %81 {offsets = [0, 32], sizes = [16, 16], strides = [1, 1]} : vector<16x64xbf16> to vector<16x16xbf16>
    %124 = vector.extract_strided_slice %84 {offsets = [32, 0], sizes = [16, 16], strides = [1, 1]} : vector<64x16xbf16> to vector<16x16xbf16>
    %cst_40 = arith.constant dense<0.000000e+00> : vector<16x16xf32>
    %125 = tpu.matmul %123, %124, %cst_40 {dimension_numbers = #tpu.dot_dimension_numbers<[1], [0], [0], [1], [0, 0, 1, 1], [], []>} : vector<16x16xbf16>, vector<16x16xbf16>, vector<16x16xf32> -> vector<16x16xf32>
    %cst_41 = arith.constant 2.500000e-01 : f32
    %126 = vector.broadcast %cst_41 : f32 to vector<16x16xf32>
    %127 = arith.mulf %125, %126 : vector<16x16xf32>
    %cst_42 = arith.constant dense<0xFF800000> : vector<16xf32>
    %128 = vector.multi_reduction <maximumf>, %127, %cst_42 [1] : vector<16x16xf32> to vector<16xf32>
    %129 = vector.shape_cast %128 : vector<16xf32> to vector<16x1xf32>
    %130 = vector.broadcast %129 : vector<16x1xf32> to vector<16x16xf32>
    %131 = arith.subf %127, %130 : vector<16x16xf32>
    %132 = math.exp %131 : vector<16x16xf32>
    %cst_43 = arith.constant dense<0.000000e+00> : vector<16xf32>
    %133 = vector.multi_reduction <add>, %132, %cst_43 [1] : vector<16x16xf32> to vector<16xf32>
    %134 = vector.shape_cast %133 : vector<16xf32> to vector<16x1xf32>
    %135 = tpu.reciprocal %134 {approx = true} : vector<16x1xf32> -> vector<16x1xf32>
    %136 = vector.broadcast %135 : vector<16x1xf32> to vector<16x16xf32>
    %137 = arith.mulf %132, %136 : vector<16x16xf32>
    %138 = arith.truncf %137 : vector<16x16xf32> to vector<16x16xbf16>
    %139 = vector.extract_strided_slice %86 {offsets = [0, 32], sizes = [16, 16], strides = [1, 1]} : vector<16x64xbf16> to vector<16x16xbf16>
    %cst_44 = arith.constant dense<0.000000e+00> : vector<16x16xf32>
    %140 = tpu.matmul %138, %139, %cst_44 {dimension_numbers = #tpu.dot_dimension_numbers<[1], [0], [0], [1], [0, 0, 1, 1], [], []>} : vector<16x16xbf16>, vector<16x16xbf16>, vector<16x16xf32> -> vector<16x16xf32>
    %141 = vector.extract_strided_slice %81 {offsets = [0, 48], sizes = [16, 16], strides = [1, 1]} : vector<16x64xbf16> to vector<16x16xbf16>
    %142 = vector.extract_strided_slice %84 {offsets = [48, 0], sizes = [16, 16], strides = [1, 1]} : vector<64x16xbf16> to vector<16x16xbf16>
    %cst_45 = arith.constant dense<0.000000e+00> : vector<16x16xf32>
    %143 = tpu.matmul %141, %142, %cst_45 {dimension_numbers = #tpu.dot_dimension_numbers<[1], [0], [0], [1], [0, 0, 1, 1], [], []>} : vector<16x16xbf16>, vector<16x16xbf16>, vector<16x16xf32> -> vector<16x16xf32>
    %cst_46 = arith.constant 2.500000e-01 : f32
    %144 = vector.broadcast %cst_46 : f32 to vector<16x16xf32>
    %145 = arith.mulf %143, %144 : vector<16x16xf32>
    %cst_47 = arith.constant dense<0xFF800000> : vector<16xf32>
    %146 = vector.multi_reduction <maximumf>, %145, %cst_47 [1] : vector<16x16xf32> to vector<16xf32>
    %147 = vector.shape_cast %146 : vector<16xf32> to vector<16x1xf32>
    %148 = vector.broadcast %147 : vector<16x1xf32> to vector<16x16xf32>
    %149 = arith.subf %145, %148 : vector<16x16xf32>
    %150 = math.exp %149 : vector<16x16xf32>
    %cst_48 = arith.constant dense<0.000000e+00> : vector<16xf32>
    %151 = vector.multi_reduction <add>, %150, %cst_48 [1] : vector<16x16xf32> to vector<16xf32>
    %152 = vector.shape_cast %151 : vector<16xf32> to vector<16x1xf32>
    %153 = tpu.reciprocal %152 {approx = true} : vector<16x1xf32> -> vector<16x1xf32>
    %154 = vector.broadcast %153 : vector<16x1xf32> to vector<16x16xf32>
    %155 = arith.mulf %150, %154 : vector<16x16xf32>
    %156 = arith.truncf %155 : vector<16x16xf32> to vector<16x16xbf16>
    %157 = vector.extract_strided_slice %86 {offsets = [0, 48], sizes = [16, 16], strides = [1, 1]} : vector<16x64xbf16> to vector<16x16xbf16>
    %cst_49 = arith.constant dense<0.000000e+00> : vector<16x16xf32>
    %158 = tpu.matmul %156, %157, %cst_49 {dimension_numbers = #tpu.dot_dimension_numbers<[1], [0], [0], [1], [0, 0, 1, 1], [], []>} : vector<16x16xbf16>, vector<16x16xbf16>, vector<16x16xf32> -> vector<16x16xf32>
    %159 = tpu.concatenate %104, %122, %140, %158 in 1 : vector<16x16xf32>, vector<16x16xf32>, vector<16x16xf32>, vector<16x16xf32> -> vector<16x64xf32>
    %c7 = arith.constant 7 : index
    %c0_50 = arith.constant 0 : index
    %160 = vector.load %arg11[%c7, %c0_50] : memref<37x192xf32, #tpu.memory_space<vmem>>, vector<1x64xf32>
    %161 = arith.truncf %159 : vector<16x64xf32> to vector<16x64xbf16>
    %c0_51 = arith.constant 0 : index
    %c0_52 = arith.constant 0 : index
    %162 = vector.load %arg5[%c0_51, %c0_52] : memref<64x64xbf16, #tpu.memory_space<vmem>>, vector<64x64xbf16>
    %cst_53 = arith.constant dense<0.000000e+00> : vector<16x64xf32>
    %163 = tpu.matmul %161, %162, %cst_53 {dimension_numbers = #tpu.dot_dimension_numbers<[1], [0], [0], [1], [0, 0, 1, 1], [], []>} : vector<16x64xbf16>, vector<64x64xbf16>, vector<16x64xf32> -> vector<16x64xf32>
    %164 = vector.broadcast %160 : vector<1x64xf32> to vector<16x64xf32>
    %165 = arith.addf %163, %164 : vector<16x64xf32>
    %166 = arith.addf %47, %165 : vector<16x64xf32>
    %c8 = arith.constant 8 : index
    %c0_54 = arith.constant 0 : index
    %167 = vector.load %arg11[%c8, %c0_54] : memref<37x192xf32, #tpu.memory_space<vmem>>, vector<1x64xf32>
    %c9 = arith.constant 9 : index
    %c0_55 = arith.constant 0 : index
    %168 = vector.load %arg11[%c9, %c0_55] : memref<37x192xf32, #tpu.memory_space<vmem>>, vector<1x64xf32>
    %cst_56 = arith.constant dense<0.000000e+00> : vector<16xf32>
    %169 = vector.multi_reduction <add>, %166, %cst_56 [1] : vector<16x64xf32> to vector<16xf32>
    %170 = vector.shape_cast %169 : vector<16xf32> to vector<16x1xf32>
    %cst_57 = arith.constant 6.400000e+01 : f32
    %171 = vector.broadcast %cst_57 : f32 to vector<16x1xf32>
    %172 = arith.divf %170, %171 : vector<16x1xf32>
    %173 = vector.broadcast %172 : vector<16x1xf32> to vector<16x64xf32>
    %174 = arith.subf %166, %173 : vector<16x64xf32>
    %175 = arith.mulf %174, %174 : vector<16x64xf32>
    %cst_58 = arith.constant dense<0.000000e+00> : vector<16xf32>
    %176 = vector.multi_reduction <add>, %175, %cst_58 [1] : vector<16x64xf32> to vector<16xf32>
    %177 = vector.shape_cast %176 : vector<16xf32> to vector<16x1xf32>
    %cst_59 = arith.constant 6.400000e+01 : f32
    %178 = vector.broadcast %cst_59 : f32 to vector<16x1xf32>
    %179 = arith.divf %177, %178 : vector<16x1xf32>
    %180 = vector.broadcast %172 : vector<16x1xf32> to vector<16x64xf32>
    %181 = arith.subf %166, %180 : vector<16x64xf32>
    %cst_60 = arith.constant 9.99999974E-6 : f32
    %182 = vector.broadcast %cst_60 : f32 to vector<16x1xf32>
    %183 = arith.addf %179, %182 : vector<16x1xf32>
    %184 = math.rsqrt %183 : vector<16x1xf32>
    %185 = vector.broadcast %184 : vector<16x1xf32> to vector<16x64xf32>
    %186 = arith.mulf %181, %185 : vector<16x64xf32>
    %187 = vector.broadcast %167 : vector<1x64xf32> to vector<16x64xf32>
    %188 = arith.mulf %186, %187 : vector<16x64xf32>
    %189 = vector.broadcast %168 : vector<1x64xf32> to vector<16x64xf32>
    %190 = arith.addf %188, %189 : vector<16x64xf32>
    %191 = arith.truncf %190 : vector<16x64xf32> to vector<16x64xbf16>
    %c0_61 = arith.constant 0 : index
    %c0_62 = arith.constant 0 : index
    %192 = vector.load %arg6[%c0_61, %c0_62] : memref<64x64xbf16, #tpu.memory_space<vmem>>, vector<64x64xbf16>
    %cst_63 = arith.constant dense<0.000000e+00> : vector<16x64xf32>
    %193 = tpu.matmul %191, %192, %cst_63 {dimension_numbers = #tpu.dot_dimension_numbers<[1], [0], [0], [1], [0, 0, 1, 1], [], []>} : vector<16x64xbf16>, vector<64x64xbf16>, vector<16x64xf32> -> vector<16x64xf32>
    %c10 = arith.constant 10 : index
    %c0_64 = arith.constant 0 : index
    %194 = vector.load %arg11[%c10, %c0_64] : memref<37x192xf32, #tpu.memory_space<vmem>>, vector<1x64xf32>
    %195 = vector.broadcast %194 : vector<1x64xf32> to vector<16x64xf32>
    %196 = arith.addf %193, %195 : vector<16x64xf32>
    %c0_65 = arith.constant 0 : index
    %c0_66 = arith.constant 0 : index
    %197 = vector.load %arg7[%c0_65, %c0_66] : memref<64x64xbf16, #tpu.memory_space<vmem>>, vector<64x64xbf16>
    %cst_67 = arith.constant dense<0.000000e+00> : vector<16x64xf32>
    %198 = tpu.matmul %191, %197, %cst_67 {dimension_numbers = #tpu.dot_dimension_numbers<[1], [0], [0], [1], [0, 0, 1, 1], [], []>} : vector<16x64xbf16>, vector<64x64xbf16>, vector<16x64xf32> -> vector<16x64xf32>
    %c11 = arith.constant 11 : index
    %c0_68 = arith.constant 0 : index
    %199 = vector.load %arg11[%c11, %c0_68] : memref<37x192xf32, #tpu.memory_space<vmem>>, vector<1x64xf32>
    %200 = vector.broadcast %199 : vector<1x64xf32> to vector<16x64xf32>
    %201 = arith.addf %198, %200 : vector<16x64xf32>
    %202 = arith.negf %201 : vector<16x64xf32>
    %203 = math.exp %202 : vector<16x64xf32>
    %cst_69 = arith.constant 1.000000e+00 : f32
    %204 = vector.broadcast %cst_69 : f32 to vector<16x64xf32>
    %205 = arith.addf %204, %203 : vector<16x64xf32>
    %206 = arith.divf %204, %205 : vector<16x64xf32>
    %207 = arith.mulf %196, %206 : vector<16x64xf32>
    %cst_70 = arith.constant 0.000000e+00 : f32
    %208 = vector.broadcast %cst_70 : f32 to vector<1x31x64xf32>
    %c0_71 = arith.constant 0 : index
    %c0_72 = arith.constant 0 : index
    %c0_73 = arith.constant 0 : index
    %209 = vector.load %arg13[%c0_71, %c0_72, %c0_73] : memref<1x31x64xf32, #tpu.memory_space<vmem>>, vector<1x31x64xf32>
    tpu.vector_store %arg13[%c0_71, %c0_72, %c0_73], %208 {strides = array<i32>} : memref<1x31x64xf32, #tpu.memory_space<vmem>>, vector<1x31x64xf32>,
    %210 = vector.shape_cast %207 : vector<16x64xf32> to vector<1x16x64xf32>
    %c0_74 = arith.constant 0 : index
    %c8_75 = arith.constant 8 : index
    %c0_76 = arith.constant 0 : index
    %211 = vector.load %arg13[%c0_74, %c8_75, %c0_76] : memref<1x31x64xf32, #tpu.memory_space<vmem>>, vector<1x16x64xf32>
    tpu.vector_store %arg13[%c0_74, %c8_75, %c0_76], %210 {strides = array<i32>} : memref<1x31x64xf32, #tpu.memory_space<vmem>>, vector<1x16x64xf32>,
    %cst_77 = arith.constant 0.000000e+00 : f32
    %212 = vector.broadcast %cst_77 : f32 to vector<1x16x64xf32>
    %c0_78 = arith.constant 0 : index
    %c1_79 = arith.constant 1 : index
    %c0_80 = arith.constant 0 : index
    %213 = vector.load %arg13[%c0_78, %c1_79, %c0_80] : memref<1x31x64xf32, #tpu.memory_space<vmem>>, vector<1x16x64xf32>
    %c22 = arith.constant 22 : index
    %c0_81 = arith.constant 0 : index
    %214 = vector.load %arg11[%c22, %c0_81] : memref<37x192xf32, #tpu.memory_space<vmem>>, vector<1x64xf32>
    %215 = vector.shape_cast %214 : vector<1x64xf32> to vector<1x1x64xf32>
    %216 = vector.broadcast %215 : vector<1x1x64xf32> to vector<1x16x64xf32>
    %217 = arith.mulf %213, %216 : vector<1x16x64xf32>
    %218 = arith.addf %212, %217 : vector<1x16x64xf32>
    %c0_82 = arith.constant 0 : index
    %c2_83 = arith.constant 2 : index
    %c0_84 = arith.constant 0 : index
    %219 = vector.load %arg13[%c0_82, %c2_83, %c0_84] : memref<1x31x64xf32, #tpu.memory_space<vmem>>, vector<1x16x64xf32>
    %c23 = arith.constant 23 : index
    %c0_85 = arith.constant 0 : index
    %220 = vector.load %arg11[%c23, %c0_85] : memref<37x192xf32, #tpu.memory_space<vmem>>, vector<1x64xf32>
    %221 = vector.shape_cast %220 : vector<1x64xf32> to vector<1x1x64xf32>
    %222 = vector.broadcast %221 : vector<1x1x64xf32> to vector<1x16x64xf32>
    %223 = arith.mulf %219, %222 : vector<1x16x64xf32>
    %224 = arith.addf %218, %223 : vector<1x16x64xf32>
    %c0_86 = arith.constant 0 : index
    %c3_87 = arith.constant 3 : index
    %c0_88 = arith.constant 0 : index
    %225 = vector.load %arg13[%c0_86, %c3_87, %c0_88] : memref<1x31x64xf32, #tpu.memory_space<vmem>>, vector<1x16x64xf32>
    %c24 = arith.constant 24 : index
    %c0_89 = arith.constant 0 : index
    %226 = vector.load %arg11[%c24, %c0_89] : memref<37x192xf32, #tpu.memory_space<vmem>>, vector<1x64xf32>
    %227 = vector.shape_cast %226 : vector<1x64xf32> to vector<1x1x64xf32>
    %228 = vector.broadcast %227 : vector<1x1x64xf32> to vector<1x16x64xf32>
    %229 = arith.mulf %225, %228 : vector<1x16x64xf32>
    %230 = arith.addf %224, %229 : vector<1x16x64xf32>
    %c0_90 = arith.constant 0 : index
    %c4_91 = arith.constant 4 : index
    %c0_92 = arith.constant 0 : index
    %231 = vector.load %arg13[%c0_90, %c4_91, %c0_92] : memref<1x31x64xf32, #tpu.memory_space<vmem>>, vector<1x16x64xf32>
    %c25 = arith.constant 25 : index
    %c0_93 = arith.constant 0 : index
    %232 = vector.load %arg11[%c25, %c0_93] : memref<37x192xf32, #tpu.memory_space<vmem>>, vector<1x64xf32>
    %233 = vector.shape_cast %232 : vector<1x64xf32> to vector<1x1x64xf32>
    %234 = vector.broadcast %233 : vector<1x1x64xf32> to vector<1x16x64xf32>
    %235 = arith.mulf %231, %234 : vector<1x16x64xf32>
    %236 = arith.addf %230, %235 : vector<1x16x64xf32>
    %c0_94 = arith.constant 0 : index
    %c5_95 = arith.constant 5 : index
    %c0_96 = arith.constant 0 : index
    %237 = vector.load %arg13[%c0_94, %c5_95, %c0_96] : memref<1x31x64xf32, #tpu.memory_space<vmem>>, vector<1x16x64xf32>
    %c26 = arith.constant 26 : index
    %c0_97 = arith.constant 0 : index
    %238 = vector.load %arg11[%c26, %c0_97] : memref<37x192xf32, #tpu.memory_space<vmem>>, vector<1x64xf32>
    %239 = vector.shape_cast %238 : vector<1x64xf32> to vector<1x1x64xf32>
    %240 = vector.broadcast %239 : vector<1x1x64xf32> to vector<1x16x64xf32>
    %241 = arith.mulf %237, %240 : vector<1x16x64xf32>
    %242 = arith.addf %236, %241 : vector<1x16x64xf32>
    %c0_98 = arith.constant 0 : index
    %c6_99 = arith.constant 6 : index
    %c0_100 = arith.constant 0 : index
    %243 = vector.load %arg13[%c0_98, %c6_99, %c0_100] : memref<1x31x64xf32, #tpu.memory_space<vmem>>, vector<1x16x64xf32>
    %c27 = arith.constant 27 : index
    %c0_101 = arith.constant 0 : index
    %244 = vector.load %arg11[%c27, %c0_101] : memref<37x192xf32, #tpu.memory_space<vmem>>, vector<1x64xf32>
    %245 = vector.shape_cast %244 : vector<1x64xf32> to vector<1x1x64xf32>
    %246 = vector.broadcast %245 : vector<1x1x64xf32> to vector<1x16x64xf32>
    %247 = arith.mulf %243, %246 : vector<1x16x64xf32>
    %248 = arith.addf %242, %247 : vector<1x16x64xf32>
    %c0_102 = arith.constant 0 : index
    %c7_103 = arith.constant 7 : index
    %c0_104 = arith.constant 0 : index
    %249 = vector.load %arg13[%c0_102, %c7_103, %c0_104] : memref<1x31x64xf32, #tpu.memory_space<vmem>>, vector<1x16x64xf32>
    %c28 = arith.constant 28 : index
    %c0_105 = arith.constant 0 : index
    %250 = vector.load %arg11[%c28, %c0_105] : memref<37x192xf32, #tpu.memory_space<vmem>>, vector<1x64xf32>
    %251 = vector.shape_cast %250 : vector<1x64xf32> to vector<1x1x64xf32>
    %252 = vector.broadcast %251 : vector<1x1x64xf32> to vector<1x16x64xf32>
    %253 = arith.mulf %249, %252 : vector<1x16x64xf32>
    %254 = arith.addf %248, %253 : vector<1x16x64xf32>
    %c0_106 = arith.constant 0 : index
    %c8_107 = arith.constant 8 : index
    %c0_108 = arith.constant 0 : index
    %255 = vector.load %arg13[%c0_106, %c8_107, %c0_108] : memref<1x31x64xf32, #tpu.memory_space<vmem>>, vector<1x16x64xf32>
    %c29 = arith.constant 29 : index
    %c0_109 = arith.constant 0 : index
    %256 = vector.load %arg11[%c29, %c0_109] : memref<37x192xf32, #tpu.memory_space<vmem>>, vector<1x64xf32>
    %257 = vector.shape_cast %256 : vector<1x64xf32> to vector<1x1x64xf32>
    %258 = vector.broadcast %257 : vector<1x1x64xf32> to vector<1x16x64xf32>
    %259 = arith.mulf %255, %258 : vector<1x16x64xf32>
    %260 = arith.addf %254, %259 : vector<1x16x64xf32>
    %c0_110 = arith.constant 0 : index
    %c9_111 = arith.constant 9 : index
    %c0_112 = arith.constant 0 : index
    %261 = vector.load %arg13[%c0_110, %c9_111, %c0_112] : memref<1x31x64xf32, #tpu.memory_space<vmem>>, vector<1x16x64xf32>
    %c30 = arith.constant 30 : index
    %c0_113 = arith.constant 0 : index
    %262 = vector.load %arg11[%c30, %c0_113] : memref<37x192xf32, #tpu.memory_space<vmem>>, vector<1x64xf32>
    %263 = vector.shape_cast %262 : vector<1x64xf32> to vector<1x1x64xf32>
    %264 = vector.broadcast %263 : vector<1x1x64xf32> to vector<1x16x64xf32>
    %265 = arith.mulf %261, %264 : vector<1x16x64xf32>
    %266 = arith.addf %260, %265 : vector<1x16x64xf32>
    %c0_114 = arith.constant 0 : index
    %c10_115 = arith.constant 10 : index
    %c0_116 = arith.constant 0 : index
    %267 = vector.load %arg13[%c0_114, %c10_115, %c0_116] : memref<1x31x64xf32, #tpu.memory_space<vmem>>, vector<1x16x64xf32>
    %c31 = arith.constant 31 : index
    %c0_117 = arith.constant 0 : index
    %268 = vector.load %arg11[%c31, %c0_117] : memref<37x192xf32, #tpu.memory_space<vmem>>, vector<1x64xf32>
    %269 = vector.shape_cast %268 : vector<1x64xf32> to vector<1x1x64xf32>
    %270 = vector.broadcast %269 : vector<1x1x64xf32> to vector<1x16x64xf32>
    %271 = arith.mulf %267, %270 : vector<1x16x64xf32>
    %272 = arith.addf %266, %271 : vector<1x16x64xf32>
    %c0_118 = arith.constant 0 : index
    %c11_119 = arith.constant 11 : index
    %c0_120 = arith.constant 0 : index
    %273 = vector.load %arg13[%c0_118, %c11_119, %c0_120] : memref<1x31x64xf32, #tpu.memory_space<vmem>>, vector<1x16x64xf32>
    %c32 = arith.constant 32 : index
    %c0_121 = arith.constant 0 : index
    %274 = vector.load %arg11[%c32, %c0_121] : memref<37x192xf32, #tpu.memory_space<vmem>>, vector<1x64xf32>
    %275 = vector.shape_cast %274 : vector<1x64xf32> to vector<1x1x64xf32>
    %276 = vector.broadcast %275 : vector<1x1x64xf32> to vector<1x16x64xf32>
    %277 = arith.mulf %273, %276 : vector<1x16x64xf32>
    %278 = arith.addf %272, %277 : vector<1x16x64xf32>
    %c0_122 = arith.constant 0 : index
    %c12 = arith.constant 12 : index
    %c0_123 = arith.constant 0 : index
    %279 = vector.load %arg13[%c0_122, %c12, %c0_123] : memref<1x31x64xf32, #tpu.memory_space<vmem>>, vector<1x16x64xf32>
    %c33 = arith.constant 33 : index
    %c0_124 = arith.constant 0 : index
    %280 = vector.load %arg11[%c33, %c0_124] : memref<37x192xf32, #tpu.memory_space<vmem>>, vector<1x64xf32>
    %281 = vector.shape_cast %280 : vector<1x64xf32> to vector<1x1x64xf32>
    %282 = vector.broadcast %281 : vector<1x1x64xf32> to vector<1x16x64xf32>
    %283 = arith.mulf %279, %282 : vector<1x16x64xf32>
    %284 = arith.addf %278, %283 : vector<1x16x64xf32>
    %c0_125 = arith.constant 0 : index
    %c13 = arith.constant 13 : index
    %c0_126 = arith.constant 0 : index
    %285 = vector.load %arg13[%c0_125, %c13, %c0_126] : memref<1x31x64xf32, #tpu.memory_space<vmem>>, vector<1x16x64xf32>
    %c34 = arith.constant 34 : index
    %c0_127 = arith.constant 0 : index
    %286 = vector.load %arg11[%c34, %c0_127] : memref<37x192xf32, #tpu.memory_space<vmem>>, vector<1x64xf32>
    %287 = vector.shape_cast %286 : vector<1x64xf32> to vector<1x1x64xf32>
    %288 = vector.broadcast %287 : vector<1x1x64xf32> to vector<1x16x64xf32>
    %289 = arith.mulf %285, %288 : vector<1x16x64xf32>
    %290 = arith.addf %284, %289 : vector<1x16x64xf32>
    %c0_128 = arith.constant 0 : index
    %c14 = arith.constant 14 : index
    %c0_129 = arith.constant 0 : index
    %291 = vector.load %arg13[%c0_128, %c14, %c0_129] : memref<1x31x64xf32, #tpu.memory_space<vmem>>, vector<1x16x64xf32>
    %c35 = arith.constant 35 : index
    %c0_130 = arith.constant 0 : index
    %292 = vector.load %arg11[%c35, %c0_130] : memref<37x192xf32, #tpu.memory_space<vmem>>, vector<1x64xf32>
    %293 = vector.shape_cast %292 : vector<1x64xf32> to vector<1x1x64xf32>
    %294 = vector.broadcast %293 : vector<1x1x64xf32> to vector<1x16x64xf32>
    %295 = arith.mulf %291, %294 : vector<1x16x64xf32>
    %296 = arith.addf %290, %295 : vector<1x16x64xf32>
    %c0_131 = arith.constant 0 : index
    %c15 = arith.constant 15 : index
    %c0_132 = arith.constant 0 : index
    %297 = vector.load %arg13[%c0_131, %c15, %c0_132] : memref<1x31x64xf32, #tpu.memory_space<vmem>>, vector<1x16x64xf32>
    %c36 = arith.constant 36 : index
    %c0_133 = arith.constant 0 : index
    %298 = vector.load %arg11[%c36, %c0_133] : memref<37x192xf32, #tpu.memory_space<vmem>>, vector<1x64xf32>
    %299 = vector.shape_cast %298 : vector<1x64xf32> to vector<1x1x64xf32>
    %300 = vector.broadcast %299 : vector<1x1x64xf32> to vector<1x16x64xf32>
    %301 = arith.mulf %297, %300 : vector<1x16x64xf32>
    %302 = arith.addf %296, %301 : vector<1x16x64xf32>
    %303 = vector.shape_cast %302 : vector<1x16x64xf32> to vector<16x64xf32>
    %c12_134 = arith.constant 12 : index
    %c0_135 = arith.constant 0 : index
    %304 = vector.load %arg11[%c12_134, %c0_135] : memref<37x192xf32, #tpu.memory_space<vmem>>, vector<1x64xf32>
    %305 = vector.broadcast %304 : vector<1x64xf32> to vector<16x64xf32>
    %306 = arith.addf %303, %305 : vector<16x64xf32>
    %c13_136 = arith.constant 13 : index
    %c0_137 = arith.constant 0 : index
    %307 = vector.load %arg11[%c13_136, %c0_137] : memref<37x192xf32, #tpu.memory_space<vmem>>, vector<1x64xf32>
    %308 = vector.broadcast %307 : vector<1x64xf32> to vector<16x64xf32>
    %309 = arith.mulf %306, %308 : vector<16x64xf32>
    %c14_138 = arith.constant 14 : index
    %c0_139 = arith.constant 0 : index
    %310 = vector.load %arg11[%c14_138, %c0_139] : memref<37x192xf32, #tpu.memory_space<vmem>>, vector<1x64xf32>
    %311 = vector.broadcast %310 : vector<1x64xf32> to vector<16x64xf32>
    %312 = arith.addf %309, %311 : vector<16x64xf32>
    %313 = arith.negf %312 : vector<16x64xf32>
    %314 = math.exp %313 : vector<16x64xf32>
    %cst_140 = arith.constant 1.000000e+00 : f32
    %315 = vector.broadcast %cst_140 : f32 to vector<16x64xf32>
    %316 = arith.addf %315, %314 : vector<16x64xf32>
    %317 = arith.divf %315, %316 : vector<16x64xf32>
    %318 = arith.mulf %312, %317 : vector<16x64xf32>
    %c15_141 = arith.constant 15 : index
    %c0_142 = arith.constant 0 : index
    %319 = vector.load %arg11[%c15_141, %c0_142] : memref<37x192xf32, #tpu.memory_space<vmem>>, vector<1x64xf32>
    %320 = arith.truncf %318 : vector<16x64xf32> to vector<16x64xbf16>
    %c0_143 = arith.constant 0 : index
    %c0_144 = arith.constant 0 : index
    %321 = vector.load %arg8[%c0_143, %c0_144] : memref<64x64xbf16, #tpu.memory_space<vmem>>, vector<64x64xbf16>
    %cst_145 = arith.constant dense<0.000000e+00> : vector<16x64xf32>
    %322 = tpu.matmul %320, %321, %cst_145 {dimension_numbers = #tpu.dot_dimension_numbers<[1], [0], [0], [1], [0, 0, 1, 1], [], []>} : vector<16x64xbf16>, vector<64x64xbf16>, vector<16x64xf32> -> vector<16x64xf32>
    %323 = vector.broadcast %319 : vector<1x64xf32> to vector<16x64xf32>
    %324 = arith.addf %322, %323 : vector<16x64xf32>
    %325 = arith.addf %166, %324 : vector<16x64xf32>
    %c16 = arith.constant 16 : index
    %c0_146 = arith.constant 0 : index
    %326 = vector.load %arg11[%c16, %c0_146] : memref<37x192xf32, #tpu.memory_space<vmem>>, vector<1x64xf32>
    %c17 = arith.constant 17 : index
    %c0_147 = arith.constant 0 : index
    %327 = vector.load %arg11[%c17, %c0_147] : memref<37x192xf32, #tpu.memory_space<vmem>>, vector<1x64xf32>
    %cst_148 = arith.constant dense<0.000000e+00> : vector<16xf32>
    %328 = vector.multi_reduction <add>, %325, %cst_148 [1] : vector<16x64xf32> to vector<16xf32>
    %329 = vector.shape_cast %328 : vector<16xf32> to vector<16x1xf32>
    %cst_149 = arith.constant 6.400000e+01 : f32
    %330 = vector.broadcast %cst_149 : f32 to vector<16x1xf32>
    %331 = arith.divf %329, %330 : vector<16x1xf32>
    %332 = vector.broadcast %331 : vector<16x1xf32> to vector<16x64xf32>
    %333 = arith.subf %325, %332 : vector<16x64xf32>
    %334 = arith.mulf %333, %333 : vector<16x64xf32>
    %cst_150 = arith.constant dense<0.000000e+00> : vector<16xf32>
    %335 = vector.multi_reduction <add>, %334, %cst_150 [1] : vector<16x64xf32> to vector<16xf32>
    %336 = vector.shape_cast %335 : vector<16xf32> to vector<16x1xf32>
    %cst_151 = arith.constant 6.400000e+01 : f32
    %337 = vector.broadcast %cst_151 : f32 to vector<16x1xf32>
    %338 = arith.divf %336, %337 : vector<16x1xf32>
    %339 = vector.broadcast %331 : vector<16x1xf32> to vector<16x64xf32>
    %340 = arith.subf %325, %339 : vector<16x64xf32>
    %cst_152 = arith.constant 9.99999974E-6 : f32
    %341 = vector.broadcast %cst_152 : f32 to vector<16x1xf32>
    %342 = arith.addf %338, %341 : vector<16x1xf32>
    %343 = math.rsqrt %342 : vector<16x1xf32>
    %344 = vector.broadcast %343 : vector<16x1xf32> to vector<16x64xf32>
    %345 = arith.mulf %340, %344 : vector<16x64xf32>
    %346 = vector.broadcast %326 : vector<1x64xf32> to vector<16x64xf32>
    %347 = arith.mulf %345, %346 : vector<16x64xf32>
    %348 = vector.broadcast %327 : vector<1x64xf32> to vector<16x64xf32>
    %349 = arith.addf %347, %348 : vector<16x64xf32>
    %c18 = arith.constant 18 : index
    %c0_153 = arith.constant 0 : index
    %350 = vector.load %arg11[%c18, %c0_153] : memref<37x192xf32, #tpu.memory_space<vmem>>, vector<1x128xf32>
    %351 = arith.truncf %349 : vector<16x64xf32> to vector<16x64xbf16>
    %c0_154 = arith.constant 0 : index
    %c0_155 = arith.constant 0 : index
    %352 = vector.load %arg9[%c0_154, %c0_155] : memref<64x128xbf16, #tpu.memory_space<vmem>>, vector<64x128xbf16>
    %cst_156 = arith.constant dense<0.000000e+00> : vector<16x128xf32>
    %353 = tpu.matmul %351, %352, %cst_156 {dimension_numbers = #tpu.dot_dimension_numbers<[1], [0], [0], [1], [0, 0, 1, 1], [], []>} : vector<16x64xbf16>, vector<64x128xbf16>, vector<16x128xf32> -> vector<16x128xf32>
    %354 = vector.broadcast %350 : vector<1x128xf32> to vector<16x128xf32>
    %355 = arith.addf %353, %354 : vector<16x128xf32>
    %356 = arith.negf %355 : vector<16x128xf32>
    %357 = math.exp %356 : vector<16x128xf32>
    %cst_157 = arith.constant 1.000000e+00 : f32
    %358 = vector.broadcast %cst_157 : f32 to vector<16x128xf32>
    %359 = arith.addf %358, %357 : vector<16x128xf32>
    %360 = arith.divf %358, %359 : vector<16x128xf32>
    %361 = arith.mulf %355, %360 : vector<16x128xf32>
    %c19 = arith.constant 19 : index
    %c0_158 = arith.constant 0 : index
    %362 = vector.load %arg11[%c19, %c0_158] : memref<37x192xf32, #tpu.memory_space<vmem>>, vector<1x64xf32>
    %363 = arith.truncf %361 : vector<16x128xf32> to vector<16x128xbf16>
    %c0_159 = arith.constant 0 : index
    %c0_160 = arith.constant 0 : index
    %364 = vector.load %arg10[%c0_159, %c0_160] : memref<128x64xbf16, #tpu.memory_space<vmem>>, vector<128x64xbf16>
    %cst_161 = arith.constant dense<0.000000e+00> : vector<16x64xf32>
    %365 = tpu.matmul %363, %364, %cst_161 {dimension_numbers = #tpu.dot_dimension_numbers<[1], [0], [0], [1], [0, 0, 1, 1], [], []>} : vector<16x128xbf16>, vector<128x64xbf16>, vector<16x64xf32> -> vector<16x64xf32>
    %366 = vector.broadcast %362 : vector<1x64xf32> to vector<16x64xf32>
    %367 = arith.addf %365, %366 : vector<16x64xf32>
    %cst_162 = arith.constant 5.000000e-01 : f32
    %368 = vector.broadcast %cst_162 : f32 to vector<16x64xf32>
    %369 = arith.mulf %368, %367 : vector<16x64xf32>
    %370 = arith.addf %325, %369 : vector<16x64xf32>
    %c20 = arith.constant 20 : index
    %c0_163 = arith.constant 0 : index
    %371 = vector.load %arg11[%c20, %c0_163] : memref<37x192xf32, #tpu.memory_space<vmem>>, vector<1x64xf32>
    %c21 = arith.constant 21 : index
    %c0_164 = arith.constant 0 : index
    %372 = vector.load %arg11[%c21, %c0_164] : memref<37x192xf32, #tpu.memory_space<vmem>>, vector<1x64xf32>
    %cst_165 = arith.constant dense<0.000000e+00> : vector<16xf32>
    %373 = vector.multi_reduction <add>, %370, %cst_165 [1] : vector<16x64xf32> to vector<16xf32>
    %374 = vector.shape_cast %373 : vector<16xf32> to vector<16x1xf32>
    %cst_166 = arith.constant 6.400000e+01 : f32
    %375 = vector.broadcast %cst_166 : f32 to vector<16x1xf32>
    %376 = arith.divf %374, %375 : vector<16x1xf32>
    %377 = vector.broadcast %376 : vector<16x1xf32> to vector<16x64xf32>
    %378 = arith.subf %370, %377 : vector<16x64xf32>
    %379 = arith.mulf %378, %378 : vector<16x64xf32>
    %cst_167 = arith.constant dense<0.000000e+00> : vector<16xf32>
    %380 = vector.multi_reduction <add>, %379, %cst_167 [1] : vector<16x64xf32> to vector<16xf32>
    %381 = vector.shape_cast %380 : vector<16xf32> to vector<16x1xf32>
    %cst_168 = arith.constant 6.400000e+01 : f32
    %382 = vector.broadcast %cst_168 : f32 to vector<16x1xf32>
    %383 = arith.divf %381, %382 : vector<16x1xf32>
    %384 = vector.broadcast %376 : vector<16x1xf32> to vector<16x64xf32>
    %385 = arith.subf %370, %384 : vector<16x64xf32>
    %cst_169 = arith.constant 9.99999974E-6 : f32
    %386 = vector.broadcast %cst_169 : f32 to vector<16x1xf32>
    %387 = arith.addf %383, %386 : vector<16x1xf32>
    %388 = math.rsqrt %387 : vector<16x1xf32>
    %389 = vector.broadcast %388 : vector<16x1xf32> to vector<16x64xf32>
    %390 = arith.mulf %385, %389 : vector<16x64xf32>
    %391 = vector.broadcast %371 : vector<1x64xf32> to vector<16x64xf32>
    %392 = arith.mulf %390, %391 : vector<16x64xf32>
    %393 = vector.broadcast %372 : vector<1x64xf32> to vector<16x64xf32>
    %394 = arith.addf %392, %393 : vector<16x64xf32>
    %395 = vector.shape_cast %394 : vector<16x64xf32> to vector<1x16x64xf32>
    %396 = arith.truncf %395 : vector<1x16x64xf32> to vector<1x16x64xbf16>
    %c0_170 = arith.constant 0 : index
    %c0_171 = arith.constant 0 : index
    %c0_172 = arith.constant 0 : index
    %397 = vector.load %arg12[%c0_170, %c0_171, %c0_172] : memref<1x16x64xbf16, #tpu.memory_space<vmem>>, vector<1x16x64xbf16>
    tpu.vector_store %arg12[%c0_170, %c0_171, %c0_172], %396 {strides = array<i32>} : memref<1x16x64xbf16, #tpu.memory_space<vmem>>, vector<1x16x64xbf16>,
    return
  }
  func.func @transform_0(%arg0: i32) -> (i32, i32, i32) {
    %c0_i32 = arith.constant 0 : i32
    %c0_i32_0 = arith.constant 0 : i32
    %c0_i32_1 = arith.constant 0 : i32
    return %arg0, %c0_i32, %c0_i32_0 : i32, i32, i32
  }
  func.func @transform_1(%arg0: i32) -> (i32, i32) {
    %c0_i32 = arith.constant 0 : i32
    %c0_i32_0 = arith.constant 0 : i32
    %c0_i32_1 = arith.constant 0 : i32
    return %c0_i32, %c0_i32_0 : i32, i32
  }
  func.func @transform_2(%arg0: i32) -> (i32, i32) {
    %c0_i32 = arith.constant 0 : i32
    %c0_i32_0 = arith.constant 0 : i32
    %c0_i32_1 = arith.constant 0 : i32
    return %c0_i32, %c0_i32_0 : i32, i32
  }
  func.func @transform_3(%arg0: i32) -> (i32, i32) {
    %c0_i32 = arith.constant 0 : i32
    %c0_i32_0 = arith.constant 0 : i32
    %c0_i32_1 = arith.constant 0 : i32
    return %c0_i32, %c0_i32_0 : i32, i32
  }
  func.func @transform_4(%arg0: i32) -> (i32, i32) {
    %c0_i32 = arith.constant 0 : i32
    %c0_i32_0 = arith.constant 0 : i32
    %c0_i32_1 = arith.constant 0 : i32
    return %c0_i32, %c0_i32_0 : i32, i32
  }
  func.func @transform_5(%arg0: i32) -> (i32, i32) {
    %c0_i32 = arith.constant 0 : i32
    %c0_i32_0 = arith.constant 0 : i32
    %c0_i32_1 = arith.constant 0 : i32
    return %c0_i32, %c0_i32_0 : i32, i32
  }
  func.func @transform_6(%arg0: i32) -> (i32, i32) {
    %c0_i32 = arith.constant 0 : i32
    %c0_i32_0 = arith.constant 0 : i32
    %c0_i32_1 = arith.constant 0 : i32
    return %c0_i32, %c0_i32_0 : i32, i32
  }
  func.func @transform_7(%arg0: i32) -> (i32, i32) {
    %c0_i32 = arith.constant 0 : i32
    %c0_i32_0 = arith.constant 0 : i32
    %c0_i32_1 = arith.constant 0 : i32
    return %c0_i32, %c0_i32_0 : i32, i32
  }
  func.func @transform_8(%arg0: i32) -> (i32, i32) {
    %c0_i32 = arith.constant 0 : i32
    %c0_i32_0 = arith.constant 0 : i32
    %c0_i32_1 = arith.constant 0 : i32
    return %c0_i32, %c0_i32_0 : i32, i32
  }
  func.func @transform_9(%arg0: i32) -> (i32, i32) {
    %c0_i32 = arith.constant 0 : i32
    %c0_i32_0 = arith.constant 0 : i32
    %c0_i32_1 = arith.constant 0 : i32
    return %c0_i32, %c0_i32_0 : i32, i32
  }
  func.func @transform_10(%arg0: i32) -> (i32, i32) {
    %c0_i32 = arith.constant 0 : i32
    %c0_i32_0 = arith.constant 0 : i32
    %c0_i32_1 = arith.constant 0 : i32
    return %c0_i32, %c0_i32_0 : i32, i32
  }
  func.func @transform_11(%arg0: i32) -> (i32, i32, i32) {
    %c0_i32 = arith.constant 0 : i32
    %c0_i32_0 = arith.constant 0 : i32
    %c0_i32_1 = arith.constant 0 : i32
    return %arg0, %c0_i32, %c0_i32_0 : i32, i32, i32
  }
}

</mosaic_0001>

<llo_original>
// kernel: streaming_conformer_forward.4
$region0: #{streaming_conformer_forward.4}
  #allocation0 [shape = 'u32[]', space=smem, size = 0x4, offset = 0x4, fixed_abs, tag = 'smem constant byte address 0x4 - core index']
  #allocation1 [shape = 'u32[144,128]{1,0:T(1,128)}', space=vmem, size = 0x12000, scoped, tag = 'internal scratch']
  %s0 = inlined_call_operand.vmem [shape: f32[2,16,32], index: 0, kind: input, shape index: {}]
  %s1 = inlined_call_operand.vmem [shape: bf16[32,64], index: 1, kind: input, shape index: {}]
  %s2 = inlined_call_operand.vmem [shape: f32[16,64], index: 2, kind: input, shape index: {}]
  %s3 = inlined_call_operand.vmem [shape: bf16[2,16,64], index: 3, kind: output, shape index: {}]
  %s4 = sld [smem:[#allocation0]]
  $region45: #{streaming_conformer_forward.4} parent=0
    _
  %s6 = ssub.s32 1, %s4
  %s7 = scalar_select 0, %s6, %s4
  loop: start=0, step=1, limit=4
  $region2: #{streaming_conformer_forward.4} parent=0 // loop_pre_header
    _
  $region3: #{streaming_conformer_forward.4} parent=0 // loop_header
    %s9 = sphi 0, %s13
    %p10 = scmp.ge.s32.totalorder %s9, 4
    %s19 = sphi 0, %s21
    %s22 = sphi 0, %s19
    %s23 = sphi 0, %s22
    %s39 = sphi 0, %s23
    %s43 = sphi 0, %s43
    %s45 = sphi 0, %s43
    %s46 = sphi 0, %s45
    %s60 = sphi 0, %s46
    %s64 = sphi 0, %s64
    %s66 = sphi 0, %s64
    %s67 = sphi 0, %s66
    %s81 = sphi 0, %s67
    %s87 = sphi 0, %s89
    %s90 = sphi 0, %s87
    %s91 = sphi 0, %s90
    %s107 = sphi 0, %s91
  $region4: #{streaming_conformer_forward.4} parent=0 // loop_header_branch
    %12 = sbr.rel (%p10) target = $region8
  $region5: #{streaming_conformer_forward.4} parent=0 // loop_body
    %s14 = ssub.s32 %s9, 1
    %s15 = ssub.s32 %s9, 2
    %s16 = sadd.s32 %s9, 1
    %s17 = ssub.s32 %s9, %s16
    %p18 = scmp.eq.s32.totalorder %s17, 0
    %s20 = sadd.s32 %s19, 1
    %s21 = scalar_select %p18, %s19, %s20
    %p24 = pneg %p18
    %p25 = scmp.eq.s32.totalorder %s9, 1
    %p26 = por %p24, %p25
    %p27 = scmp.ne.s32.totalorder %s19, %s22
    %p28 = scmp.eq.s32.totalorder %s9, 0
    %p29 = por %p27, %p28
    %p30 = scmp.ne.s32.totalorder %s19, %s22
    %p31 = scmp.eq.s32.totalorder %s14, 1
    %p32 = por %p30, %p31
    %p33 = scmp.ne.s32.totalorder %s22, %s23
    %p34 = scmp.eq.s32.totalorder %s14, 0
    %p35 = por %p33, %p34
    %p36 = scmp.ne.s32.totalorder %s22, %s23
    %p37 = scmp.eq.s32.totalorder %s15, 1
    %p38 = por %p36, %p37
    %p40 = scmp.ne.s32.totalorder %s23, %s39
    %p41 = scmp.eq.s32.totalorder %s15, 0
    %p42 = por %p40, %p41
    %s44 = sadd.s32 %s43, 1
    %p47 = scmp.eq.s32.totalorder %s9, 1
    %p48 = scmp.ne.s32.totalorder %s43, %s45
    %p49 = scmp.eq.s32.totalorder %s9, 0
    %p50 = por %p48, %p49
    %p51 = scmp.ne.s32.totalorder %s43, %s45
    %p52 = scmp.eq.s32.totalorder %s14, 1
    %p53 = por %p51, %p52
    %p54 = scmp.ne.s32.totalorder %s45, %s46
    %p55 = scmp.eq.s32.totalorder %s14, 0
    %p56 = por %p54, %p55
    %p57 = scmp.ne.s32.totalorder %s45, %s46
    %p58 = scmp.eq.s32.totalorder %s15, 1
    %p59 = por %p57, %p58
    %p61 = scmp.ne.s32.totalorder %s46, %s60
    %p62 = scmp.eq.s32.totalorder %s15, 0
    %p63 = por %p61, %p62
    %s65 = sadd.s32 %s64, 1
    %p68 = scmp.eq.s32.totalorder %s9, 1
    %p69 = scmp.ne.s32.totalorder %s64, %s66
    %p70 = scmp.eq.s32.totalorder %s9, 0
    %p71 = por %p69, %p70
    %p72 = scmp.ne.s32.totalorder %s64, %s66
    %p73 = scmp.eq.s32.totalorder %s14, 1
    %p74 = por %p72, %p73
    %p75 = scmp.ne.s32.totalorder %s66, %s67
    %p76 = scmp.eq.s32.totalorder %s14, 0
    %p77 = por %p75, %p76
    %p78 = scmp.ne.s32.totalorder %s66, %s67
    %p79 = scmp.eq.s32.totalorder %s15, 1
    %p80 = por %p78, %p79
    %p82 = scmp.ne.s32.totalorder %s67, %s81
    %p83 = scmp.eq.s32.totalorder %s15, 0
    %p84 = por %p82, %p83
    %s85 = ssub.s32 %s9, %s16
    %p86 = scmp.eq.s32.totalorder %s85, 0
    %s88 = sadd.s32 %s87, 1
    %s89 = scalar_select %p86, %s87, %s88
    %p92 = pneg %p86
    %p93 = scmp.eq.s32.totalorder %s9, 1
    %p94 = por %p92, %p93
    %p95 = scmp.ne.s32.totalorder %s87, %s90
    %p96 = scmp.eq.s32.totalorder %s9, 0
    %p97 = por %p95, %p96
    %p98 = scmp.ne.s32.totalorder %s87, %s90
    %p99 = scmp.eq.s32.totalorder %s14, 1
    %p100 = por %p98, %p99
    %p101 = scmp.ne.s32.totalorder %s90, %s91
    %p102 = scmp.eq.s32.totalorder %s14, 0
    %p103 = por %p101, %p102
    %p104 = scmp.ne.s32.totalorder %s90, %s91
    %p105 = scmp.eq.s32.totalorder %s15, 1
    %p106 = por %p104, %p105
    %p108 = scmp.ne.s32.totalorder %s91, %s107
    %p109 = scmp.eq.s32.totalorder %s15, 0
    %p110 = por %p108, %p109
    %p111 = scmp.le.s32.totalorder 1, %s9
    %p112 = scmp.lt.s32.totalorder %s9, 3
    %p113 = pnand %p111, %p112
    %p114 = pneg %p113
    // Predicated region
    $region9: #{streaming_conformer_forward.4} parent=5 // pred_check
      _
    $region10: #{streaming_conformer_forward.4} parent=5 // pred_check_branch
      %116 = sbr.rel (%p113) target = $region12
    $region11: #{streaming_conformer_forward.4} parent=5 // pred_region
      %s117 = ssub.s32 %s9, 1
      // Predicated region
      $region13: #{streaming_conformer_forward.4} parent=11 // pred_check
        %p118 = pneg %p56
      $region14: #{streaming_conformer_forward.4} parent=11 // pred_check_branch
        %120 = sbr.rel (%p118) target = $region16
      $region15: #{streaming_conformer_forward.4} parent=11 // pred_region
        _
      $region16: #{streaming_conformer_forward.4} parent=11 // pred_fallthru
        _
      // Predicated region
      $region17: #{streaming_conformer_forward.4} parent=11 // pred_check
        %p121 = pneg %p77
      $region18: #{streaming_conformer_forward.4} parent=11 // pred_check_branch
        %123 = sbr.rel (%p121) target = $region20
      $region19: #{streaming_conformer_forward.4} parent=11 // pred_region
        _
      $region20: #{streaming_conformer_forward.4} parent=11 // pred_fallthru
        _
    $region12: #{streaming_conformer_forward.4} parent=5 // pred_fallthru
      _
    %p124 = scmp.lt.s32.totalorder %s9, 2
    // Predicated region
    $region21: #{streaming_conformer_forward.4} parent=5 // pred_check
      %p125 = pneg %p124
    $region22: #{streaming_conformer_forward.4} parent=5 // pred_check_branch
      %127 = sbr.rel (%p125) target = $region24
    $region23: #{streaming_conformer_forward.4} parent=5 // pred_region
      // Predicated region
      $region25: #{streaming_conformer_forward.4} parent=23 // pred_check
        %p128 = pneg %p29
      $region26: #{streaming_conformer_forward.4} parent=23 // pred_check_branch
        %130 = sbr.rel (%p128) target = $region28
      $region27: #{streaming_conformer_forward.4} parent=23 // pred_region
        %p131 = scmp.lt.s32.totalorder %s9, 1
        %s132 = scalar_select %p131, %s9, 1
        %s133 = smul.addr %s132, 2
        %s134 = smul.addr %s133, 8
        %s135 = scalar_lea.vmem %s0, %s134
      $region28: #{streaming_conformer_forward.4} parent=23 // pred_fallthru
        _
    $region24: #{streaming_conformer_forward.4} parent=5 // pred_fallthru
      _
    %p136 = scmp.le.s32.totalorder 1, %s9
    %p137 = scmp.lt.s32.totalorder %s9, 3
    %p138 = pnand %p136, %p137
    %p139 = pneg %p138
    // Predicated region
    $region29: #{streaming_conformer_forward.4} parent=5 // pred_check
      _
    $region30: #{streaming_conformer_forward.4} parent=5 // pred_check_branch
      %141 = sbr.rel (%p138) target = $region32
    $region31: #{streaming_conformer_forward.4} parent=5 // pred_region
      %s142 = ssub.s32 %s9, 1
      %p143 = scmp.lt.s32.totalorder %s14, 1
      %s144 = scalar_select %p143, %s14, 1
      %s145 = smul.addr %s144, 2
      %s146 = smul.addr %s145, 8
      %s147 = scalar_lea.vmem %s0, %s146
      %p148 = pneg %p35
      %p149 = pneg %p32
      %p150 = pneg %p56
      %p151 = pneg %p53
      %p152 = pneg %p77
      %p153 = pneg %p74
      %p154 = pneg %p103
      %p155 = pneg %p100
      %p156 = scmp.lt.s32.totalorder %s14, 1
      %s157 = scalar_select %p156, %s14, 1
      %s158 = smul.addr %s157, 2
      %s159 = smul.addr %s158, 4
      %s160 = scalar_lea.vmem %s3, %s159
      %p161 = scmp.lt.s32.totalorder %s14, 1
      %s162 = scalar_select %p161, %s14, 1
      %s163 = smul.addr %s162, 2
      %s164 = smul.addr %s163, 8
      %s165 = scalar_lea.vmem %s0, %s164
      %p166 = scmp.lt.s32.totalorder %s14, 1
      %s167 = scalar_select %p166, %s14, 1
      %s168 = smul.addr %s167, 2
      %s169 = smul.addr %s168, 4
      %s170 = scalar_lea.vmem %s3, %s169
      %v172 = vld [vmem:[%s165] sm:$0xff]
      %v173 = vld [vmem:[%s165 + $0x8] sm:$0xff]
      %v174 = vpack.c.bf16 %v173, %v172
      %v175 = vld [vmem:[%s1] sm:$0xf]
      %v176 = vld [vmem:[%s1 + $0x4] sm:$0xf]
      %v177 = vld [vmem:[%s1 + $0x8] sm:$0xf]
      %v178 = vld [vmem:[%s1 + $0xc] sm:$0xf]
      %v183 = vunpack.c.l.b16 %v175
      %v184 = vunpack.c.l.b16 %v176
      %v185 = vunpack.c.l.b16 %v177
      %v186 = vunpack.c.l.b16 %v178
      %v187 = vpack.c.b16 %v184, %v183
      %v188 = vpack.c.b16 %v186, %v185
      %vm191 = vcmask 261120
      %v193 = vsel %vm191, %v174, 0
      %195 = vmatprep.subr.bf16.mxu0 0
      %196 = vmatpush1.bf16.msra.mxu0 %v187
      %197 = vmatprep.subr.bf16.mxu0 0
      %198 = vmatpush1.bf16.msra.mxu0 %v188
      %199 = vmatprep.subr.bf16.mxu0 0
      %200 = vmatpush1.bf16.msra.mxu0 0
      %201 = vmatprep.subr.bf16.mxu0 0
      %202 = vmatpush1.bf16.msra.mxu0 0
      %203 = vmatprep.subr.bf16.mxu0 0
      %204 = vmatpush1.bf16.msra.mxu0 0
      %205 = vmatprep.subr.bf16.mxu0 0
      %206 = vmatpush1.bf16.msra.mxu0 0
      %207 = vmatprep.subr.bf16.mxu0 0
      %208 = vmatpush1.bf16.msra.mxu0 0
      %209 = vmatprep.subr.bf16.mxu0 0
      %210 = vmatpush1.bf16.msra.mxu0 0
      %211 = vmatprep.subr.bf16.mxu0 0
      %212 = vmatpush1.bf16.msra.mxu0 0
      %213 = vmatprep.subr.bf16.mxu0 0
      %214 = vmatpush1.bf16.msra.mxu0 0
      %215 = vmatprep.subr.bf16.mxu0 0
      %216 = vmatpush1.bf16.msra.mxu0 0
      %217 = vmatprep.subr.bf16.mxu0 0
      %218 = vmatpush1.bf16.msra.mxu0 0
      %219 = vmatprep.subr.bf16.mxu0 0
      %220 = vmatpush1.bf16.msra.mxu0 0
      %221 = vmatprep.subr.bf16.mxu0 0
      %222 = vmatpush1.bf16.msra.mxu0 0
      %223 = vmatprep.subr.bf16.mxu0 0
      %224 = vmatpush1.bf16.msra.mxu0 0
      %225 = vmatprep.subr.bf16.mxu0 0
      %226 = vmatpush1.bf16.msra.mxu0 0
      %227 = vmatprep.mubr.bf16.mxu0 0
      %228 = vmatmul.mubr.bf16.gmra.mrb[0].mxu0 %v193
      %v229 = vpop.f32.mrb[0].mxu0
      %v230 = vadd.f32 0.0, %v229
      %v231 = vpop.f32.mrb[0].mxu0
      %v232 = vpop.f32.mrb[0].mxu0
      %v233 = vadd.f32 0.0, %v232
      %v234 = vpop.f32.mrb[0].mxu0
      %235 = vdwg.mxu0
      %v236 = vld [vmem:[%s2] sm:$0xff]
      %v237 = vld [vmem:[%s2 + $0x8] sm:$0xff]
      %v238 = vadd.f32 %v230, %v236
      %v239 = vadd.f32 %v233, %v237
      %v240 = vpack.c.bf16 %v239, %v238
      %v242 = vunpack.c.l.b16 %v240
      %v243 = vunpack.c.h.b16 %v240
      %v244 = vpack.c.b16 %v242, %v242
      %v245 = vpack.c.b16 %v243, %v243
      %vm248 = vcmask 519168
      %249 = vst.msk [vmem:[%s170] sm:$0xf] %vm248, %v244
      %250 = vst.msk [vmem:[%s170 + $0x4] sm:$0xf] %vm248, %v245
      %p251 = scmp.lt.s32.totalorder %s14, 1
      %s252 = scalar_select %p251, %s14, 1
      %s253 = smul.addr %s252, 2
      %s254 = smul.addr %s253, 4
      %s255 = scalar_lea.vmem %s3, %s254
      // Predicated region
      $region33: #{streaming_conformer_forward.4} parent=31 // pred_check
        %p256 = pneg %p100
      $region34: #{streaming_conformer_forward.4} parent=31 // pred_check_branch
        %258 = sbr.rel (%p256) target = $region36
      $region35: #{streaming_conformer_forward.4} parent=31 // pred_region
        _
      $region36: #{streaming_conformer_forward.4} parent=31 // pred_fallthru
        _
    $region32: #{streaming_conformer_forward.4} parent=5 // pred_fallthru
      _
    %p259 = scmp.le.s32.totalorder 2, %s9
    // Predicated region
    $region37: #{streaming_conformer_forward.4} parent=5 // pred_check
      %p260 = pneg %p259
    $region38: #{streaming_conformer_forward.4} parent=5 // pred_check_branch
      %262 = sbr.rel (%p260) target = $region40
    $region39: #{streaming_conformer_forward.4} parent=5 // pred_region
      %s263 = ssub.s32 %s9, 2
      // Predicated region
      $region41: #{streaming_conformer_forward.4} parent=39 // pred_check
        %p264 = pneg %p106
      $region42: #{streaming_conformer_forward.4} parent=39 // pred_check_branch
        %266 = sbr.rel (%p264) target = $region44
      $region43: #{streaming_conformer_forward.4} parent=39 // pred_region
        %p267 = scmp.lt.s32.totalorder %s15, 1
        %s268 = scalar_select %p267, %s15, 1
        %s269 = smul.addr %s268, 2
        %s270 = smul.addr %s269, 4
        %s271 = scalar_lea.vmem %s3, %s270
      $region44: #{streaming_conformer_forward.4} parent=39 // pred_fallthru
        _
    $region40: #{streaming_conformer_forward.4} parent=5 // pred_fallthru
      _
  $region6: #{streaming_conformer_forward.4} parent=0 // loop_footer
    %s13 = sadd.s32 1, %s9
  $region7: #{streaming_conformer_forward.4} parent=0 // loop_footer_branch
    %8 = sbr.rel target = $region3
  $region8: #{streaming_conformer_forward.4} parent=0 // loop_exit
    _

// kernel: streaming_conformer_forward.7
$region0: #{streaming_conformer_forward.7}
  #allocation0 [shape = 'u32[]', space=smem, size = 0x4, offset = 0x4, fixed_abs, tag = 'smem constant byte address 0x4 - core index']
  #allocation1 [shape = 'u32[144,128]{1,0:T(1,128)}', space=vmem, size = 0x12000, scoped, tag = 'internal scratch']
  #allocation2 [shape = 'f32[1,1]{1,0:T(1,128)S(1)}', space=vmem, size = 0x200, scoped, tag = 'scoped memory for streaming_conformer_forward.7']
  %s0 = inlined_call_operand.vmem [shape: bf16[2,16,64], index: 0, kind: input, shape index: {}]
  %s1 = inlined_call_operand.vmem [shape: bf16[64,32], index: 1, kind: input, shape index: {}]
  %s2 = inlined_call_operand.vmem [shape: f32[1,32], index: 2, kind: input, shape index: {}]
  %s3 = inlined_call_operand.vmem [shape: f32[1,32], index: 3, kind: input, shape index: {}]
  %s4 = inlined_call_operand.<no memory space> [shape: f32[1,1], index: 4, kind: input, shape index: {}]
  %s5 = inlined_call_operand.vmem [shape: bf16[64,32], index: 5, kind: input, shape index: {}]
  %s6 = inlined_call_operand.vmem [shape: f32[1,32], index: 6, kind: input, shape index: {}]
  %s7 = inlined_call_operand.vmem [shape: f32[1,32], index: 7, kind: input, shape index: {}]
  %s8 = inlined_call_operand.vmem [shape: f32[1,32], index: 8, kind: input, shape index: {}]
  %s9 = inlined_call_operand.vmem [shape: bf16[32,4], index: 9, kind: input, shape index: {}]
  %s10 = inlined_call_operand.vmem [shape: f32[1,4], index: 10, kind: input, shape index: {}]
  %s11 = inlined_call_operand.hbm [shape: f32[2,1,4], index: 11, kind: output, shape index: {}]
  %s12 = sld [smem:[#allocation0]]
  $region77: #{streaming_conformer_forward.7} parent=0
    _
  %s14 = ssub.s32 1, %s12
  %s15 = scalar_select 0, %s14, %s12
  %v16 = vstv %s4
  %17 = vst [vmem:[#allocation2] sm:$0x1] %v16
  $region1: #{streaming_conformer_forward.7} parent=0
    #allocation3 [shape = 'u8[1024]{0}', space=vmem, size = 0x400, scoped, tag = 'output window, operand 0']
    #allocation4 [shape = 's32[2]{0}', space=sflag, size = 0x8, scoped, tag = 'scoped memory for streaming_conformer_forward.7']
    %18 = vsyncpa [#allocation4], 0
    %s19 = scalar_lea.sflag [#allocation4], 1
    %20 = vsyncpa %s19, 0
    loop: start=0, step=1, limit=4
    $region2: #{streaming_conformer_forward.7} parent=1 // loop_pre_header
      _
    $region3: #{streaming_conformer_forward.7} parent=1 // loop_header
      %s22 = sphi 0, %s26
      %p23 = scmp.ge.s32.totalorder %s22, 4
      %s32 = sphi 0, %s34
      %s35 = sphi 0, %s32
      %s36 = sphi 0, %s35
      %s52 = sphi 0, %s36
      %s56 = sphi 0, %s56
      %s58 = sphi 0, %s56
      %s59 = sphi 0, %s58
      %s73 = sphi 0, %s59
      %s77 = sphi 0, %s77
      %s79 = sphi 0, %s77
      %s80 = sphi 0, %s79
      %s94 = sphi 0, %s80
      %s98 = sphi 0, %s98
      %s100 = sphi 0, %s98
      %s101 = sphi 0, %s100
      %s115 = sphi 0, %s101
      %s119 = sphi 0, %s119
      %s121 = sphi 0, %s119
      %s122 = sphi 0, %s121
      %s136 = sphi 0, %s122
      %s140 = sphi 0, %s140
      %s142 = sphi 0, %s140
      %s143 = sphi 0, %s142
      %s157 = sphi 0, %s143
      %s161 = sphi 0, %s161
      %s163 = sphi 0, %s161
      %s164 = sphi 0, %s163
      %s178 = sphi 0, %s164
      %s182 = sphi 0, %s182
      %s184 = sphi 0, %s182
      %s185 = sphi 0, %s184
      %s199 = sphi 0, %s185
      %s203 = sphi 0, %s203
      %s205 = sphi 0, %s203
      %s206 = sphi 0, %s205
      %s220 = sphi 0, %s206
      %s224 = sphi 0, %s224
      %s226 = sphi 0, %s224
      %s227 = sphi 0, %s226
      %s241 = sphi 0, %s227
      %s245 = sphi 0, %s245
      %s247 = sphi 0, %s245
      %s248 = sphi 0, %s247
      %s262 = sphi 0, %s248
      %s268 = sphi 0, %s270
      %s271 = sphi 0, %s268
      %s272 = sphi 0, %s271
      %s288 = sphi 0, %s272
    $region4: #{streaming_conformer_forward.7} parent=1 // loop_header_branch
      %25 = sbr.rel (%p23) target = $region8
    $region5: #{streaming_conformer_forward.7} parent=1 // loop_body
      %s27 = ssub.s32 %s22, 1
      %s28 = ssub.s32 %s22, 2
      %s29 = sadd.s32 %s22, 1
      %s30 = ssub.s32 %s22, %s29
      %p31 = scmp.eq.s32.totalorder %s30, 0
      %s33 = sadd.s32 %s32, 1
      %s34 = scalar_select %p31, %s32, %s33
      %p37 = pneg %p31
      %p38 = scmp.eq.s32.totalorder %s22, 1
      %p39 = por %p37, %p38
      %p40 = scmp.ne.s32.totalorder %s32, %s35
      %p41 = scmp.eq.s32.totalorder %s22, 0
      %p42 = por %p40, %p41
      %p43 = scmp.ne.s32.totalorder %s32, %s35
      %p44 = scmp.eq.s32.totalorder %s27, 1
      %p45 = por %p43, %p44
      %p46 = scmp.ne.s32.totalorder %s35, %s36
      %p47 = scmp.eq.s32.totalorder %s27, 0
      %p48 = por %p46, %p47
      %p49 = scmp.ne.s32.totalorder %s35, %s36
      %p50 = scmp.eq.s32.totalorder %s28, 1
      %p51 = por %p49, %p50
      %p53 = scmp.ne.s32.totalorder %s36, %s52
      %p54 = scmp.eq.s32.totalorder %s28, 0
      %p55 = por %p53, %p54
      %s57 = sadd.s32 %s56, 1
      %p60 = scmp.eq.s32.totalorder %s22, 1
      %p61 = scmp.ne.s32.totalorder %s56, %s58
      %p62 = scmp.eq.s32.totalorder %s22, 0
      %p63 = por %p61, %p62
      %p64 = scmp.ne.s32.totalorder %s56, %s58
      %p65 = scmp.eq.s32.totalorder %s27, 1
      %p66 = por %p64, %p65
      %p67 = scmp.ne.s32.totalorder %s58, %s59
      %p68 = scmp.eq.s32.totalorder %s27, 0
      %p69 = por %p67, %p68
      %p70 = scmp.ne.s32.totalorder %s58, %s59
      %p71 = scmp.eq.s32.totalorder %s28, 1
      %p72 = por %p70, %p71
      %p74 = scmp.ne.s32.totalorder %s59, %s73
      %p75 = scmp.eq.s32.totalorder %s28, 0
      %p76 = por %p74, %p75
      %s78 = sadd.s32 %s77, 1
      %p81 = scmp.eq.s32.totalorder %s22, 1
      %p82 = scmp.ne.s32.totalorder %s77, %s79
      %p83 = scmp.eq.s32.totalorder %s22, 0
      %p84 = por %p82, %p83
      %p85 = scmp.ne.s32.totalorder %s77, %s79
      %p86 = scmp.eq.s32.totalorder %s27, 1
      %p87 = por %p85, %p86
      %p88 = scmp.ne.s32.totalorder %s79, %s80
      %p89 = scmp.eq.s32.totalorder %s27, 0
      %p90 = por %p88, %p89
      %p91 = scmp.ne.s32.totalorder %s79, %s80
      %p92 = scmp.eq.s32.totalorder %s28, 1
      %p93 = por %p91, %p92
      %p95 = scmp.ne.s32.totalorder %s80, %s94
      %p96 = scmp.eq.s32.totalorder %s28, 0
      %p97 = por %p95, %p96
      %s99 = sadd.s32 %s98, 1
      %p102 = scmp.eq.s32.totalorder %s22, 1
      %p103 = scmp.ne.s32.totalorder %s98, %s100
      %p104 = scmp.eq.s32.totalorder %s22, 0
      %p105 = por %p103, %p104
      %p106 = scmp.ne.s32.totalorder %s98, %s100
      %p107 = scmp.eq.s32.totalorder %s27, 1
      %p108 = por %p106, %p107
      %p109 = scmp.ne.s32.totalorder %s100, %s101
      %p110 = scmp.eq.s32.totalorder %s27, 0
      %p111 = por %p109, %p110
      %p112 = scmp.ne.s32.totalorder %s100, %s101
      %p113 = scmp.eq.s32.totalorder %s28, 1
      %p114 = por %p112, %p113
      %p116 = scmp.ne.s32.totalorder %s101, %s115
      %p117 = scmp.eq.s32.totalorder %s28, 0
      %p118 = por %p116, %p117
      %s120 = sadd.s32 %s119, 1
      %p123 = scmp.eq.s32.totalorder %s22, 1
      %p124 = scmp.ne.s32.totalorder %s119, %s121
      %p125 = scmp.eq.s32.totalorder %s22, 0
      %p126 = por %p124, %p125
      %p127 = scmp.ne.s32.totalorder %s119, %s121
      %p128 = scmp.eq.s32.totalorder %s27, 1
      %p129 = por %p127, %p128
      %p130 = scmp.ne.s32.totalorder %s121, %s122
      %p131 = scmp.eq.s32.totalorder %s27, 0
      %p132 = por %p130, %p131
      %p133 = scmp.ne.s32.totalorder %s121, %s122
      %p134 = scmp.eq.s32.totalorder %s28, 1
      %p135 = por %p133, %p134
      %p137 = scmp.ne.s32.totalorder %s122, %s136
      %p138 = scmp.eq.s32.totalorder %s28, 0
      %p139 = por %p137, %p138
      %s141 = sadd.s32 %s140, 1
      %p144 = scmp.eq.s32.totalorder %s22, 1
      %p145 = scmp.ne.s32.totalorder %s140, %s142
      %p146 = scmp.eq.s32.totalorder %s22, 0
      %p147 = por %p145, %p146
      %p148 = scmp.ne.s32.totalorder %s140, %s142
      %p149 = scmp.eq.s32.totalorder %s27, 1
      %p150 = por %p148, %p149
      %p151 = scmp.ne.s32.totalorder %s142, %s143
      %p152 = scmp.eq.s32.totalorder %s27, 0
      %p153 = por %p151, %p152
      %p154 = scmp.ne.s32.totalorder %s142, %s143
      %p155 = scmp.eq.s32.totalorder %s28, 1
      %p156 = por %p154, %p155
      %p158 = scmp.ne.s32.totalorder %s143, %s157
      %p159 = scmp.eq.s32.totalorder %s28, 0
      %p160 = por %p158, %p159
      %s162 = sadd.s32 %s161, 1
      %p165 = scmp.eq.s32.totalorder %s22, 1
      %p166 = scmp.ne.s32.totalorder %s161, %s163
      %p167 = scmp.eq.s32.totalorder %s22, 0
      %p168 = por %p166, %p167
      %p169 = scmp.ne.s32.totalorder %s161, %s163
      %p170 = scmp.eq.s32.totalorder %s27, 1
      %p171 = por %p169, %p170
      %p172 = scmp.ne.s32.totalorder %s163, %s164
      %p173 = scmp.eq.s32.totalorder %s27, 0
      %p174 = por %p172, %p173
      %p175 = scmp.ne.s32.totalorder %s163, %s164
      %p176 = scmp.eq.s32.totalorder %s28, 1
      %p177 = por %p175, %p176
      %p179 = scmp.ne.s32.totalorder %s164, %s178
      %p180 = scmp.eq.s32.totalorder %s28, 0
      %p181 = por %p179, %p180
      %s183 = sadd.s32 %s182, 1
      %p186 = scmp.eq.s32.totalorder %s22, 1
      %p187 = scmp.ne.s32.totalorder %s182, %s184
      %p188 = scmp.eq.s32.totalorder %s22, 0
      %p189 = por %p187, %p188
      %p190 = scmp.ne.s32.totalorder %s182, %s184
      %p191 = scmp.eq.s32.totalorder %s27, 1
      %p192 = por %p190, %p191
      %p193 = scmp.ne.s32.totalorder %s184, %s185
      %p194 = scmp.eq.s32.totalorder %s27, 0
      %p195 = por %p193, %p194
      %p196 = scmp.ne.s32.totalorder %s184, %s185
      %p197 = scmp.eq.s32.totalorder %s28, 1
      %p198 = por %p196, %p197
      %p200 = scmp.ne.s32.totalorder %s185, %s199
      %p201 = scmp.eq.s32.totalorder %s28, 0
      %p202 = por %p200, %p201
      %s204 = sadd.s32 %s203, 1
      %p207 = scmp.eq.s32.totalorder %s22, 1
      %p208 = scmp.ne.s32.totalorder %s203, %s205
      %p209 = scmp.eq.s32.totalorder %s22, 0
      %p210 = por %p208, %p209
      %p211 = scmp.ne.s32.totalorder %s203, %s205
      %p212 = scmp.eq.s32.totalorder %s27, 1
      %p213 = por %p211, %p212
      %p214 = scmp.ne.s32.totalorder %s205, %s206
      %p215 = scmp.eq.s32.totalorder %s27, 0
      %p216 = por %p214, %p215
      %p217 = scmp.ne.s32.totalorder %s205, %s206
      %p218 = scmp.eq.s32.totalorder %s28, 1
      %p219 = por %p217, %p218
      %p221 = scmp.ne.s32.totalorder %s206, %s220
      %p222 = scmp.eq.s32.totalorder %s28, 0
      %p223 = por %p221, %p222
      %s225 = sadd.s32 %s224, 1
      %p228 = scmp.eq.s32.totalorder %s22, 1
      %p229 = scmp.ne.s32.totalorder %s224, %s226
      %p230 = scmp.eq.s32.totalorder %s22, 0
      %p231 = por %p229, %p230
      %p232 = scmp.ne.s32.totalorder %s224, %s226
      %p233 = scmp.eq.s32.totalorder %s27, 1
      %p234 = por %p232, %p233
      %p235 = scmp.ne.s32.totalorder %s226, %s227
      %p236 = scmp.eq.s32.totalorder %s27, 0
      %p237 = por %p235, %p236
      %p238 = scmp.ne.s32.totalorder %s226, %s227
      %p239 = scmp.eq.s32.totalorder %s28, 1
      %p240 = por %p238, %p239
      %p242 = scmp.ne.s32.totalorder %s227, %s241
      %p243 = scmp.eq.s32.totalorder %s28, 0
      %p244 = por %p242, %p243
      %s246 = sadd.s32 %s245, 1
      %p249 = scmp.eq.s32.totalorder %s22, 1
      %p250 = scmp.ne.s32.totalorder %s245, %s247
      %p251 = scmp.eq.s32.totalorder %s22, 0
      %p252 = por %p250, %p251
      %p253 = scmp.ne.s32.totalorder %s245, %s247
      %p254 = scmp.eq.s32.totalorder %s27, 1
      %p255 = por %p253, %p254
      %p256 = scmp.ne.s32.totalorder %s247, %s248
      %p257 = scmp.eq.s32.totalorder %s27, 0
      %p258 = por %p256, %p257
      %p259 = scmp.ne.s32.totalorder %s247, %s248
      %p260 = scmp.eq.s32.totalorder %s28, 1
      %p261 = por %p259, %p260
      %p263 = scmp.ne.s32.totalorder %s248, %s262
      %p264 = scmp.eq.s32.totalorder %s28, 0
      %p265 = por %p263, %p264
      %s266 = ssub.s32 %s22, %s29
      %p267 = scmp.eq.s32.totalorder %s266, 0
      %s269 = sadd.s32 %s268, 1
      %s270 = scalar_select %p267, %s268, %s269
      %p273 = pneg %p267
      %p274 = scmp.eq.s32.totalorder %s22, 1
      %p275 = por %p273, %p274
      %p276 = scmp.ne.s32.totalorder %s268, %s271
      %p277 = scmp.eq.s32.totalorder %s22, 0
      %p278 = por %p276, %p277
      %p279 = scmp.ne.s32.totalorder %s268, %s271
      %p280 = scmp.eq.s32.totalorder %s27, 1
      %p281 = por %p279, %p280
      %p282 = scmp.ne.s32.totalorder %s271, %s272
      %p283 = scmp.eq.s32.totalorder %s27, 0
      %p284 = por %p282, %p283
      %p285 = scmp.ne.s32.totalorder %s271, %s272
      %p286 = scmp.eq.s32.totalorder %s28, 1
      %p287 = por %p285, %p286
      %p289 = scmp.ne.s32.totalorder %s272, %s288
      %p290 = scmp.eq.s32.totalorder %s28, 0
      %p291 = por %p289, %p290
      %p292 = scmp.le.s32.totalorder 1, %s22
      %p293 = scmp.lt.s32.totalorder %s22, 3
      %p294 = pnand %p292, %p293
      %p295 = pneg %p294
      // Predicated region
      $region9: #{streaming_conformer_forward.7} parent=5 // pred_check
        _
      $region10: #{streaming_conformer_forward.7} parent=5 // pred_check_branch
        %297 = sbr.rel (%p294) target = $region12
      $region11: #{streaming_conformer_forward.7} parent=5 // pred_region
        %s298 = ssub.s32 %s22, 1
        // Predicated region
        $region13: #{streaming_conformer_forward.7} parent=11 // pred_check
          %p299 = pneg %p69
        $region14: #{streaming_conformer_forward.7} parent=11 // pred_check_branch
          %301 = sbr.rel (%p299) target = $region16
        $region15: #{streaming_conformer_forward.7} parent=11 // pred_region
          _
        $region16: #{streaming_conformer_forward.7} parent=11 // pred_fallthru
          _
        // Predicated region
        $region17: #{streaming_conformer_forward.7} parent=11 // pred_check
          %p302 = pneg %p90
        $region18: #{streaming_conformer_forward.7} parent=11 // pred_check_branch
          %304 = sbr.rel (%p302) target = $region20
        $region19: #{streaming_conformer_forward.7} parent=11 // pred_region
          _
        $region20: #{streaming_conformer_forward.7} parent=11 // pred_fallthru
          _
        // Predicated region
        $region21: #{streaming_conformer_forward.7} parent=11 // pred_check
          %p305 = pneg %p111
        $region22: #{streaming_conformer_forward.7} parent=11 // pred_check_branch
          %307 = sbr.rel (%p305) target = $region24
        $region23: #{streaming_conformer_forward.7} parent=11 // pred_region
          _
        $region24: #{streaming_conformer_forward.7} parent=11 // pred_fallthru
          _
        // Predicated region
        $region25: #{streaming_conformer_forward.7} parent=11 // pred_check
          %p308 = pneg %p132
        $region26: #{streaming_conformer_forward.7} parent=11 // pred_check_branch
          %310 = sbr.rel (%p308) target = $region28
        $region27: #{streaming_conformer_forward.7} parent=11 // pred_region
          _
        $region28: #{streaming_conformer_forward.7} parent=11 // pred_fallthru
          _
        // Predicated region
        $region29: #{streaming_conformer_forward.7} parent=11 // pred_check
          %p311 = pneg %p153
        $region30: #{streaming_conformer_forward.7} parent=11 // pred_check_branch
          %313 = sbr.rel (%p311) target = $region32
        $region31: #{streaming_conformer_forward.7} parent=11 // pred_region
          _
        $region32: #{streaming_conformer_forward.7} parent=11 // pred_fallthru
          _
        // Predicated region
        $region33: #{streaming_conformer_forward.7} parent=11 // pred_check
          %p314 = pneg %p174
        $region34: #{streaming_conformer_forward.7} parent=11 // pred_check_branch
          %316 = sbr.rel (%p314) target = $region36
        $region35: #{streaming_conformer_forward.7} parent=11 // pred_region
          _
        $region36: #{streaming_conformer_forward.7} parent=11 // pred_fallthru
          _
        // Predicated region
        $region37: #{streaming_conformer_forward.7} parent=11 // pred_check
          %p317 = pneg %p195
        $region38: #{streaming_conformer_forward.7} parent=11 // pred_check_branch
          %319 = sbr.rel (%p317) target = $region40
        $region39: #{streaming_conformer_forward.7} parent=11 // pred_region
          _
        $region40: #{streaming_conformer_forward.7} parent=11 // pred_fallthru
          _
        // Predicated region
        $region41: #{streaming_conformer_forward.7} parent=11 // pred_check
          %p320 = pneg %p216
        $region42: #{streaming_conformer_forward.7} parent=11 // pred_check_branch
          %322 = sbr.rel (%p320) target = $region44
        $region43: #{streaming_conformer_forward.7} parent=11 // pred_region
          _
        $region44: #{streaming_conformer_forward.7} parent=11 // pred_fallthru
          _
        // Predicated region
        $region45: #{streaming_conformer_forward.7} parent=11 // pred_check
          %p323 = pneg %p237
        $region46: #{streaming_conformer_forward.7} parent=11 // pred_check_branch
          %325 = sbr.rel (%p323) target = $region48
        $region47: #{streaming_conformer_forward.7} parent=11 // pred_region
          _
        $region48: #{streaming_conformer_forward.7} parent=11 // pred_fallthru
          _
        // Predicated region
        $region49: #{streaming_conformer_forward.7} parent=11 // pred_check
          %p326 = pneg %p258
        $region50: #{streaming_conformer_forward.7} parent=11 // pred_check_branch
          %328 = sbr.rel (%p326) target = $region52
        $region51: #{streaming_conformer_forward.7} parent=11 // pred_region
          _
        $region52: #{streaming_conformer_forward.7} parent=11 // pred_fallthru
          _
      $region12: #{streaming_conformer_forward.7} parent=5 // pred_fallthru
        _
      %p329 = scmp.lt.s32.totalorder %s22, 2
      // Predicated region
      $region53: #{streaming_conformer_forward.7} parent=5 // pred_check
        %p330 = pneg %p329
      $region54: #{streaming_conformer_forward.7} parent=5 // pred_check_branch
        %332 = sbr.rel (%p330) target = $region56
      $region55: #{streaming_conformer_forward.7} parent=5 // pred_region
        // Predicated region
        $region57: #{streaming_conformer_forward.7} parent=55 // pred_check
          %p333 = pneg %p42
        $region58: #{streaming_conformer_forward.7} parent=55 // pred_check_branch
          %335 = sbr.rel (%p333) target = $region60
        $region59: #{streaming_conformer_forward.7} parent=55 // pred_region
          %p336 = scmp.lt.s32.totalorder %s22, 1
          %s337 = scalar_select %p336, %s22, 1
          %s338 = smul.addr %s337, 2
          %s339 = smul.addr %s338, 4
          %s340 = scalar_lea.vmem %s0, %s339
        $region60: #{streaming_conformer_forward.7} parent=55 // pred_fallthru
          _
      $region56: #{streaming_conformer_forward.7} parent=5 // pred_fallthru
        _
      %p341 = scmp.le.s32.totalorder 1, %s22
      %p342 = scmp.lt.s32.totalorder %s22, 3
      %p343 = pnand %p341, %p342
      %p344 = pneg %p343
      // Predicated region
      $region61: #{streaming_conformer_forward.7} parent=5 // pred_check
        _
      $region62: #{streaming_conformer_forward.7} parent=5 // pred_check_branch
        %346 = sbr.rel (%p343) target = $region64
      $region63: #{streaming_conformer_forward.7} parent=5 // pred_region
        %s347 = ssub.s32 %s22, 1
        %p348 = scmp.lt.s32.totalorder %s27, 1
        %s349 = scalar_select %p348, %s27, 1
        %s350 = smul.addr %s349, 2
        %s351 = smul.addr %s350, 4
        %s352 = scalar_lea.vmem %s0, %s351
        %p353 = pneg %p48
        %p354 = pneg %p45
        %p355 = pneg %p69
        %p356 = pneg %p66
        %p357 = pneg %p90
        %p358 = pneg %p87
        %p359 = pneg %p111
        %p360 = pneg %p108
        %p361 = pneg %p132
        %p362 = pneg %p129
        %p363 = pneg %p153
        %p364 = pneg %p150
        %p365 = pneg %p174
        %p366 = pneg %p171
        %p367 = pneg %p195
        %p368 = pneg %p192
        %p369 = pneg %p216
        %p370 = pneg %p213
        %p371 = pneg %p237
        %p372 = pneg %p234
        %p373 = pneg %p258
        %p374 = pneg %p255
        %p375 = pneg %p284
        %p376 = pneg %p281
        %s377 = sand.u32 %s271, 1
        %s378 = scalar_lea.sflag [#allocation4], %s377
        %s379 = sand.u32 %s271, 1
        %s380 = scalar_lea.vmem [#allocation3], %s379
        %p381 = scmp.lt.s32.totalorder %s27, 1
        %s382 = scalar_select %p381, %s27, 1
        %s383 = smul.addr %s382, 2
        %s384 = smul.addr %s383, 4
        %s385 = scalar_lea.vmem %s0, %s384
        %v387 = vld [vmem:[%s385] sm:$0xf]
        %v388 = vld [vmem:[%s385 + $0x4] sm:$0xf]
        %v389 = vunpack.c.l.bf16 %v387
        %v390 = vunpack.c.l.bf16 %v388
        %v391 = vld [vmem:[%s2] sm:$0x1]
        %v392 = vpack.c.bf16 %v390, %v389
        %v393 = vld [vmem:[%s1] sm:$0xf]
        %v394 = vld [vmem:[%s1 + $0x4] sm:$0xf]
        %v395 = vld [vmem:[%s1 + $0x8] sm:$0xf]
        %v396 = vld [vmem:[%s1 + $0xc] sm:$0xf]
        %v397 = vld [vmem:[%s1 + $0x10] sm:$0xf]
        %v398 = vld [vmem:[%s1 + $0x14] sm:$0xf]
        %v399 = vld [vmem:[%s1 + $0x18] sm:$0xf]
        %v400 = vld [vmem:[%s1 + $0x1c] sm:$0xf]
        %v402 = vlaneseq
        %v403 = vshrl.u32 %v402, 7
        %v404 = vsub.s32 0, %v403
        %v405 = vrot.slane %v391, %v404
        %v415 = vunpack.c.l.b16 %v393
        %v416 = vunpack.c.l.b16 %v394
        %v417 = vunpack.c.l.b16 %v395
        %v418 = vunpack.c.l.b16 %v396
        %v419 = vunpack.c.l.b16 %v397
        %v420 = vunpack.c.l.b16 %v398
        %v421 = vunpack.c.l.b16 %v399
        %v422 = vunpack.c.l.b16 %v400
        %v423 = vpack.c.b16 %v416, %v415
        %v424 = vpack.c.b16 %v418, %v417
        %v425 = vpack.c.b16 %v420, %v419
        %v426 = vpack.c.b16 %v422, %v421
        %vm431 = vcmask 523264
        %v433 = vsel %vm431, %v392, 0
        %435 = vmatprep.subr.bf16.mxu0 0
        %436 = vmatpush1.bf16.msra.mxu0 %v423
        %437 = vmatprep.subr.bf16.mxu0 0
        %438 = vmatpush1.bf16.msra.mxu0 %v424
        %439 = vmatprep.subr.bf16.mxu0 0
        %440 = vmatpush1.bf16.msra.mxu0 %v425
        %441 = vmatprep.subr.bf16.mxu0 0
        %442 = vmatpush1.bf16.msra.mxu0 %v426
        %443 = vmatprep.subr.bf16.mxu0 0
        %444 = vmatpush1.bf16.msra.mxu0 0
        %445 = vmatprep.subr.bf16.mxu0 0
        %446 = vmatpush1.bf16.msra.mxu0 0
        %447 = vmatprep.subr.bf16.mxu0 0
        %448 = vmatpush1.bf16.msra.mxu0 0
        %449 = vmatprep.subr.bf16.mxu0 0
        %450 = vmatpush1.bf16.msra.mxu0 0
        %451 = vmatprep.subr.bf16.mxu0 0
        %452 = vmatpush1.bf16.msra.mxu0 0
        %453 = vmatprep.subr.bf16.mxu0 0
        %454 = vmatpush1.bf16.msra.mxu0 0
        %455 = vmatprep.subr.bf16.mxu0 0
        %456 = vmatpush1.bf16.msra.mxu0 0
        %457 = vmatprep.subr.bf16.mxu0 0
        %458 = vmatpush1.bf16.msra.mxu0 0
        %459 = vmatprep.subr.bf16.mxu0 0
        %460 = vmatpush1.bf16.msra.mxu0 0
        %461 = vmatprep.subr.bf16.mxu0 0
        %462 = vmatpush1.bf16.msra.mxu0 0
        %463 = vmatprep.subr.bf16.mxu0 0
        %464 = vmatpush1.bf16.msra.mxu0 0
        %465 = vmatprep.subr.bf16.mxu0 0
        %466 = vmatpush1.bf16.msra.mxu0 0
        %467 = vmatprep.mubr.bf16.mxu0 0
        %468 = vmatmul.mubr.bf16.gmra.mrb[0].mxu0 %v433
        %v469 = vpop.f32.mrb[0].mxu0
        %v470 = vadd.f32 %v405, %v469
        %v471 = vpop.f32.mrb[0].mxu0
        %v472 = vpop.f32.mrb[0].mxu0
        %v473 = vadd.f32 %v405, %v472
        %v474 = vpop.f32.mrb[0].mxu0
        %475 = vdwg.mxu0
        %v476 = vtanh.pop %v470
        %v477 = vtanh.pop %v473
        %v478 = vld [vmem:[%s3] sm:$0x1]
        %v480 = vlaneseq
        %v481 = vshrl.u32 %v480, 7
        %v482 = vsub.s32 0, %v481
        %v483 = vrot.slane %v478, %v482
        %v485 = vmul.f32 %v476, %v483
        %v486 = vmul.f32 %v477, %v483
        %vm487 = vcmask 261120
        %v488 = vsel %vm487, %v485, 0.0
        %489 = vadd.xlane.f32.xlu0 %v488
        %v490 = vpop.xlane.xlu0 %489
        %v491 = vsel %vm487, %v486, 0.0
        %492 = vadd.xlane.f32.xlu0 %v491
        %v493 = vpop.xlane.xlu0 %492
        %v494 = vld [vmem:[#allocation2] sm:$0x1]
        %v496 = vlaneseq
        %v497 = vshrl.u32 %v496, 7
        %v498 = vsub.s32 0, %v497
        %v499 = vrot.slane %v494, %v498
        %v501 = vadd.f32 %v490, %v499
        %v502 = vadd.f32 %v493, %v499
        %vm503 = vcmask 7168
        %v504 = vsel %vm503, %v501, -inf
        %v505 = vsel %vm503, %v502, -inf
        %v506 = vmax.f32 %v504, %v505
        %v507 = vrot.slane %v506, 4
        %v508 = vmax.f32 %v506, %v507
        %v509 = vrot.slane %v508, 2
        %v510 = vmax.f32 %v508, %v509
        %v511 = vrot.slane %v510, 1
        %v512 = vmax.f32 %v510, %v511
        %v513 = vsub.f32 %v501, %v512
        %v514 = vsub.f32 %v502, %v512
        %v515 = vmul.f32 %v513, 1.442695
        %v516 = vpow.pop %v515
        %v517 = vmul.f32 %v514, 1.442695
        %v518 = vpow.pop %v517
        %v519 = vsel %vm503, %v516, 0.0
        %v520 = vsel %vm503, %v518, 0.0
        %v521 = vadd.f32 %v519, %v520
        %v522 = vrot.slane %v521, 4
        %v523 = vadd.f32 %v521, %v522
        %v524 = vrot.slane %v523, 2
        %v525 = vadd.f32 %v523, %v524
        %v526 = vrot.slane %v525, 1
        %v527 = vadd.f32 %v525, %v526
        %v528 = vrcp.pop %v527
        %v529 = vmul.f32 %v516, %v528
        %v530 = vmul.f32 %v518, %v528
        %532 = vset.pattern.permute.xlu0 0
        %533 = vperm.xlu0 %532, %v529
        %v534 = vpop.permute.xlu0 %533
        %537 = vset.pattern.permute.xlu0 0
        %538 = vperm.xlu0 %537, %v530
        %v539 = vpop.permute.xlu0 %538
        %v541 = vmul.f32 %v534, %v389
        %v542 = vmul.f32 %v539, %v390
        %v543 = vsel %vm431, %v541, 0.0
        %v544 = vsel %vm431, %v542, 0.0
        %v545 = vadd.f32 %v543, %v544
        %v546 = vrot.slane %v545, 4
        %v547 = vadd.f32 %v545, %v546
        %v548 = vrot.slane %v547, 2
        %v549 = vadd.f32 %v547, %v548
        %v550 = vrot.slane %v549, 1
        %v551 = vadd.f32 %v549, %v550
        %v552 = vld [vmem:[%s6] sm:$0x1]
        %v553 = vpack.c.bf16 %v551, %v551
        %v554 = vld [vmem:[%s5] sm:$0xf]
        %v555 = vld [vmem:[%s5 + $0x4] sm:$0xf]
        %v556 = vld [vmem:[%s5 + $0x8] sm:$0xf]
        %v557 = vld [vmem:[%s5 + $0xc] sm:$0xf]
        %v558 = vld [vmem:[%s5 + $0x10] sm:$0xf]
        %v559 = vld [vmem:[%s5 + $0x14] sm:$0xf]
        %v560 = vld [vmem:[%s5 + $0x18] sm:$0xf]
        %v561 = vld [vmem:[%s5 + $0x1c] sm:$0xf]
        %v570 = vunpack.c.l.b16 %v554
        %v571 = vunpack.c.l.b16 %v555
        %v572 = vunpack.c.l.b16 %v556
        %v573 = vunpack.c.l.b16 %v557
        %v574 = vunpack.c.l.b16 %v558
        %v575 = vunpack.c.l.b16 %v559
        %v576 = vunpack.c.l.b16 %v560
        %v577 = vunpack.c.l.b16 %v561
        %v578 = vpack.c.b16 %v571, %v570
        %v579 = vpack.c.b16 %v573, %v572
        %v580 = vpack.c.b16 %v575, %v574
        %v581 = vpack.c.b16 %v577, %v576
        %v587 = vsel %vm431, %v553, 0
        %589 = vmatprep.subr.bf16.mxu0 0
        %590 = vmatpush1.bf16.msra.mxu0 %v578
        %591 = vmatprep.subr.bf16.mxu0 0
        %592 = vmatpush1.bf16.msra.mxu0 %v579
        %593 = vmatprep.subr.bf16.mxu0 0
        %594 = vmatpush1.bf16.msra.mxu0 %v580
        %595 = vmatprep.subr.bf16.mxu0 0
        %596 = vmatpush1.bf16.msra.mxu0 %v581
        %597 = vmatprep.subr.bf16.mxu0 0
        %598 = vmatpush1.bf16.msra.mxu0 0
        %599 = vmatprep.subr.bf16.mxu0 0
        %600 = vmatpush1.bf16.msra.mxu0 0
        %601 = vmatprep.subr.bf16.mxu0 0
        %602 = vmatpush1.bf16.msra.mxu0 0
        %603 = vmatprep.subr.bf16.mxu0 0
        %604 = vmatpush1.bf16.msra.mxu0 0
        %605 = vmatprep.subr.bf16.mxu0 0
        %606 = vmatpush1.bf16.msra.mxu0 0
        %607 = vmatprep.subr.bf16.mxu0 0
        %608 = vmatpush1.bf16.msra.mxu0 0
        %609 = vmatprep.subr.bf16.mxu0 0
        %610 = vmatpush1.bf16.msra.mxu0 0
        %611 = vmatprep.subr.bf16.mxu0 0
        %612 = vmatpush1.bf16.msra.mxu0 0
        %613 = vmatprep.subr.bf16.mxu0 0
        %614 = vmatpush1.bf16.msra.mxu0 0
        %615 = vmatprep.subr.bf16.mxu0 0
        %616 = vmatpush1.bf16.msra.mxu0 0
        %617 = vmatprep.subr.bf16.mxu0 0
        %618 = vmatpush1.bf16.msra.mxu0 0
        %619 = vmatprep.subr.bf16.mxu0 0
        %620 = vmatpush1.bf16.msra.mxu0 0
        %621 = vmatprep.mubr.bf16.mxu0 0
        %622 = vmatmul.mubr.bf16.gmra.mrb[0].mxu0 %v587
        %v623 = vpop.f32.mrb[0].mxu0
        %v624 = vadd.f32 %v552, %v623
        %v625 = vpop.f32.mrb[0].mxu0
        %v626 = vpop.f32.mrb[0].mxu0
        %v627 = vpop.f32.mrb[0].mxu0
        %628 = vdwg.mxu0
        %v629 = vld [vmem:[%s7] sm:$0x1]
        %v630 = vld [vmem:[%s8] sm:$0x1]
        %vm631 = vcmask 253952
        %v632 = vsel %vm631, %v624, 0.0
        %633 = vadd.xlane.f32.xlu0 %v632
        %v634 = vpop.xlane.xlu0 %633
        %v635 = vrcp.pop 32.0
        %v636 = vmul.f32 %v634, %v635
        %v637 = vsub.f32 %v624, %v636
        %v638 = vmul.f32 %v637, %v637
        %v639 = vsel %vm631, %v638, 0.0
        %640 = vadd.xlane.f32.xlu0 %v639
        %v641 = vpop.xlane.xlu0 %640
        %v642 = vmul.f32 %v641, %v635
        %v643 = vadd.f32 %v642, 1e-05
        %v644 = vrsqrt.pop %v643
        %v645 = vmul.f32 %v637, %v644
        %v646 = vmul.f32 %v645, %v629
        %v647 = vadd.f32 %v646, %v630
        %v648 = vmax.f32 %v647, 0.0
        %v649 = vld [vmem:[%s10] sm:$0x1]
        %v650 = vpack.c.bf16 %v648, %v648
        %v651 = vld [vmem:[%s9] sm:$0xf]
        %v652 = vld [vmem:[%s9 + $0x4] sm:$0xf]
        %v653 = vld [vmem:[%s9 + $0x8] sm:$0xf]
        %v654 = vld [vmem:[%s9 + $0xc] sm:$0xf]
        %v659 = vunpack.c.l.b16 %v651
        %v660 = vunpack.c.l.b16 %v652
        %v661 = vunpack.c.l.b16 %v653
        %v662 = vunpack.c.l.b16 %v654
        %v663 = vpack.c.b16 %v660, %v659
        %v664 = vpack.c.b16 %v662, %v661
        %v668 = vsel %vm487, %v650, 0
        %670 = vmatprep.subr.bf16.mxu0 0
        %671 = vmatpush1.bf16.msra.mxu0 %v663
        %672 = vmatprep.subr.bf16.mxu0 0
        %673 = vmatpush1.bf16.msra.mxu0 %v664
        %674 = vmatprep.subr.bf16.mxu0 0
        %675 = vmatpush1.bf16.msra.mxu0 0
        %676 = vmatprep.subr.bf16.mxu0 0
        %677 = vmatpush1.bf16.msra.mxu0 0
        %678 = vmatprep.subr.bf16.mxu0 0
        %679 = vmatpush1.bf16.msra.mxu0 0
        %680 = vmatprep.subr.bf16.mxu0 0
        %681 = vmatpush1.bf16.msra.mxu0 0
        %682 = vmatprep.subr.bf16.mxu0 0
        %683 = vmatpush1.bf16.msra.mxu0 0
        %684 = vmatprep.subr.bf16.mxu0 0
        %685 = vmatpush1.bf16.msra.mxu0 0
        %686 = vmatprep.subr.bf16.mxu0 0
        %687 = vmatpush1.bf16.msra.mxu0 0
        %688 = vmatprep.subr.bf16.mxu0 0
        %689 = vmatpush1.bf16.msra.mxu0 0
        %690 = vmatprep.subr.bf16.mxu0 0
        %691 = vmatpush1.bf16.msra.mxu0 0
        %692 = vmatprep.subr.bf16.mxu0 0
        %693 = vmatpush1.bf16.msra.mxu0 0
        %694 = vmatprep.subr.bf16.mxu0 0
        %695 = vmatpush1.bf16.msra.mxu0 0
        %696 = vmatprep.subr.bf16.mxu0 0
        %697 = vmatpush1.bf16.msra.mxu0 0
        %698 = vmatprep.subr.bf16.mxu0 0
        %699 = vmatpush1.bf16.msra.mxu0 0
        %700 = vmatprep.subr.bf16.mxu0 0
        %701 = vmatpush1.bf16.msra.mxu0 0
        %702 = vmatprep.mubr.bf16.mxu0 0
        %703 = vmatmul.mubr.bf16.gmra.mrb[0].mxu0 %v668
        %v704 = vpop.f32.mrb[0].mxu0
        %v705 = vadd.f32 %v649, %v704
        %v706 = vpop.f32.mrb[0].mxu0
        %v707 = vpop.f32.mrb[0].mxu0
        %v708 = vpop.f32.mrb[0].mxu0
        %709 = vdwg.mxu0
        %vm710 = vcmask 24576
        %711 = vst.msk [vmem:[%s380] sm:$0x1] %vm710, %v705
        %s712 = sand.u32 %s271, 1
        %s713 = scalar_lea.sflag [#allocation4], %s712
        %s714 = sand.u32 %s271, 1
        %s715 = scalar_lea.vmem [#allocation3], %s714
        // Predicated region
        $region65: #{streaming_conformer_forward.7} parent=63 // pred_check
          %p716 = pneg %p281
        $region66: #{streaming_conformer_forward.7} parent=63 // pred_check_branch
          %718 = sbr.rel (%p716) target = $region68
        $region67: #{streaming_conformer_forward.7} parent=63 // pred_region
          %s720 = ssub.s32 16, 16
          %721 = vsyncadd %s713, %s720
          %s722 = smul.addr %s27, 16
          %s723 = scalar_lea.hbm %s11, %s722
          %s725 = sshll.u32 %s715, 4
          %s726 = int_to_ptr.vmem [resolvable:$true] %s725
          %728 = dma.vmem_to_hbm [thread:$0]  %s726, 16, %s723, %s713
        $region68: #{streaming_conformer_forward.7} parent=63 // pred_fallthru
          _
      $region64: #{streaming_conformer_forward.7} parent=5 // pred_fallthru
        _
      %p729 = scmp.le.s32.totalorder 2, %s22
      // Predicated region
      $region69: #{streaming_conformer_forward.7} parent=5 // pred_check
        %p730 = pneg %p729
      $region70: #{streaming_conformer_forward.7} parent=5 // pred_check_branch
        %732 = sbr.rel (%p730) target = $region72
      $region71: #{streaming_conformer_forward.7} parent=5 // pred_region
        %s733 = ssub.s32 %s22, 2
        // Predicated region
        $region73: #{streaming_conformer_forward.7} parent=71 // pred_check
          %p734 = pneg %p287
        $region74: #{streaming_conformer_forward.7} parent=71 // pred_check_branch
          %736 = sbr.rel (%p734) target = $region76
        $region75: #{streaming_conformer_forward.7} parent=71 // pred_region
          %s737 = sand.u32 %s272, 1
          %s738 = scalar_lea.sflag [#allocation4], %s737
          %s739 = sand.u32 %s272, 1
          %s740 = scalar_lea.vmem [#allocation3], %s739
          %741 = dma.done %s738, 16
        $region76: #{streaming_conformer_forward.7} parent=71 // pred_fallthru
          _
      $region72: #{streaming_conformer_forward.7} parent=5 // pred_fallthru
        _
    $region6: #{streaming_conformer_forward.7} parent=1 // loop_footer
      %s26 = sadd.s32 1, %s22
    $region7: #{streaming_conformer_forward.7} parent=1 // loop_footer_branch
      %21 = sbr.rel target = $region3
    $region8: #{streaming_conformer_forward.7} parent=1 // loop_exit
      _
    %742 = vsyncpa [#allocation4], 1
    %s743 = scalar_lea.sflag [#allocation4], 1
    %744 = vsyncpa %s743, 1

// kernel: streaming_conformer_forward.5
$region0: #{streaming_conformer_forward.5}
  #allocation0 [shape = 'u32[]', space=smem, size = 0x4, offset = 0x4, fixed_abs, tag = 'smem constant byte address 0x4 - core index']
  #allocation1 [shape = 'u32[144,128]{1,0:T(1,128)}', space=vmem, size = 0x12000, scoped, tag = 'internal scratch']
  #allocation2 [shape = 'f32[1,31,64]{2,1,0:T(8,128)}', space=vmem, size = 0x4000, scoped, tag = 'scratch operand']
  %s0 = inlined_call_operand.vmem [shape: bf16[2,16,64], index: 0, kind: input, shape index: {}]
  %s1 = inlined_call_operand.vmem [shape: bf16[64,128], index: 1, kind: input, shape index: {}]
  %s2 = inlined_call_operand.vmem [shape: bf16[128,64], index: 2, kind: input, shape index: {}]
  %s3 = inlined_call_operand.vmem [shape: bf16[64,192], index: 3, kind: input, shape index: {}]
  %s4 = inlined_call_operand.vmem [shape: bf16[64,64], index: 4, kind: input, shape index: {}]
  %s5 = inlined_call_operand.vmem [shape: bf16[64,64], index: 5, kind: input, shape index: {}]
  %s6 = inlined_call_operand.vmem [shape: bf16[64,64], index: 6, kind: input, shape index: {}]
  %s7 = inlined_call_operand.vmem [shape: bf16[64,64], index: 7, kind: input, shape index: {}]
  %s8 = inlined_call_operand.vmem [shape: bf16[64,128], index: 8, kind: input, shape index: {}]
  %s9 = inlined_call_operand.vmem [shape: bf16[128,64], index: 9, kind: input, shape index: {}]
  %s10 = inlined_call_operand.vmem [shape: f32[37,192], index: 10, kind: input, shape index: {}]
  %s11 = inlined_call_operand.vmem [shape: bf16[2,16,64], index: 11, kind: output, shape index: {}]
  %s12 = sld [smem:[#allocation0]]
  $region77: #{streaming_conformer_forward.5} parent=0
    _
  %s14 = ssub.s32 1, %s12
  %s15 = scalar_select 0, %s14, %s12
  loop: start=0, step=1, limit=4
  $region2: #{streaming_conformer_forward.5} parent=0 // loop_pre_header
    _
  $region3: #{streaming_conformer_forward.5} parent=0 // loop_header
    %s17 = sphi 0, %s21
    %p18 = scmp.ge.s32.totalorder %s17, 4
    %s27 = sphi 0, %s29
    %s30 = sphi 0, %s27
    %s31 = sphi 0, %s30
    %s47 = sphi 0, %s31
    %s51 = sphi 0, %s51
    %s53 = sphi 0, %s51
    %s54 = sphi 0, %s53
    %s68 = sphi 0, %s54
    %s72 = sphi 0, %s72
    %s74 = sphi 0, %s72
    %s75 = sphi 0, %s74
    %s89 = sphi 0, %s75
    %s93 = sphi 0, %s93
    %s95 = sphi 0, %s93
    %s96 = sphi 0, %s95
    %s110 = sphi 0, %s96
    %s114 = sphi 0, %s114
    %s116 = sphi 0, %s114
    %s117 = sphi 0, %s116
    %s131 = sphi 0, %s117
    %s135 = sphi 0, %s135
    %s137 = sphi 0, %s135
    %s138 = sphi 0, %s137
    %s152 = sphi 0, %s138
    %s156 = sphi 0, %s156
    %s158 = sphi 0, %s156
    %s159 = sphi 0, %s158
    %s173 = sphi 0, %s159
    %s177 = sphi 0, %s177
    %s179 = sphi 0, %s177
    %s180 = sphi 0, %s179
    %s194 = sphi 0, %s180
    %s198 = sphi 0, %s198
    %s200 = sphi 0, %s198
    %s201 = sphi 0, %s200
    %s215 = sphi 0, %s201
    %s219 = sphi 0, %s219
    %s221 = sphi 0, %s219
    %s222 = sphi 0, %s221
    %s236 = sphi 0, %s222
    %s240 = sphi 0, %s240
    %s242 = sphi 0, %s240
    %s243 = sphi 0, %s242
    %s257 = sphi 0, %s243
    %s263 = sphi 0, %s265
    %s266 = sphi 0, %s263
    %s267 = sphi 0, %s266
    %s283 = sphi 0, %s267
  $region4: #{streaming_conformer_forward.5} parent=0 // loop_header_branch
    %20 = sbr.rel (%p18) target = $region8
  $region5: #{streaming_conformer_forward.5} parent=0 // loop_body
    %s22 = ssub.s32 %s17, 1
    %s23 = ssub.s32 %s17, 2
    %s24 = sadd.s32 %s17, 1
    %s25 = ssub.s32 %s17, %s24
    %p26 = scmp.eq.s32.totalorder %s25, 0
    %s28 = sadd.s32 %s27, 1
    %s29 = scalar_select %p26, %s27, %s28
    %p32 = pneg %p26
    %p33 = scmp.eq.s32.totalorder %s17, 1
    %p34 = por %p32, %p33
    %p35 = scmp.ne.s32.totalorder %s27, %s30
    %p36 = scmp.eq.s32.totalorder %s17, 0
    %p37 = por %p35, %p36
    %p38 = scmp.ne.s32.totalorder %s27, %s30
    %p39 = scmp.eq.s32.totalorder %s22, 1
    %p40 = por %p38, %p39
    %p41 = scmp.ne.s32.totalorder %s30, %s31
    %p42 = scmp.eq.s32.totalorder %s22, 0
    %p43 = por %p41, %p42
    %p44 = scmp.ne.s32.totalorder %s30, %s31
    %p45 = scmp.eq.s32.totalorder %s23, 1
    %p46 = por %p44, %p45
    %p48 = scmp.ne.s32.totalorder %s31, %s47
    %p49 = scmp.eq.s32.totalorder %s23, 0
    %p50 = por %p48, %p49
    %s52 = sadd.s32 %s51, 1
    %p55 = scmp.eq.s32.totalorder %s17, 1
    %p56 = scmp.ne.s32.totalorder %s51, %s53
    %p57 = scmp.eq.s32.totalorder %s17, 0
    %p58 = por %p56, %p57
    %p59 = scmp.ne.s32.totalorder %s51, %s53
    %p60 = scmp.eq.s32.totalorder %s22, 1
    %p61 = por %p59, %p60
    %p62 = scmp.ne.s32.totalorder %s53, %s54
    %p63 = scmp.eq.s32.totalorder %s22, 0
    %p64 = por %p62, %p63
    %p65 = scmp.ne.s32.totalorder %s53, %s54
    %p66 = scmp.eq.s32.totalorder %s23, 1
    %p67 = por %p65, %p66
    %p69 = scmp.ne.s32.totalorder %s54, %s68
    %p70 = scmp.eq.s32.totalorder %s23, 0
    %p71 = por %p69, %p70
    %s73 = sadd.s32 %s72, 1
    %p76 = scmp.eq.s32.totalorder %s17, 1
    %p77 = scmp.ne.s32.totalorder %s72, %s74
    %p78 = scmp.eq.s32.totalorder %s17, 0
    %p79 = por %p77, %p78
    %p80 = scmp.ne.s32.totalorder %s72, %s74
    %p81 = scmp.eq.s32.totalorder %s22, 1
    %p82 = por %p80, %p81
    %p83 = scmp.ne.s32.totalorder %s74, %s75
    %p84 = scmp.eq.s32.totalorder %s22, 0
    %p85 = por %p83, %p84
    %p86 = scmp.ne.s32.totalorder %s74, %s75
    %p87 = scmp.eq.s32.totalorder %s23, 1
    %p88 = por %p86, %p87
    %p90 = scmp.ne.s32.totalorder %s75, %s89
    %p91 = scmp.eq.s32.totalorder %s23, 0
    %p92 = por %p90, %p91
    %s94 = sadd.s32 %s93, 1
    %p97 = scmp.eq.s32.totalorder %s17, 1
    %p98 = scmp.ne.s32.totalorder %s93, %s95
    %p99 = scmp.eq.s32.totalorder %s17, 0
    %p100 = por %p98, %p99
    %p101 = scmp.ne.s32.totalorder %s93, %s95
    %p102 = scmp.eq.s32.totalorder %s22, 1
    %p103 = por %p101, %p102
    %p104 = scmp.ne.s32.totalorder %s95, %s96
    %p105 = scmp.eq.s32.totalorder %s22, 0
    %p106 = por %p104, %p105
    %p107 = scmp.ne.s32.totalorder %s95, %s96
    %p108 = scmp.eq.s32.totalorder %s23, 1
    %p109 = por %p107, %p108
    %p111 = scmp.ne.s32.totalorder %s96, %s110
    %p112 = scmp.eq.s32.totalorder %s23, 0
    %p113 = por %p111, %p112
    %s115 = sadd.s32 %s114, 1
    %p118 = scmp.eq.s32.totalorder %s17, 1
    %p119 = scmp.ne.s32.totalorder %s114, %s116
    %p120 = scmp.eq.s32.totalorder %s17, 0
    %p121 = por %p119, %p120
    %p122 = scmp.ne.s32.totalorder %s114, %s116
    %p123 = scmp.eq.s32.totalorder %s22, 1
    %p124 = por %p122, %p123
    %p125 = scmp.ne.s32.totalorder %s116, %s117
    %p126 = scmp.eq.s32.totalorder %s22, 0
    %p127 = por %p125, %p126
    %p128 = scmp.ne.s32.totalorder %s116, %s117
    %p129 = scmp.eq.s32.totalorder %s23, 1
    %p130 = por %p128, %p129
    %p132 = scmp.ne.s32.totalorder %s117, %s131
    %p133 = scmp.eq.s32.totalorder %s23, 0
    %p134 = por %p132, %p133
    %s136 = sadd.s32 %s135, 1
    %p139 = scmp.eq.s32.totalorder %s17, 1
    %p140 = scmp.ne.s32.totalorder %s135, %s137
    %p141 = scmp.eq.s32.totalorder %s17, 0
    %p142 = por %p140, %p141
    %p143 = scmp.ne.s32.totalorder %s135, %s137
    %p144 = scmp.eq.s32.totalorder %s22, 1
    %p145 = por %p143, %p144
    %p146 = scmp.ne.s32.totalorder %s137, %s138
    %p147 = scmp.eq.s32.totalorder %s22, 0
    %p148 = por %p146, %p147
    %p149 = scmp.ne.s32.totalorder %s137, %s138
    %p150 = scmp.eq.s32.totalorder %s23, 1
    %p151 = por %p149, %p150
    %p153 = scmp.ne.s32.totalorder %s138, %s152
    %p154 = scmp.eq.s32.totalorder %s23, 0
    %p155 = por %p153, %p154
    %s157 = sadd.s32 %s156, 1
    %p160 = scmp.eq.s32.totalorder %s17, 1
    %p161 = scmp.ne.s32.totalorder %s156, %s158
    %p162 = scmp.eq.s32.totalorder %s17, 0
    %p163 = por %p161, %p162
    %p164 = scmp.ne.s32.totalorder %s156, %s158
    %p165 = scmp.eq.s32.totalorder %s22, 1
    %p166 = por %p164, %p165
    %p167 = scmp.ne.s32.totalorder %s158, %s159
    %p168 = scmp.eq.s32.totalorder %s22, 0
    %p169 = por %p167, %p168
    %p170 = scmp.ne.s32.totalorder %s158, %s159
    %p171 = scmp.eq.s32.totalorder %s23, 1
    %p172 = por %p170, %p171
    %p174 = scmp.ne.s32.totalorder %s159, %s173
    %p175 = scmp.eq.s32.totalorder %s23, 0
    %p176 = por %p174, %p175
    %s178 = sadd.s32 %s177, 1
    %p181 = scmp.eq.s32.totalorder %s17, 1
    %p182 = scmp.ne.s32.totalorder %s177, %s179
    %p183 = scmp.eq.s32.totalorder %s17, 0
    %p184 = por %p182, %p183
    %p185 = scmp.ne.s32.totalorder %s177, %s179
    %p186 = scmp.eq.s32.totalorder %s22, 1
    %p187 = por %p185, %p186
    %p188 = scmp.ne.s32.totalorder %s179, %s180
    %p189 = scmp.eq.s32.totalorder %s22, 0
    %p190 = por %p188, %p189
    %p191 = scmp.ne.s32.totalorder %s179, %s180
    %p192 = scmp.eq.s32.totalorder %s23, 1
    %p193 = por %p191, %p192
    %p195 = scmp.ne.s32.totalorder %s180, %s194
    %p196 = scmp.eq.s32.totalorder %s23, 0
    %p197 = por %p195, %p196
    %s199 = sadd.s32 %s198, 1
    %p202 = scmp.eq.s32.totalorder %s17, 1
    %p203 = scmp.ne.s32.totalorder %s198, %s200
    %p204 = scmp.eq.s32.totalorder %s17, 0
    %p205 = por %p203, %p204
    %p206 = scmp.ne.s32.totalorder %s198, %s200
    %p207 = scmp.eq.s32.totalorder %s22, 1
    %p208 = por %p206, %p207
    %p209 = scmp.ne.s32.totalorder %s200, %s201
    %p210 = scmp.eq.s32.totalorder %s22, 0
    %p211 = por %p209, %p210
    %p212 = scmp.ne.s32.totalorder %s200, %s201
    %p213 = scmp.eq.s32.totalorder %s23, 1
    %p214 = por %p212, %p213
    %p216 = scmp.ne.s32.totalorder %s201, %s215
    %p217 = scmp.eq.s32.totalorder %s23, 0
    %p218 = por %p216, %p217
    %s220 = sadd.s32 %s219, 1
    %p223 = scmp.eq.s32.totalorder %s17, 1
    %p224 = scmp.ne.s32.totalorder %s219, %s221
    %p225 = scmp.eq.s32.totalorder %s17, 0
    %p226 = por %p224, %p225
    %p227 = scmp.ne.s32.totalorder %s219, %s221
    %p228 = scmp.eq.s32.totalorder %s22, 1
    %p229 = por %p227, %p228
    %p230 = scmp.ne.s32.totalorder %s221, %s222
    %p231 = scmp.eq.s32.totalorder %s22, 0
    %p232 = por %p230, %p231
    %p233 = scmp.ne.s32.totalorder %s221, %s222
    %p234 = scmp.eq.s32.totalorder %s23, 1
    %p235 = por %p233, %p234
    %p237 = scmp.ne.s32.totalorder %s222, %s236
    %p238 = scmp.eq.s32.totalorder %s23, 0
    %p239 = por %p237, %p238
    %s241 = sadd.s32 %s240, 1
    %p244 = scmp.eq.s32.totalorder %s17, 1
    %p245 = scmp.ne.s32.totalorder %s240, %s242
    %p246 = scmp.eq.s32.totalorder %s17, 0
    %p247 = por %p245, %p246
    %p248 = scmp.ne.s32.totalorder %s240, %s242
    %p249 = scmp.eq.s32.totalorder %s22, 1
    %p250 = por %p248, %p249
    %p251 = scmp.ne.s32.totalorder %s242, %s243
    %p252 = scmp.eq.s32.totalorder %s22, 0
    %p253 = por %p251, %p252
    %p254 = scmp.ne.s32.totalorder %s242, %s243
    %p255 = scmp.eq.s32.totalorder %s23, 1
    %p256 = por %p254, %p255
    %p258 = scmp.ne.s32.totalorder %s243, %s257
    %p259 = scmp.eq.s32.totalorder %s23, 0
    %p260 = por %p258, %p259
    %s261 = ssub.s32 %s17, %s24
    %p262 = scmp.eq.s32.totalorder %s261, 0
    %s264 = sadd.s32 %s263, 1
    %s265 = scalar_select %p262, %s263, %s264
    %p268 = pneg %p262
    %p269 = scmp.eq.s32.totalorder %s17, 1
    %p270 = por %p268, %p269
    %p271 = scmp.ne.s32.totalorder %s263, %s266
    %p272 = scmp.eq.s32.totalorder %s17, 0
    %p273 = por %p271, %p272
    %p274 = scmp.ne.s32.totalorder %s263, %s266
    %p275 = scmp.eq.s32.totalorder %s22, 1
    %p276 = por %p274, %p275
    %p277 = scmp.ne.s32.totalorder %s266, %s267
    %p278 = scmp.eq.s32.totalorder %s22, 0
    %p279 = por %p277, %p278
    %p280 = scmp.ne.s32.totalorder %s266, %s267
    %p281 = scmp.eq.s32.totalorder %s23, 1
    %p282 = por %p280, %p281
    %p284 = scmp.ne.s32.totalorder %s267, %s283
    %p285 = scmp.eq.s32.totalorder %s23, 0
    %p286 = por %p284, %p285
    %p287 = scmp.le.s32.totalorder 1, %s17
    %p288 = scmp.lt.s32.totalorder %s17, 3
    %p289 = pnand %p287, %p288
    %p290 = pneg %p289
    // Predicated region
    $region9: #{streaming_conformer_forward.5} parent=5 // pred_check
      _
    $region10: #{streaming_conformer_forward.5} parent=5 // pred_check_branch
      %292 = sbr.rel (%p289) target = $region12
    $region11: #{streaming_conformer_forward.5} parent=5 // pred_region
      %s293 = ssub.s32 %s17, 1
      // Predicated region
      $region13: #{streaming_conformer_forward.5} parent=11 // pred_check
        %p294 = pneg %p64
      $region14: #{streaming_conformer_forward.5} parent=11 // pred_check_branch
        %296 = sbr.rel (%p294) target = $region16
      $region15: #{streaming_conformer_forward.5} parent=11 // pred_region
        _
      $region16: #{streaming_conformer_forward.5} parent=11 // pred_fallthru
        _
      // Predicated region
      $region17: #{streaming_conformer_forward.5} parent=11 // pred_check
        %p297 = pneg %p85
      $region18: #{streaming_conformer_forward.5} parent=11 // pred_check_branch
        %299 = sbr.rel (%p297) target = $region20
      $region19: #{streaming_conformer_forward.5} parent=11 // pred_region
        _
      $region20: #{streaming_conformer_forward.5} parent=11 // pred_fallthru
        _
      // Predicated region
      $region21: #{streaming_conformer_forward.5} parent=11 // pred_check
        %p300 = pneg %p106
      $region22: #{streaming_conformer_forward.5} parent=11 // pred_check_branch
        %302 = sbr.rel (%p300) target = $region24
      $region23: #{streaming_conformer_forward.5} parent=11 // pred_region
        _
      $region24: #{streaming_conformer_forward.5} parent=11 // pred_fallthru
        _
      // Predicated region
      $region25: #{streaming_conformer_forward.5} parent=11 // pred_check
        %p303 = pneg %p127
      $region26: #{streaming_conformer_forward.5} parent=11 // pred_check_branch
        %305 = sbr.rel (%p303) target = $region28
      $region27: #{streaming_conformer_forward.5} parent=11 // pred_region
        _
      $region28: #{streaming_conformer_forward.5} parent=11 // pred_fallthru
        _
      // Predicated region
      $region29: #{streaming_conformer_forward.5} parent=11 // pred_check
        %p306 = pneg %p148
      $region30: #{streaming_conformer_forward.5} parent=11 // pred_check_branch
        %308 = sbr.rel (%p306) target = $region32
      $region31: #{streaming_conformer_forward.5} parent=11 // pred_region
        _
      $region32: #{streaming_conformer_forward.5} parent=11 // pred_fallthru
        _
      // Predicated region
      $region33: #{streaming_conformer_forward.5} parent=11 // pred_check
        %p309 = pneg %p169
      $region34: #{streaming_conformer_forward.5} parent=11 // pred_check_branch
        %311 = sbr.rel (%p309) target = $region36
      $region35: #{streaming_conformer_forward.5} parent=11 // pred_region
        _
      $region36: #{streaming_conformer_forward.5} parent=11 // pred_fallthru
        _
      // Predicated region
      $region37: #{streaming_conformer_forward.5} parent=11 // pred_check
        %p312 = pneg %p190
      $region38: #{streaming_conformer_forward.5} parent=11 // pred_check_branch
        %314 = sbr.rel (%p312) target = $region40
      $region39: #{streaming_conformer_forward.5} parent=11 // pred_region
        _
      $region40: #{streaming_conformer_forward.5} parent=11 // pred_fallthru
        _
      // Predicated region
      $region41: #{streaming_conformer_forward.5} parent=11 // pred_check
        %p315 = pneg %p211
      $region42: #{streaming_conformer_forward.5} parent=11 // pred_check_branch
        %317 = sbr.rel (%p315) target = $region44
      $region43: #{streaming_conformer_forward.5} parent=11 // pred_region
        _
      $region44: #{streaming_conformer_forward.5} parent=11 // pred_fallthru
        _
      // Predicated region
      $region45: #{streaming_conformer_forward.5} parent=11 // pred_check
        %p318 = pneg %p232
      $region46: #{streaming_conformer_forward.5} parent=11 // pred_check_branch
        %320 = sbr.rel (%p318) target = $region48
      $region47: #{streaming_conformer_forward.5} parent=11 // pred_region
        _
      $region48: #{streaming_conformer_forward.5} parent=11 // pred_fallthru
        _
      // Predicated region
      $region49: #{streaming_conformer_forward.5} parent=11 // pred_check
        %p321 = pneg %p253
      $region50: #{streaming_conformer_forward.5} parent=11 // pred_check_branch
        %323 = sbr.rel (%p321) target = $region52
      $region51: #{streaming_conformer_forward.5} parent=11 // pred_region
        _
      $region52: #{streaming_conformer_forward.5} parent=11 // pred_fallthru
        _
    $region12: #{streaming_conformer_forward.5} parent=5 // pred_fallthru
      _
    %p324 = scmp.lt.s32.totalorder %s17, 2
    // Predicated region
    $region53: #{streaming_conformer_forward.5} parent=5 // pred_check
      %p325 = pneg %p324
    $region54: #{streaming_conformer_forward.5} parent=5 // pred_check_branch
      %327 = sbr.rel (%p325) target = $region56
    $region55: #{streaming_conformer_forward.5} parent=5 // pred_region
      // Predicated region
      $region57: #{streaming_conformer_forward.5} parent=55 // pred_check
        %p328 = pneg %p37
      $region58: #{streaming_conformer_forward.5} parent=55 // pred_check_branch
        %330 = sbr.rel (%p328) target = $region60
      $region59: #{streaming_conformer_forward.5} parent=55 // pred_region
        %p331 = scmp.lt.s32.totalorder %s17, 1
        %s332 = scalar_select %p331, %s17, 1
        %s333 = smul.addr %s332, 2
        %s334 = smul.addr %s333, 4
        %s335 = scalar_lea.vmem %s0, %s334
      $region60: #{streaming_conformer_forward.5} parent=55 // pred_fallthru
        _
    $region56: #{streaming_conformer_forward.5} parent=5 // pred_fallthru
      _
    %p336 = scmp.le.s32.totalorder 1, %s17
    %p337 = scmp.lt.s32.totalorder %s17, 3
    %p338 = pnand %p336, %p337
    %p339 = pneg %p338
    // Predicated region
    $region61: #{streaming_conformer_forward.5} parent=5 // pred_check
      _
    $region62: #{streaming_conformer_forward.5} parent=5 // pred_check_branch
      %341 = sbr.rel (%p338) target = $region64
    $region63: #{streaming_conformer_forward.5} parent=5 // pred_region
      %s342 = ssub.s32 %s17, 1
      %p343 = scmp.lt.s32.totalorder %s22, 1
      %s344 = scalar_select %p343, %s22, 1
      %s345 = smul.addr %s344, 2
      %s346 = smul.addr %s345, 4
      %s347 = scalar_lea.vmem %s0, %s346
      %p348 = pneg %p43
      %p349 = pneg %p40
      %p350 = pneg %p64
      %p351 = pneg %p61
      %p352 = pneg %p85
      %p353 = pneg %p82
      %p354 = pneg %p106
      %p355 = pneg %p103
      %p356 = pneg %p127
      %p357 = pneg %p124
      %p358 = pneg %p148
      %p359 = pneg %p145
      %p360 = pneg %p169
      %p361 = pneg %p166
      %p362 = pneg %p190
      %p363 = pneg %p187
      %p364 = pneg %p211
      %p365 = pneg %p208
      %p366 = pneg %p232
      %p367 = pneg %p229
      %p368 = pneg %p253
      %p369 = pneg %p250
      %p370 = pneg %p279
      %p371 = pneg %p276
      %p372 = scmp.lt.s32.totalorder %s22, 1
      %s373 = scalar_select %p372, %s22, 1
      %s374 = smul.addr %s373, 2
      %s375 = smul.addr %s374, 4
      %s376 = scalar_lea.vmem %s11, %s375
      %p377 = scmp.lt.s32.totalorder %s22, 1
      %s378 = scalar_select %p377, %s22, 1
      %s379 = smul.addr %s378, 2
      %s380 = smul.addr %s379, 4
      %s381 = scalar_lea.vmem %s0, %s380
      %p382 = scmp.lt.s32.totalorder %s22, 1
      %s383 = scalar_select %p382, %s22, 1
      %s384 = smul.addr %s383, 2
      %s385 = smul.addr %s384, 4
      %s386 = scalar_lea.vmem %s11, %s385
      %v388 = vld [vmem:[%s381] sm:$0xf]
      %v389 = vld [vmem:[%s381 + $0x4] sm:$0xf]
      %v390 = vunpack.c.l.bf16 %v388
      %v391 = vunpack.c.l.bf16 %v389
      %v392 = vld [vmem:[%s10] ss:$0 sm:$0xff]
      %v393 = vld [vmem:[%s10 + $0x1] ss:$0 sm:$0xff]
      %vm394 = vcmask 523264
      %v395 = vsel %vm394, %v390, 0.0
      %396 = vadd.xlane.f32.xlu0 %v395
      %v397 = vpop.xlane.xlu0 %396
      %v398 = vsel %vm394, %v391, 0.0
      %399 = vadd.xlane.f32.xlu0 %v398
      %v400 = vpop.xlane.xlu0 %399
      %v401 = vrcp.pop 64.0
      %v402 = vmul.f32 %v397, %v401
      %v403 = vmul.f32 %v400, %v401
      %v404 = vsub.f32 %v390, %v402
      %v405 = vsub.f32 %v391, %v403
      %v406 = vmul.f32 %v404, %v404
      %v407 = vmul.f32 %v405, %v405
      %v408 = vsel %vm394, %v406, 0.0
      %409 = vadd.xlane.f32.xlu0 %v408
      %v410 = vpop.xlane.xlu0 %409
      %v411 = vsel %vm394, %v407, 0.0
      %412 = vadd.xlane.f32.xlu0 %v411
      %v413 = vpop.xlane.xlu0 %412
      %v414 = vmul.f32 %v410, %v401
      %v415 = vmul.f32 %v413, %v401
      %v416 = vadd.f32 %v414, 1e-05
      %v417 = vadd.f32 %v415, 1e-05
      %v418 = vrsqrt.pop %v416
      %v419 = vrsqrt.pop %v417
      %v420 = vmul.f32 %v404, %v418
      %v421 = vmul.f32 %v405, %v419
      %v422 = vmul.f32 %v420, %v392
      %v423 = vmul.f32 %v421, %v392
      %v424 = vadd.f32 %v422, %v393
      %v425 = vadd.f32 %v423, %v393
      %v426 = vld [vmem:[%s10 + $0x2] ss:$0 sm:$0xff]
      %v427 = vpack.c.bf16 %v425, %v424
      %v428 = vld [vmem:[%s1] sm:$0xf]
      %v429 = vld [vmem:[%s1 + $0x4] sm:$0xf]
      %v430 = vld [vmem:[%s1 + $0x8] sm:$0xf]
      %v431 = vld [vmem:[%s1 + $0xc] sm:$0xf]
      %v432 = vld [vmem:[%s1 + $0x10] sm:$0xf]
      %v433 = vld [vmem:[%s1 + $0x14] sm:$0xf]
      %v434 = vld [vmem:[%s1 + $0x18] sm:$0xf]
      %v435 = vld [vmem:[%s1 + $0x1c] sm:$0xf]
      %v444 = vunpack.c.l.b16 %v428
      %v445 = vunpack.c.l.b16 %v429
      %v446 = vunpack.c.l.b16 %v430
      %v447 = vunpack.c.l.b16 %v431
      %v448 = vunpack.c.l.b16 %v432
      %v449 = vunpack.c.l.b16 %v433
      %v450 = vunpack.c.l.b16 %v434
      %v451 = vunpack.c.l.b16 %v435
      %v452 = vpack.c.b16 %v445, %v444
      %v453 = vpack.c.b16 %v447, %v446
      %v454 = vpack.c.b16 %v449, %v448
      %v455 = vpack.c.b16 %v451, %v450
      %v461 = vsel %vm394, %v427, 0
      %463 = vmatprep.subr.bf16.mxu0 0
      %464 = vmatpush1.bf16.msra.mxu0 %v452
      %465 = vmatprep.subr.bf16.mxu0 0
      %466 = vmatpush1.bf16.msra.mxu0 %v453
      %467 = vmatprep.subr.bf16.mxu0 0
      %468 = vmatpush1.bf16.msra.mxu0 %v454
      %469 = vmatprep.subr.bf16.mxu0 0
      %470 = vmatpush1.bf16.msra.mxu0 %v455
      %471 = vmatprep.subr.bf16.mxu0 0
      %472 = vmatpush1.bf16.msra.mxu0 0
      %473 = vmatprep.subr.bf16.mxu0 0
      %474 = vmatpush1.bf16.msra.mxu0 0
      %475 = vmatprep.subr.bf16.mxu0 0
      %476 = vmatpush1.bf16.msra.mxu0 0
      %477 = vmatprep.subr.bf16.mxu0 0
      %478 = vmatpush1.bf16.msra.mxu0 0
      %479 = vmatprep.subr.bf16.mxu0 0
      %480 = vmatpush1.bf16.msra.mxu0 0
      %481 = vmatprep.subr.bf16.mxu0 0
      %482 = vmatpush1.bf16.msra.mxu0 0
      %483 = vmatprep.subr.bf16.mxu0 0
      %484 = vmatpush1.bf16.msra.mxu0 0
      %485 = vmatprep.subr.bf16.mxu0 0
      %486 = vmatpush1.bf16.msra.mxu0 0
      %487 = vmatprep.subr.bf16.mxu0 0
      %488 = vmatpush1.bf16.msra.mxu0 0
      %489 = vmatprep.subr.bf16.mxu0 0
      %490 = vmatpush1.bf16.msra.mxu0 0
      %491 = vmatprep.subr.bf16.mxu0 0
      %492 = vmatpush1.bf16.msra.mxu0 0
      %493 = vmatprep.subr.bf16.mxu0 0
      %494 = vmatpush1.bf16.msra.mxu0 0
      %495 = vmatprep.mubr.bf16.mxu0 0
      %496 = vmatmul.mubr.bf16.gmra.mrb[0].mxu0 %v461
      %v497 = vpop.f32.mrb[0].mxu0
      %v498 = vadd.f32 %v426, %v497
      %v499 = vpop.f32.mrb[0].mxu0
      %v500 = vpop.f32.mrb[0].mxu0
      %v501 = vadd.f32 %v426, %v500
      %v502 = vpop.f32.mrb[0].mxu0
      %503 = vdwg.mxu0
      %v504 = vxor.u32 %v498, 2147483648
      %v505 = vxor.u32 %v501, 2147483648
      %v506 = vmul.f32 %v504, 1.442695
      %v507 = vpow.pop %v506
      %v508 = vmul.f32 %v505, 1.442695
      %v509 = vpow.pop %v508
      %v510 = vadd.f32 %v507, 1.0
      %v511 = vadd.f32 %v509, 1.0
      %v512 = vrcp.pop %v510
      %v513 = vmul.f32 1.0, %v512
      %v514 = vrcp.pop %v511
      %v515 = vmul.f32 1.0, %v514
      %v516 = vmul.f32 %v498, %v513
      %v517 = vmul.f32 %v501, %v515
      %v518 = vld [vmem:[%s10 + $0x3] ss:$0 sm:$0xff]
      %v519 = vpack.c.bf16 %v517, %v516
      %v520 = vld [vmem:[%s2] sm:$0xf]
      %v521 = vld [vmem:[%s2 + $0x4] sm:$0xf]
      %v522 = vld [vmem:[%s2 + $0x8] sm:$0xf]
      %v523 = vld [vmem:[%s2 + $0xc] sm:$0xf]
      %v524 = vld [vmem:[%s2 + $0x10] sm:$0xf]
      %v525 = vld [vmem:[%s2 + $0x14] sm:$0xf]
      %v526 = vld [vmem:[%s2 + $0x18] sm:$0xf]
      %v527 = vld [vmem:[%s2 + $0x1c] sm:$0xf]
      %v528 = vld [vmem:[%s2 + $0x20] sm:$0xf]
      %v529 = vld [vmem:[%s2 + $0x24] sm:$0xf]
      %v530 = vld [vmem:[%s2 + $0x28] sm:$0xf]
      %v531 = vld [vmem:[%s2 + $0x2c] sm:$0xf]
      %v532 = vld [vmem:[%s2 + $0x30] sm:$0xf]
      %v533 = vld [vmem:[%s2 + $0x34] sm:$0xf]
      %v534 = vld [vmem:[%s2 + $0x38] sm:$0xf]
      %v535 = vld [vmem:[%s2 + $0x3c] sm:$0xf]
      %v552 = vunpack.c.l.b16 %v520
      %v553 = vunpack.c.l.b16 %v521
      %v554 = vunpack.c.l.b16 %v522
      %v555 = vunpack.c.l.b16 %v523
      %v556 = vunpack.c.l.b16 %v524
      %v557 = vunpack.c.l.b16 %v525
      %v558 = vunpack.c.l.b16 %v526
      %v559 = vunpack.c.l.b16 %v527
      %v560 = vunpack.c.l.b16 %v528
      %v561 = vunpack.c.l.b16 %v529
      %v562 = vunpack.c.l.b16 %v530
      %v563 = vunpack.c.l.b16 %v531
      %v564 = vunpack.c.l.b16 %v532
      %v565 = vunpack.c.l.b16 %v533
      %v566 = vunpack.c.l.b16 %v534
      %v567 = vunpack.c.l.b16 %v535
      %v568 = vpack.c.b16 %v553, %v552
      %v569 = vpack.c.b16 %v555, %v554
      %v570 = vpack.c.b16 %v557, %v556
      %v571 = vpack.c.b16 %v559, %v558
      %v572 = vpack.c.b16 %v561, %v560
      %v573 = vpack.c.b16 %v563, %v562
      %v574 = vpack.c.b16 %v565, %v564
      %v575 = vpack.c.b16 %v567, %v566
      %584 = vmatprep.subr.bf16.mxu0 0
      %585 = vmatpush1.bf16.msra.mxu0 %v568
      %586 = vmatprep.subr.bf16.mxu0 0
      %587 = vmatpush1.bf16.msra.mxu0 %v569
      %588 = vmatprep.subr.bf16.mxu0 0
      %589 = vmatpush1.bf16.msra.mxu0 %v570
      %590 = vmatprep.subr.bf16.mxu0 0
      %591 = vmatpush1.bf16.msra.mxu0 %v571
      %592 = vmatprep.subr.bf16.mxu0 0
      %593 = vmatpush1.bf16.msra.mxu0 %v572
      %594 = vmatprep.subr.bf16.mxu0 0
      %595 = vmatpush1.bf16.msra.mxu0 %v573
      %596 = vmatprep.subr.bf16.mxu0 0
      %597 = vmatpush1.bf16.msra.mxu0 %v574
      %598 = vmatprep.subr.bf16.mxu0 0
      %599 = vmatpush1.bf16.msra.mxu0 %v575
      %600 = vmatprep.subr.bf16.mxu0 0
      %601 = vmatpush1.bf16.msra.mxu0 0
      %602 = vmatprep.subr.bf16.mxu0 0
      %603 = vmatpush1.bf16.msra.mxu0 0
      %604 = vmatprep.subr.bf16.mxu0 0
      %605 = vmatpush1.bf16.msra.mxu0 0
      %606 = vmatprep.subr.bf16.mxu0 0
      %607 = vmatpush1.bf16.msra.mxu0 0
      %608 = vmatprep.subr.bf16.mxu0 0
      %609 = vmatpush1.bf16.msra.mxu0 0
      %610 = vmatprep.subr.bf16.mxu0 0
      %611 = vmatpush1.bf16.msra.mxu0 0
      %612 = vmatprep.subr.bf16.mxu0 0
      %613 = vmatpush1.bf16.msra.mxu0 0
      %614 = vmatprep.subr.bf16.mxu0 0
      %615 = vmatpush1.bf16.msra.mxu0 0
      %616 = vmatprep.mubr.bf16.mxu0 0
      %617 = vmatmul.mubr.bf16.gmra.mrb[0].mxu0 %v519
      %v618 = vpop.f32.mrb[0].mxu0
      %v619 = vadd.f32 %v518, %v618
      %v620 = vpop.f32.mrb[0].mxu0
      %v621 = vpop.f32.mrb[0].mxu0
      %v622 = vadd.f32 %v518, %v621
      %v623 = vpop.f32.mrb[0].mxu0
      %624 = vdwg.mxu0
      %v625 = vmul.f32 %v619, 0.5
      %v626 = vmul.f32 %v622, 0.5
      %v627 = vadd.f32 %v390, %v625
      %v628 = vadd.f32 %v391, %v626
      %v629 = vld [vmem:[%s10 + $0x4] ss:$0 sm:$0xff]
      %v630 = vld [vmem:[%s10 + $0x5] ss:$0 sm:$0xff]
      %v631 = vsel %vm394, %v627, 0.0
      %632 = vadd.xlane.f32.xlu0 %v631
      %v633 = vpop.xlane.xlu0 %632
      %v634 = vsel %vm394, %v628, 0.0
      %635 = vadd.xlane.f32.xlu0 %v634
      %v636 = vpop.xlane.xlu0 %635
      %v637 = vmul.f32 %v633, %v401
      %v638 = vmul.f32 %v636, %v401
      %v639 = vsub.f32 %v627, %v637
      %v640 = vsub.f32 %v628, %v638
      %v641 = vmul.f32 %v639, %v639
      %v642 = vmul.f32 %v640, %v640
      %v643 = vsel %vm394, %v641, 0.0
      %644 = vadd.xlane.f32.xlu0 %v643
      %v645 = vpop.xlane.xlu0 %644
      %v646 = vsel %vm394, %v642, 0.0
      %647 = vadd.xlane.f32.xlu0 %v646
      %v648 = vpop.xlane.xlu0 %647
      %v649 = vmul.f32 %v645, %v401
      %v650 = vmul.f32 %v648, %v401
      %v651 = vadd.f32 %v649, 1e-05
      %v652 = vadd.f32 %v650, 1e-05
      %v653 = vrsqrt.pop %v651
      %v654 = vrsqrt.pop %v652
      %v655 = vmul.f32 %v639, %v653
      %v656 = vmul.f32 %v640, %v654
      %v657 = vmul.f32 %v655, %v629
      %v658 = vmul.f32 %v656, %v629
      %v659 = vadd.f32 %v657, %v630
      %v660 = vadd.f32 %v658, %v630
      %s661 = scalar_lea.vmem %s10, 6
      %v662 = vld [vmem:[%s661] ss:$8 sm:$0x3]
      %v663 = vpack.c.bf16 %v660, %v659
      %v664 = vld [vmem:[%s3] sm:$0xff]
      %v665 = vld [vmem:[%s3 + $0x8] sm:$0xff]
      %v666 = vld [vmem:[%s3 + $0x10] sm:$0xff]
      %v667 = vld [vmem:[%s3 + $0x18] sm:$0xff]
      %v668 = vld [vmem:[%s3 + $0x20] sm:$0xff]
      %v669 = vld [vmem:[%s3 + $0x28] sm:$0xff]
      %v670 = vld [vmem:[%s3 + $0x30] sm:$0xff]
      %v671 = vld [vmem:[%s3 + $0x38] sm:$0xff]
      %v673 = vlaneseq
      %v674 = vshrl.u32 %v673, 7
      %v675 = vsub.s32 0, %v674
      %v676 = vrot.slane %v662, %v675
      %v677 = vlaneseq
      %v678 = vshrl.u32 %v677, 7
      %v679 = vsub.s32 1, %v678
      %v680 = vrot.slane %v662, %v679
      %v691 = vunpack.c.l.b16 %v664
      %v692 = vunpack.c.h.b16 %v664
      %v693 = vunpack.c.l.b16 %v665
      %v694 = vunpack.c.h.b16 %v665
      %v695 = vunpack.c.l.b16 %v666
      %v696 = vunpack.c.h.b16 %v666
      %v697 = vunpack.c.l.b16 %v667
      %v698 = vunpack.c.h.b16 %v667
      %v699 = vunpack.c.l.b16 %v668
      %v700 = vunpack.c.h.b16 %v668
      %v701 = vunpack.c.l.b16 %v669
      %v702 = vunpack.c.h.b16 %v669
      %v703 = vunpack.c.l.b16 %v670
      %v704 = vunpack.c.h.b16 %v670
      %v705 = vunpack.c.l.b16 %v671
      %v706 = vunpack.c.h.b16 %v671
      %v707 = vpack.c.b16 %v693, %v691
      %v708 = vpack.c.b16 %v694, %v692
      %v709 = vpack.c.b16 %v697, %v695
      %v710 = vpack.c.b16 %v698, %v696
      %v711 = vpack.c.b16 %v701, %v699
      %v712 = vpack.c.b16 %v702, %v700
      %v713 = vpack.c.b16 %v705, %v703
      %v714 = vpack.c.b16 %v706, %v704
      %v724 = vsel %vm394, %v663, 0
      %726 = vmatprep.subr.bf16.mxu0 %v708
      %727 = vmatpush1.bf16.msra.mxu0 %v707
      %728 = vmatprep.subr.bf16.mxu0 %v710
      %729 = vmatpush1.bf16.msra.mxu0 %v709
      %730 = vmatprep.subr.bf16.mxu0 %v712
      %731 = vmatpush1.bf16.msra.mxu0 %v711
      %732 = vmatprep.subr.bf16.mxu0 %v714
      %733 = vmatpush1.bf16.msra.mxu0 %v713
      %734 = vmatprep.subr.bf16.mxu0 0
      %735 = vmatpush1.bf16.msra.mxu0 0
      %736 = vmatprep.subr.bf16.mxu0 0
      %737 = vmatpush1.bf16.msra.mxu0 0
      %738 = vmatprep.subr.bf16.mxu0 0
      %739 = vmatpush1.bf16.msra.mxu0 0
      %740 = vmatprep.subr.bf16.mxu0 0
      %741 = vmatpush1.bf16.msra.mxu0 0
      %742 = vmatprep.subr.bf16.mxu0 0
      %743 = vmatpush1.bf16.msra.mxu0 0
      %744 = vmatprep.subr.bf16.mxu0 0
      %745 = vmatpush1.bf16.msra.mxu0 0
      %746 = vmatprep.subr.bf16.mxu0 0
      %747 = vmatpush1.bf16.msra.mxu0 0
      %748 = vmatprep.subr.bf16.mxu0 0
      %749 = vmatpush1.bf16.msra.mxu0 0
      %750 = vmatprep.subr.bf16.mxu0 0
      %751 = vmatpush1.bf16.msra.mxu0 0
      %752 = vmatprep.subr.bf16.mxu0 0
      %753 = vmatpush1.bf16.msra.mxu0 0
      %754 = vmatprep.subr.bf16.mxu0 0
      %755 = vmatpush1.bf16.msra.mxu0 0
      %756 = vmatprep.subr.bf16.mxu0 0
      %757 = vmatpush1.bf16.msra.mxu0 0
      %758 = vmatprep.mubr.bf16.mxu0 0
      %759 = vmatmul.mubr.bf16.gmra.mrb[0].mxu0 %v724
      %v760 = vpop.f32.mrb[0].mxu0
      %v761 = vadd.f32 %v676, %v760
      %v762 = vpop.f32.mrb[0].mxu0
      %v763 = vadd.f32 %v680, %v762
      %v764 = vpop.f32.mrb[0].mxu0
      %v765 = vadd.f32 %v676, %v764
      %v766 = vpop.f32.mrb[0].mxu0
      %v767 = vadd.f32 %v680, %v766
      %768 = vdwg.mxu0
      %v769 = vpack.c.bf16 %v765, %v761
      %772 = vrot.lane.b32.xlu0 %v761, 64
      %v773 = vpop.permute.xlu0 %772
      %774 = vrot.lane.b32.xlu0 %v765, 64
      %v775 = vpop.permute.xlu0 %774
      %778 = vxpose.xlu0.b32.start [1/16] %v773, 128
      %779 = vxpose.xlu0.b32.cont [2/16] %v775, 128
      %780 = vxpose.xlu0.b32.cont [3/16] 0.0, 128
      %781 = vxpose.xlu0.b32.cont [4/16] 0.0, 128
      %782 = vxpose.xlu0.b32.cont [5/16] 0.0, 128
      %783 = vxpose.xlu0.b32.cont [6/16] 0.0, 128
      %784 = vxpose.xlu0.b32.cont [7/16] 0.0, 128
      %785 = vxpose.xlu0.b32.cont [8/16] 0.0, 128
      %786 = vxpose.xlu0.b32.cont [9/16] 0.0, 128
      %787 = vxpose.xlu0.b32.cont [10/16] 0.0, 128
      %788 = vxpose.xlu0.b32.cont [11/16] 0.0, 128
      %789 = vxpose.xlu0.b32.cont [12/16] 0.0, 128
      %790 = vxpose.xlu0.b32.cont [13/16] 0.0, 128
      %791 = vxpose.xlu0.b32.cont [14/16] 0.0, 128
      %792 = vxpose.xlu0.b32.cont [15/16] 0.0, 128
      %793 = vxpose.xlu0.b32.end [16/16] 0.0, 128
      %v794 = vpop.trf.xlu0
      %v795 = vpop.trf.xlu0
      %v796 = vpop.trf.xlu0
      %v797 = vpop.trf.xlu0
      %v798 = vpop.trf.xlu0
      %v799 = vpop.trf.xlu0
      %v800 = vpop.trf.xlu0
      %v801 = vpop.trf.xlu0
      %v802 = vpop.trf.xlu0
      %v803 = vpop.trf.xlu0
      %v804 = vpop.trf.xlu0
      %v805 = vpop.trf.xlu0
      %v806 = vpop.trf.xlu0
      %v807 = vpop.trf.xlu0
      %v808 = vpop.trf.xlu0
      %v809 = vpop.trf.xlu0
      %v810 = vpack.c.bf16 %v795, %v794
      %v811 = vpack.c.bf16 %v797, %v796
      %v812 = vpack.c.bf16 %v799, %v798
      %v813 = vpack.c.bf16 %v801, %v800
      %v814 = vpack.c.bf16 %v767, %v763
      %vm815 = vcmask 130048
      %v817 = vsel %vm815, %v769, 0
      %819 = vmatprep.subr.bf16.mxu0 0
      %820 = vmatpush1.bf16.msra.mxu0 %v810
      %821 = vmatprep.subr.bf16.mxu0 0
      %822 = vmatpush1.bf16.msra.mxu0 0
      %823 = vmatprep.subr.bf16.mxu0 0
      %824 = vmatpush1.bf16.msra.mxu0 0
      %825 = vmatprep.subr.bf16.mxu0 0
      %826 = vmatpush1.bf16.msra.mxu0 0
      %827 = vmatprep.subr.bf16.mxu0 0
      %828 = vmatpush1.bf16.msra.mxu0 0
      %829 = vmatprep.subr.bf16.mxu0 0
      %830 = vmatpush1.bf16.msra.mxu0 0
      %831 = vmatprep.subr.bf16.mxu0 0
      %832 = vmatpush1.bf16.msra.mxu0 0
      %833 = vmatprep.subr.bf16.mxu0 0
      %834 = vmatpush1.bf16.msra.mxu0 0
      %835 = vmatprep.subr.bf16.mxu0 0
      %836 = vmatpush1.bf16.msra.mxu0 0
      %837 = vmatprep.subr.bf16.mxu0 0
      %838 = vmatpush1.bf16.msra.mxu0 0
      %839 = vmatprep.subr.bf16.mxu0 0
      %840 = vmatpush1.bf16.msra.mxu0 0
      %841 = vmatprep.subr.bf16.mxu0 0
      %842 = vmatpush1.bf16.msra.mxu0 0
      %843 = vmatprep.subr.bf16.mxu0 0
      %844 = vmatpush1.bf16.msra.mxu0 0
      %845 = vmatprep.subr.bf16.mxu0 0
      %846 = vmatpush1.bf16.msra.mxu0 0
      %847 = vmatprep.subr.bf16.mxu0 0
      %848 = vmatpush1.bf16.msra.mxu0 0
      %849 = vmatprep.subr.bf16.mxu0 0
      %850 = vmatpush1.bf16.msra.mxu0 0
      %851 = vmatprep.mubr.bf16.mxu0 0
      %852 = vmatmul.mubr.bf16.gmra.mrb[0].mxu0 %v817
      %v853 = vpop.f32.mrb[0].mxu0
      %v854 = vadd.f32 0.0, %v853
      %v855 = vpop.f32.mrb[0].mxu0
      %v856 = vpop.f32.mrb[0].mxu0
      %v857 = vadd.f32 0.0, %v856
      %v858 = vpop.f32.mrb[0].mxu0
      %859 = vdwg.mxu0
      %v860 = vmul.f32 %v854, 0.25
      %v861 = vmul.f32 %v857, 0.25
      %v862 = vsel %vm815, %v860, -inf
      %863 = vmax.xlane.f32.xlu0 %v862
      %v864 = vpop.xlane.xlu0 %863
      %v865 = vsel %vm815, %v861, -inf
      %866 = vmax.xlane.f32.xlu0 %v865
      %v867 = vpop.xlane.xlu0 %866
      %v868 = vsub.f32 %v860, %v864
      %v869 = vsub.f32 %v861, %v867
      %v870 = vmul.f32 %v868, 1.442695
      %v871 = vpow.pop %v870
      %v872 = vmul.f32 %v869, 1.442695
      %v873 = vpow.pop %v872
      %v874 = vsel %vm815, %v871, 0.0
      %875 = vadd.xlane.f32.xlu0 %v874
      %v876 = vpop.xlane.xlu0 %875
      %v877 = vsel %vm815, %v873, 0.0
      %878 = vadd.xlane.f32.xlu0 %v877
      %v879 = vpop.xlane.xlu0 %878
      %v880 = vrcp.pop %v876
      %v881 = vrcp.pop %v879
      %v882 = vmul.f32 %v871, %v880
      %v883 = vmul.f32 %v873, %v881
      %v884 = vpack.c.bf16 %v883, %v882
      %v886 = vsel %vm815, %v884, 0
      %888 = vmatprep.subr.bf16.mxu0 0
      %889 = vmatpush1.bf16.msra.mxu0 %v814
      %890 = vmatprep.subr.bf16.mxu0 0
      %891 = vmatpush1.bf16.msra.mxu0 0
      %892 = vmatprep.subr.bf16.mxu0 0
      %893 = vmatpush1.bf16.msra.mxu0 0
      %894 = vmatprep.subr.bf16.mxu0 0
      %895 = vmatpush1.bf16.msra.mxu0 0
      %896 = vmatprep.subr.bf16.mxu0 0
      %897 = vmatpush1.bf16.msra.mxu0 0
      %898 = vmatprep.subr.bf16.mxu0 0
      %899 = vmatpush1.bf16.msra.mxu0 0
      %900 = vmatprep.subr.bf16.mxu0 0
      %901 = vmatpush1.bf16.msra.mxu0 0
      %902 = vmatprep.subr.bf16.mxu0 0
      %903 = vmatpush1.bf16.msra.mxu0 0
      %904 = vmatprep.subr.bf16.mxu0 0
      %905 = vmatpush1.bf16.msra.mxu0 0
      %906 = vmatprep.subr.bf16.mxu0 0
      %907 = vmatpush1.bf16.msra.mxu0 0
      %908 = vmatprep.subr.bf16.mxu0 0
      %909 = vmatpush1.bf16.msra.mxu0 0
      %910 = vmatprep.subr.bf16.mxu0 0
      %911 = vmatpush1.bf16.msra.mxu0 0
      %912 = vmatprep.subr.bf16.mxu0 0
      %913 = vmatpush1.bf16.msra.mxu0 0
      %914 = vmatprep.subr.bf16.mxu0 0
      %915 = vmatpush1.bf16.msra.mxu0 0
      %916 = vmatprep.subr.bf16.mxu0 0
      %917 = vmatpush1.bf16.msra.mxu0 0
      %918 = vmatprep.subr.bf16.mxu0 0
      %919 = vmatpush1.bf16.msra.mxu0 0
      %920 = vmatprep.mubr.bf16.mxu0 0
      %921 = vmatmul.mubr.bf16.gmra.mrb[0].mxu0 %v886
      %v922 = vpop.f32.mrb[0].mxu0
      %v923 = vadd.f32 0.0, %v922
      %v924 = vpop.f32.mrb[0].mxu0
      %v925 = vpop.f32.mrb[0].mxu0
      %v926 = vadd.f32 0.0, %v925
      %v927 = vpop.f32.mrb[0].mxu0
      %928 = vdwg.mxu0
      %930 = vrot.lane.b32.xlu0 %v769, 112
      %v931 = vpop.permute.xlu0 %930
      %v933 = vsel %vm815, %v931, 0
      %935 = vmatprep.subr.bf16.mxu0 0
      %936 = vmatpush1.bf16.msra.mxu0 %v811
      %937 = vmatprep.subr.bf16.mxu0 0
      %938 = vmatpush1.bf16.msra.mxu0 0
      %939 = vmatprep.subr.bf16.mxu0 0
      %940 = vmatpush1.bf16.msra.mxu0 0
      %941 = vmatprep.subr.bf16.mxu0 0
      %942 = vmatpush1.bf16.msra.mxu0 0
      %943 = vmatprep.subr.bf16.mxu0 0
      %944 = vmatpush1.bf16.msra.mxu0 0
      %945 = vmatprep.subr.bf16.mxu0 0
      %946 = vmatpush1.bf16.msra.mxu0 0
      %947 = vmatprep.subr.bf16.mxu0 0
      %948 = vmatpush1.bf16.msra.mxu0 0
      %949 = vmatprep.subr.bf16.mxu0 0
      %950 = vmatpush1.bf16.msra.mxu0 0
      %951 = vmatprep.subr.bf16.mxu0 0
      %952 = vmatpush1.bf16.msra.mxu0 0
      %953 = vmatprep.subr.bf16.mxu0 0
      %954 = vmatpush1.bf16.msra.mxu0 0
      %955 = vmatprep.subr.bf16.mxu0 0
      %956 = vmatpush1.bf16.msra.mxu0 0
      %957 = vmatprep.subr.bf16.mxu0 0
      %958 = vmatpush1.bf16.msra.mxu0 0
      %959 = vmatprep.subr.bf16.mxu0 0
      %960 = vmatpush1.bf16.msra.mxu0 0
      %961 = vmatprep.subr.bf16.mxu0 0
      %962 = vmatpush1.bf16.msra.mxu0 0
      %963 = vmatprep.subr.bf16.mxu0 0
      %964 = vmatpush1.bf16.msra.mxu0 0
      %965 = vmatprep.subr.bf16.mxu0 0
      %966 = vmatpush1.bf16.msra.mxu0 0
      %967 = vmatprep.mubr.bf16.mxu0 0
      %968 = vmatmul.mubr.bf16.gmra.mrb[0].mxu0 %v933
      %v969 = vpop.f32.mrb[0].mxu0
      %v970 = vadd.f32 0.0, %v969
      %v971 = vpop.f32.mrb[0].mxu0
      %v972 = vpop.f32.mrb[0].mxu0
      %v973 = vadd.f32 0.0, %v972
      %v974 = vpop.f32.mrb[0].mxu0
      %975 = vdwg.mxu0
      %v976 = vmul.f32 %v970, 0.25
      %v977 = vmul.f32 %v973, 0.25
      %v978 = vsel %vm815, %v976, -inf
      %979 = vmax.xlane.f32.xlu0 %v978
      %v980 = vpop.xlane.xlu0 %979
      %v981 = vsel %vm815, %v977, -inf
      %982 = vmax.xlane.f32.xlu0 %v981
      %v983 = vpop.xlane.xlu0 %982
      %v984 = vsub.f32 %v976, %v980
      %v985 = vsub.f32 %v977, %v983
      %v986 = vmul.f32 %v984, 1.442695
      %v987 = vpow.pop %v986
      %v988 = vmul.f32 %v985, 1.442695
      %v989 = vpow.pop %v988
      %v990 = vsel %vm815, %v987, 0.0
      %991 = vadd.xlane.f32.xlu0 %v990
      %v992 = vpop.xlane.xlu0 %991
      %v993 = vsel %vm815, %v989, 0.0
      %994 = vadd.xlane.f32.xlu0 %v993
      %v995 = vpop.xlane.xlu0 %994
      %v996 = vrcp.pop %v992
      %v997 = vrcp.pop %v995
      %v998 = vmul.f32 %v987, %v996
      %v999 = vmul.f32 %v989, %v997
      %v1000 = vpack.c.bf16 %v999, %v998
      %1002 = vrot.lane.b32.xlu0 %v814, 112
      %v1003 = vpop.permute.xlu0 %1002
      %v1006 = vsel %vm815, %v1000, 0
      %1008 = vmatprep.subr.bf16.mxu0 0
      %1009 = vmatpush1.bf16.msra.mxu0 %v1003
      %1010 = vmatprep.subr.bf16.mxu0 0
      %1011 = vmatpush1.bf16.msra.mxu0 0
      %1012 = vmatprep.subr.bf16.mxu0 0
      %1013 = vmatpush1.bf16.msra.mxu0 0
      %1014 = vmatprep.subr.bf16.mxu0 0
      %1015 = vmatpush1.bf16.msra.mxu0 0
      %1016 = vmatprep.subr.bf16.mxu0 0
      %1017 = vmatpush1.bf16.msra.mxu0 0
      %1018 = vmatprep.subr.bf16.mxu0 0
      %1019 = vmatpush1.bf16.msra.mxu0 0
      %1020 = vmatprep.subr.bf16.mxu0 0
      %1021 = vmatpush1.bf16.msra.mxu0 0
      %1022 = vmatprep.subr.bf16.mxu0 0
      %1023 = vmatpush1.bf16.msra.mxu0 0
      %1024 = vmatprep.subr.bf16.mxu0 0
      %1025 = vmatpush1.bf16.msra.mxu0 0
      %1026 = vmatprep.subr.bf16.mxu0 0
      %1027 = vmatpush1.bf16.msra.mxu0 0
      %1028 = vmatprep.subr.bf16.mxu0 0
      %1029 = vmatpush1.bf16.msra.mxu0 0
      %1030 = vmatprep.subr.bf16.mxu0 0
      %1031 = vmatpush1.bf16.msra.mxu0 0
      %1032 = vmatprep.subr.bf16.mxu0 0
      %1033 = vmatpush1.bf16.msra.mxu0 0
      %1034 = vmatprep.subr.bf16.mxu0 0
      %1035 = vmatpush1.bf16.msra.mxu0 0
      %1036 = vmatprep.subr.bf16.mxu0 0
      %1037 = vmatpush1.bf16.msra.mxu0 0
      %1038 = vmatprep.subr.bf16.mxu0 0
      %1039 = vmatpush1.bf16.msra.mxu0 0
      %1040 = vmatprep.mubr.bf16.mxu0 0
      %1041 = vmatmul.mubr.bf16.gmra.mrb[0].mxu0 %v1006
      %v1042 = vpop.f32.mrb[0].mxu0
      %v1043 = vadd.f32 0.0, %v1042
      %v1044 = vpop.f32.mrb[0].mxu0
      %v1045 = vpop.f32.mrb[0].mxu0
      %v1046 = vadd.f32 0.0, %v1045
      %v1047 = vpop.f32.mrb[0].mxu0
      %1048 = vdwg.mxu0
      %1049 = vrot.lane.b32.xlu0 %v769, 96
      %v1050 = vpop.permute.xlu0 %1049
      %v1052 = vsel %vm815, %v1050, 0
      %1054 = vmatprep.subr.bf16.mxu0 0
      %1055 = vmatpush1.bf16.msra.mxu0 %v812
      %1056 = vmatprep.subr.bf16.mxu0 0
      %1057 = vmatpush1.bf16.msra.mxu0 0
      %1058 = vmatprep.subr.bf16.mxu0 0
      %1059 = vmatpush1.bf16.msra.mxu0 0
      %1060 = vmatprep.subr.bf16.mxu0 0
      %1061 = vmatpush1.bf16.msra.mxu0 0
      %1062 = vmatprep.subr.bf16.mxu0 0
      %1063 = vmatpush1.bf16.msra.mxu0 0
      %1064 = vmatprep.subr.bf16.mxu0 0
      %1065 = vmatpush1.bf16.msra.mxu0 0
      %1066 = vmatprep.subr.bf16.mxu0 0
      %1067 = vmatpush1.bf16.msra.mxu0 0
      %1068 = vmatprep.subr.bf16.mxu0 0
      %1069 = vmatpush1.bf16.msra.mxu0 0
      %1070 = vmatprep.subr.bf16.mxu0 0
      %1071 = vmatpush1.bf16.msra.mxu0 0
      %1072 = vmatprep.subr.bf16.mxu0 0
      %1073 = vmatpush1.bf16.msra.mxu0 0
      %1074 = vmatprep.subr.bf16.mxu0 0
      %1075 = vmatpush1.bf16.msra.mxu0 0
      %1076 = vmatprep.subr.bf16.mxu0 0
      %1077 = vmatpush1.bf16.msra.mxu0 0
      %1078 = vmatprep.subr.bf16.mxu0 0
      %1079 = vmatpush1.bf16.msra.mxu0 0
      %1080 = vmatprep.subr.bf16.mxu0 0
      %1081 = vmatpush1.bf16.msra.mxu0 0
      %1082 = vmatprep.subr.bf16.mxu0 0
      %1083 = vmatpush1.bf16.msra.mxu0 0
      %1084 = vmatprep.subr.bf16.mxu0 0
      %1085 = vmatpush1.bf16.msra.mxu0 0
      %1086 = vmatprep.mubr.bf16.mxu0 0
      %1087 = vmatmul.mubr.bf16.gmra.mrb[0].mxu0 %v1052
      %v1088 = vpop.f32.mrb[0].mxu0
      %v1089 = vadd.f32 0.0, %v1088
      %v1090 = vpop.f32.mrb[0].mxu0
      %v1091 = vpop.f32.mrb[0].mxu0
      %v1092 = vadd.f32 0.0, %v1091
      %v1093 = vpop.f32.mrb[0].mxu0
      %1094 = vdwg.mxu0
      %v1095 = vmul.f32 %v1089, 0.25
      %v1096 = vmul.f32 %v1092, 0.25
      %v1097 = vsel %vm815, %v1095, -inf
      %1098 = vmax.xlane.f32.xlu0 %v1097
      %v1099 = vpop.xlane.xlu0 %1098
      %v1100 = vsel %vm815, %v1096, -inf
      %1101 = vmax.xlane.f32.xlu0 %v1100
      %v1102 = vpop.xlane.xlu0 %1101
      %v1103 = vsub.f32 %v1095, %v1099
      %v1104 = vsub.f32 %v1096, %v1102
      %v1105 = vmul.f32 %v1103, 1.442695
      %v1106 = vpow.pop %v1105
      %v1107 = vmul.f32 %v1104, 1.442695
      %v1108 = vpow.pop %v1107
      %v1109 = vsel %vm815, %v1106, 0.0
      %1110 = vadd.xlane.f32.xlu0 %v1109
      %v1111 = vpop.xlane.xlu0 %1110
      %v1112 = vsel %vm815, %v1108, 0.0
      %1113 = vadd.xlane.f32.xlu0 %v1112
      %v1114 = vpop.xlane.xlu0 %1113
      %v1115 = vrcp.pop %v1111
      %v1116 = vrcp.pop %v1114
      %v1117 = vmul.f32 %v1106, %v1115
      %v1118 = vmul.f32 %v1108, %v1116
      %v1119 = vpack.c.bf16 %v1118, %v1117
      %1120 = vrot.lane.b32.xlu0 %v814, 96
      %v1121 = vpop.permute.xlu0 %1120
      %v1124 = vsel %vm815, %v1119, 0
      %1126 = vmatprep.subr.bf16.mxu0 0
      %1127 = vmatpush1.bf16.msra.mxu0 %v1121
      %1128 = vmatprep.subr.bf16.mxu0 0
      %1129 = vmatpush1.bf16.msra.mxu0 0
      %1130 = vmatprep.subr.bf16.mxu0 0
      %1131 = vmatpush1.bf16.msra.mxu0 0
      %1132 = vmatprep.subr.bf16.mxu0 0
      %1133 = vmatpush1.bf16.msra.mxu0 0
      %1134 = vmatprep.subr.bf16.mxu0 0
      %1135 = vmatpush1.bf16.msra.mxu0 0
      %1136 = vmatprep.subr.bf16.mxu0 0
      %1137 = vmatpush1.bf16.msra.mxu0 0
      %1138 = vmatprep.subr.bf16.mxu0 0
      %1139 = vmatpush1.bf16.msra.mxu0 0
      %1140 = vmatprep.subr.bf16.mxu0 0
      %1141 = vmatpush1.bf16.msra.mxu0 0
      %1142 = vmatprep.subr.bf16.mxu0 0
      %1143 = vmatpush1.bf16.msra.mxu0 0
      %1144 = vmatprep.subr.bf16.mxu0 0
      %1145 = vmatpush1.bf16.msra.mxu0 0
      %1146 = vmatprep.subr.bf16.mxu0 0
      %1147 = vmatpush1.bf16.msra.mxu0 0
      %1148 = vmatprep.subr.bf16.mxu0 0
      %1149 = vmatpush1.bf16.msra.mxu0 0
      %1150 = vmatprep.subr.bf16.mxu0 0
      %1151 = vmatpush1.bf16.msra.mxu0 0
      %1152 = vmatprep.subr.bf16.mxu0 0
      %1153 = vmatpush1.bf16.msra.mxu0 0
      %1154 = vmatprep.subr.bf16.mxu0 0
      %1155 = vmatpush1.bf16.msra.mxu0 0
      %1156 = vmatprep.subr.bf16.mxu0 0
      %1157 = vmatpush1.bf16.msra.mxu0 0
      %1158 = vmatprep.mubr.bf16.mxu0 0
      %1159 = vmatmul.mubr.bf16.gmra.mrb[0].mxu0 %v1124
      %v1160 = vpop.f32.mrb[0].mxu0
      %v1161 = vadd.f32 0.0, %v1160
      %v1162 = vpop.f32.mrb[0].mxu0
      %v1163 = vpop.f32.mrb[0].mxu0
      %v1164 = vadd.f32 0.0, %v1163
      %v1165 = vpop.f32.mrb[0].mxu0
      %1166 = vdwg.mxu0
      %1167 = vrot.lane.b32.xlu0 %v769, 80
      %v1168 = vpop.permute.xlu0 %1167
      %v1170 = vsel %vm815, %v1168, 0
      %1172 = vmatprep.subr.bf16.mxu0 0
      %1173 = vmatpush1.bf16.msra.mxu0 %v813
      %1174 = vmatprep.subr.bf16.mxu0 0
      %1175 = vmatpush1.bf16.msra.mxu0 0
      %1176 = vmatprep.subr.bf16.mxu0 0
      %1177 = vmatpush1.bf16.msra.mxu0 0
      %1178 = vmatprep.subr.bf16.mxu0 0
      %1179 = vmatpush1.bf16.msra.mxu0 0
      %1180 = vmatprep.subr.bf16.mxu0 0
      %1181 = vmatpush1.bf16.msra.mxu0 0
      %1182 = vmatprep.subr.bf16.mxu0 0
      %1183 = vmatpush1.bf16.msra.mxu0 0
      %1184 = vmatprep.subr.bf16.mxu0 0
      %1185 = vmatpush1.bf16.msra.mxu0 0
      %1186 = vmatprep.subr.bf16.mxu0 0
      %1187 = vmatpush1.bf16.msra.mxu0 0
      %1188 = vmatprep.subr.bf16.mxu0 0
      %1189 = vmatpush1.bf16.msra.mxu0 0
      %1190 = vmatprep.subr.bf16.mxu0 0
      %1191 = vmatpush1.bf16.msra.mxu0 0
      %1192 = vmatprep.subr.bf16.mxu0 0
      %1193 = vmatpush1.bf16.msra.mxu0 0
      %1194 = vmatprep.subr.bf16.mxu0 0
      %1195 = vmatpush1.bf16.msra.mxu0 0
      %1196 = vmatprep.subr.bf16.mxu0 0
      %1197 = vmatpush1.bf16.msra.mxu0 0
      %1198 = vmatprep.subr.bf16.mxu0 0
      %1199 = vmatpush1.bf16.msra.mxu0 0
      %1200 = vmatprep.subr.bf16.mxu0 0
      %1201 = vmatpush1.bf16.msra.mxu0 0
      %1202 = vmatprep.subr.bf16.mxu0 0
      %1203 = vmatpush1.bf16.msra.mxu0 0
      %1204 = vmatprep.mubr.bf16.mxu0 0
      %1205 = vmatmul.mubr.bf16.gmra.mrb[0].mxu0 %v1170
      %v1206 = vpop.f32.mrb[0].mxu0
      %v1207 = vadd.f32 0.0, %v1206
      %v1208 = vpop.f32.mrb[0].mxu0
      %v1209 = vpop.f32.mrb[0].mxu0
      %v1210 = vadd.f32 0.0, %v1209
      %v1211 = vpop.f32.mrb[0].mxu0
      %1212 = vdwg.mxu0
      %v1213 = vmul.f32 %v1207, 0.25
      %v1214 = vmul.f32 %v1210, 0.25
      %v1215 = vsel %vm815, %v1213, -inf
      %1216 = vmax.xlane.f32.xlu0 %v1215
      %v1217 = vpop.xlane.xlu0 %1216
      %v1218 = vsel %vm815, %v1214, -inf
      %1219 = vmax.xlane.f32.xlu0 %v1218
      %v1220 = vpop.xlane.xlu0 %1219
      %v1221 = vsub.f32 %v1213, %v1217
      %v1222 = vsub.f32 %v1214, %v1220
      %v1223 = vmul.f32 %v1221, 1.442695
      %v1224 = vpow.pop %v1223
      %v1225 = vmul.f32 %v1222, 1.442695
      %v1226 = vpow.pop %v1225
      %v1227 = vsel %vm815, %v1224, 0.0
      %1228 = vadd.xlane.f32.xlu0 %v1227
      %v1229 = vpop.xlane.xlu0 %1228
      %v1230 = vsel %vm815, %v1226, 0.0
      %1231 = vadd.xlane.f32.xlu0 %v1230
      %v1232 = vpop.xlane.xlu0 %1231
      %v1233 = vrcp.pop %v1229
      %v1234 = vrcp.pop %v1232
      %v1235 = vmul.f32 %v1224, %v1233
      %v1236 = vmul.f32 %v1226, %v1234
      %v1237 = vpack.c.bf16 %v1236, %v1235
      %1238 = vrot.lane.b32.xlu0 %v814, 80
      %v1239 = vpop.permute.xlu0 %1238
      %v1242 = vsel %vm815, %v1237, 0
      %1244 = vmatprep.subr.bf16.mxu0 0
      %1245 = vmatpush1.bf16.msra.mxu0 %v1239
      %1246 = vmatprep.subr.bf16.mxu0 0
      %1247 = vmatpush1.bf16.msra.mxu0 0
      %1248 = vmatprep.subr.bf16.mxu0 0
      %1249 = vmatpush1.bf16.msra.mxu0 0
      %1250 = vmatprep.subr.bf16.mxu0 0
      %1251 = vmatpush1.bf16.msra.mxu0 0
      %1252 = vmatprep.subr.bf16.mxu0 0
      %1253 = vmatpush1.bf16.msra.mxu0 0
      %1254 = vmatprep.subr.bf16.mxu0 0
      %1255 = vmatpush1.bf16.msra.mxu0 0
      %1256 = vmatprep.subr.bf16.mxu0 0
      %1257 = vmatpush1.bf16.msra.mxu0 0
      %1258 = vmatprep.subr.bf16.mxu0 0
      %1259 = vmatpush1.bf16.msra.mxu0 0
      %1260 = vmatprep.subr.bf16.mxu0 0
      %1261 = vmatpush1.bf16.msra.mxu0 0
      %1262 = vmatprep.subr.bf16.mxu0 0
      %1263 = vmatpush1.bf16.msra.mxu0 0
      %1264 = vmatprep.subr.bf16.mxu0 0
      %1265 = vmatpush1.bf16.msra.mxu0 0
      %1266 = vmatprep.subr.bf16.mxu0 0
      %1267 = vmatpush1.bf16.msra.mxu0 0
      %1268 = vmatprep.subr.bf16.mxu0 0
      %1269 = vmatpush1.bf16.msra.mxu0 0
      %1270 = vmatprep.subr.bf16.mxu0 0
      %1271 = vmatpush1.bf16.msra.mxu0 0
      %1272 = vmatprep.subr.bf16.mxu0 0
      %1273 = vmatpush1.bf16.msra.mxu0 0
      %1274 = vmatprep.subr.bf16.mxu0 0
      %1275 = vmatpush1.bf16.msra.mxu0 0
      %1276 = vmatprep.mubr.bf16.mxu0 0
      %1277 = vmatmul.mubr.bf16.gmra.mrb[0].mxu0 %v1242
      %v1278 = vpop.f32.mrb[0].mxu0
      %v1279 = vadd.f32 0.0, %v1278
      %v1280 = vpop.f32.mrb[0].mxu0
      %v1281 = vpop.f32.mrb[0].mxu0
      %v1282 = vadd.f32 0.0, %v1281
      %v1283 = vpop.f32.mrb[0].mxu0
      %1284 = vdwg.mxu0
      %1287 = vrot.lane.b32.xlu0 %v1043, 16
      %v1288 = vpop.permute.xlu0 %1287
      %1289 = vrot.lane.b32.xlu0 %v1046, 16
      %v1290 = vpop.permute.xlu0 %1289
      %1295 = vrot.lane.b32.xlu0 %v1161, 32
      %v1296 = vpop.permute.xlu0 %1295
      %1297 = vrot.lane.b32.xlu0 %v1164, 32
      %v1298 = vpop.permute.xlu0 %1297
      %1303 = vrot.lane.b32.xlu0 %v1279, 48
      %v1304 = vpop.permute.xlu0 %1303
      %1305 = vrot.lane.b32.xlu0 %v1282, 48
      %v1306 = vpop.permute.xlu0 %1305
      %v1309 = vsel %vm815, %v923, %v1288
      %v1310 = vsel %vm815, %v926, %v1290
      %vm1311 = vcmask 261120
      %v1312 = vsel %vm1311, %v1309, %v1296
      %v1313 = vsel %vm1311, %v1310, %v1298
      %vm1314 = vcmask 392192
      %v1315 = vsel %vm1314, %v1312, %v1304
      %v1316 = vsel %vm1314, %v1313, %v1306
      %v1317 = vld [vmem:[%s10 + $0x7] ss:$0 sm:$0xff]
      %v1318 = vpack.c.bf16 %v1316, %v1315
      %v1319 = vld [vmem:[%s4] sm:$0xf]
      %v1320 = vld [vmem:[%s4 + $0x4] sm:$0xf]
      %v1321 = vld [vmem:[%s4 + $0x8] sm:$0xf]
      %v1322 = vld [vmem:[%s4 + $0xc] sm:$0xf]
      %v1323 = vld [vmem:[%s4 + $0x10] sm:$0xf]
      %v1324 = vld [vmem:[%s4 + $0x14] sm:$0xf]
      %v1325 = vld [vmem:[%s4 + $0x18] sm:$0xf]
      %v1326 = vld [vmem:[%s4 + $0x1c] sm:$0xf]
      %v1335 = vunpack.c.l.b16 %v1319
      %v1336 = vunpack.c.l.b16 %v1320
      %v1337 = vunpack.c.l.b16 %v1321
      %v1338 = vunpack.c.l.b16 %v1322
      %v1339 = vunpack.c.l.b16 %v1323
      %v1340 = vunpack.c.l.b16 %v1324
      %v1341 = vunpack.c.l.b16 %v1325
      %v1342 = vunpack.c.l.b16 %v1326
      %v1343 = vpack.c.b16 %v1336, %v1335
      %v1344 = vpack.c.b16 %v1338, %v1337
      %v1345 = vpack.c.b16 %v1340, %v1339
      %v1346 = vpack.c.b16 %v1342, %v1341
      %v1352 = vsel %vm394, %v1318, 0
      %1354 = vmatprep.subr.bf16.mxu0 0
      %1355 = vmatpush1.bf16.msra.mxu0 %v1343
      %1356 = vmatprep.subr.bf16.mxu0 0
      %1357 = vmatpush1.bf16.msra.mxu0 %v1344
      %1358 = vmatprep.subr.bf16.mxu0 0
      %1359 = vmatpush1.bf16.msra.mxu0 %v1345
      %1360 = vmatprep.subr.bf16.mxu0 0
      %1361 = vmatpush1.bf16.msra.mxu0 %v1346
      %1362 = vmatprep.subr.bf16.mxu0 0
      %1363 = vmatpush1.bf16.msra.mxu0 0
      %1364 = vmatprep.subr.bf16.mxu0 0
      %1365 = vmatpush1.bf16.msra.mxu0 0
      %1366 = vmatprep.subr.bf16.mxu0 0
      %1367 = vmatpush1.bf16.msra.mxu0 0
      %1368 = vmatprep.subr.bf16.mxu0 0
      %1369 = vmatpush1.bf16.msra.mxu0 0
      %1370 = vmatprep.subr.bf16.mxu0 0
      %1371 = vmatpush1.bf16.msra.mxu0 0
      %1372 = vmatprep.subr.bf16.mxu0 0
      %1373 = vmatpush1.bf16.msra.mxu0 0
      %1374 = vmatprep.subr.bf16.mxu0 0
      %1375 = vmatpush1.bf16.msra.mxu0 0
      %1376 = vmatprep.subr.bf16.mxu0 0
      %1377 = vmatpush1.bf16.msra.mxu0 0
      %1378 = vmatprep.subr.bf16.mxu0 0
      %1379 = vmatpush1.bf16.msra.mxu0 0
      %1380 = vmatprep.subr.bf16.mxu0 0
      %1381 = vmatpush1.bf16.msra.mxu0 0
      %1382 = vmatprep.subr.bf16.mxu0 0
      %1383 = vmatpush1.bf16.msra.mxu0 0
      %1384 = vmatprep.subr.bf16.mxu0 0
      %1385 = vmatpush1.bf16.msra.mxu0 0
      %1386 = vmatprep.mubr.bf16.mxu0 0
      %1387 = vmatmul.mubr.bf16.gmra.mrb[0].mxu0 %v1352
      %v1388 = vpop.f32.mrb[0].mxu0
      %v1389 = vadd.f32 %v1317, %v1388
      %v1390 = vpop.f32.mrb[0].mxu0
      %v1391 = vpop.f32.mrb[0].mxu0
      %v1392 = vadd.f32 %v1317, %v1391
      %v1393 = vpop.f32.mrb[0].mxu0
      %1394 = vdwg.mxu0
      %v1395 = vadd.f32 %v627, %v1389
      %v1396 = vadd.f32 %v628, %v1392
      %v1397 = vld [vmem:[%s10 + $0x10] ss:$0 sm:$0xff]
      %v1398 = vld [vmem:[%s10 + $0x11] ss:$0 sm:$0xff]
      %v1399 = vsel %vm394, %v1395, 0.0
      %1400 = vadd.xlane.f32.xlu0 %v1399
      %v1401 = vpop.xlane.xlu0 %1400
      %v1402 = vsel %vm394, %v1396, 0.0
      %1403 = vadd.xlane.f32.xlu0 %v1402
      %v1404 = vpop.xlane.xlu0 %1403
      %v1405 = vmul.f32 %v1401, %v401
      %v1406 = vmul.f32 %v1404, %v401
      %v1407 = vsub.f32 %v1395, %v1405
      %v1408 = vsub.f32 %v1396, %v1406
      %v1409 = vmul.f32 %v1407, %v1407
      %v1410 = vmul.f32 %v1408, %v1408
      %v1411 = vsel %vm394, %v1409, 0.0
      %1412 = vadd.xlane.f32.xlu0 %v1411
      %v1413 = vpop.xlane.xlu0 %1412
      %v1414 = vsel %vm394, %v1410, 0.0
      %1415 = vadd.xlane.f32.xlu0 %v1414
      %v1416 = vpop.xlane.xlu0 %1415
      %v1417 = vmul.f32 %v1413, %v401
      %v1418 = vmul.f32 %v1416, %v401
      %v1419 = vadd.f32 %v1417, 1e-05
      %v1420 = vadd.f32 %v1418, 1e-05
      %v1421 = vrsqrt.pop %v1419
      %v1422 = vrsqrt.pop %v1420
      %v1423 = vmul.f32 %v1407, %v1421
      %v1424 = vmul.f32 %v1408, %v1422
      %v1425 = vmul.f32 %v1423, %v1397
      %v1426 = vmul.f32 %v1424, %v1397
      %v1427 = vadd.f32 %v1425, %v1398
      %v1428 = vadd.f32 %v1426, %v1398
      %v1429 = vpack.c.bf16 %v1428, %v1427
      %v1430 = vld [vmem:[%s5] sm:$0xf]
      %v1431 = vld [vmem:[%s5 + $0x4] sm:$0xf]
      %v1432 = vld [vmem:[%s5 + $0x8] sm:$0xf]
      %v1433 = vld [vmem:[%s5 + $0xc] sm:$0xf]
      %v1434 = vld [vmem:[%s5 + $0x10] sm:$0xf]
      %v1435 = vld [vmem:[%s5 + $0x14] sm:$0xf]
      %v1436 = vld [vmem:[%s5 + $0x18] sm:$0xf]
      %v1437 = vld [vmem:[%s5 + $0x1c] sm:$0xf]
      %v1438 = vld [vmem:[%s10 + $0x12] ss:$0 sm:$0xff]
      %v1447 = vunpack.c.l.b16 %v1430
      %v1448 = vunpack.c.l.b16 %v1431
      %v1449 = vunpack.c.l.b16 %v1432
      %v1450 = vunpack.c.l.b16 %v1433
      %v1451 = vunpack.c.l.b16 %v1434
      %v1452 = vunpack.c.l.b16 %v1435
      %v1453 = vunpack.c.l.b16 %v1436
      %v1454 = vunpack.c.l.b16 %v1437
      %v1455 = vpack.c.b16 %v1448, %v1447
      %v1456 = vpack.c.b16 %v1450, %v1449
      %v1457 = vpack.c.b16 %v1452, %v1451
      %v1458 = vpack.c.b16 %v1454, %v1453
      %v1464 = vsel %vm394, %v1429, 0
      %1466 = vmatprep.subr.bf16.mxu0 0
      %1467 = vmatpush1.bf16.msra.mxu0 %v1455
      %1468 = vmatprep.subr.bf16.mxu0 0
      %1469 = vmatpush1.bf16.msra.mxu0 %v1456
      %1470 = vmatprep.subr.bf16.mxu0 0
      %1471 = vmatpush1.bf16.msra.mxu0 %v1457
      %1472 = vmatprep.subr.bf16.mxu0 0
      %1473 = vmatpush1.bf16.msra.mxu0 %v1458
      %1474 = vmatprep.subr.bf16.mxu0 0
      %1475 = vmatpush1.bf16.msra.mxu0 0
      %1476 = vmatprep.subr.bf16.mxu0 0
      %1477 = vmatpush1.bf16.msra.mxu0 0
      %1478 = vmatprep.subr.bf16.mxu0 0
      %1479 = vmatpush1.bf16.msra.mxu0 0
      %1480 = vmatprep.subr.bf16.mxu0 0
      %1481 = vmatpush1.bf16.msra.mxu0 0
      %1482 = vmatprep.subr.bf16.mxu0 0
      %1483 = vmatpush1.bf16.msra.mxu0 0
      %1484 = vmatprep.subr.bf16.mxu0 0
      %1485 = vmatpush1.bf16.msra.mxu0 0
      %1486 = vmatprep.subr.bf16.mxu0 0
      %1487 = vmatpush1.bf16.msra.mxu0 0
      %1488 = vmatprep.subr.bf16.mxu0 0
      %1489 = vmatpush1.bf16.msra.mxu0 0
      %1490 = vmatprep.subr.bf16.mxu0 0
      %1491 = vmatpush1.bf16.msra.mxu0 0
      %1492 = vmatprep.subr.bf16.mxu0 0
      %1493 = vmatpush1.bf16.msra.mxu0 0
      %1494 = vmatprep.subr.bf16.mxu0 0
      %1495 = vmatpush1.bf16.msra.mxu0 0
      %1496 = vmatprep.subr.bf16.mxu0 0
      %1497 = vmatpush1.bf16.msra.mxu0 0
      %1498 = vmatprep.mubr.bf16.mxu0 0
      %1499 = vmatmul.mubr.bf16.gmra.mrb[0].mxu0 %v1464
      %v1500 = vpop.f32.mrb[0].mxu0
      %v1501 = vadd.f32 %v1438, %v1500
      %v1502 = vpop.f32.mrb[0].mxu0
      %v1503 = vpop.f32.mrb[0].mxu0
      %v1504 = vadd.f32 %v1438, %v1503
      %v1505 = vpop.f32.mrb[0].mxu0
      %1506 = vdwg.mxu0
      %v1507 = vld [vmem:[%s6] sm:$0xf]
      %v1508 = vld [vmem:[%s6 + $0x4] sm:$0xf]
      %v1509 = vld [vmem:[%s6 + $0x8] sm:$0xf]
      %v1510 = vld [vmem:[%s6 + $0xc] sm:$0xf]
      %v1511 = vld [vmem:[%s6 + $0x10] sm:$0xf]
      %v1512 = vld [vmem:[%s6 + $0x14] sm:$0xf]
      %v1513 = vld [vmem:[%s6 + $0x18] sm:$0xf]
      %v1514 = vld [vmem:[%s6 + $0x1c] sm:$0xf]
      %v1515 = vld [vmem:[%s10 + $0x13] ss:$0 sm:$0xff]
      %v1524 = vunpack.c.l.b16 %v1507
      %v1525 = vunpack.c.l.b16 %v1508
      %v1526 = vunpack.c.l.b16 %v1509
      %v1527 = vunpack.c.l.b16 %v1510
      %v1528 = vunpack.c.l.b16 %v1511
      %v1529 = vunpack.c.l.b16 %v1512
      %v1530 = vunpack.c.l.b16 %v1513
      %v1531 = vunpack.c.l.b16 %v1514
      %v1532 = vpack.c.b16 %v1525, %v1524
      %v1533 = vpack.c.b16 %v1527, %v1526
      %v1534 = vpack.c.b16 %v1529, %v1528
      %v1535 = vpack.c.b16 %v1531, %v1530
      %1540 = vmatprep.subr.bf16.mxu0 0
      %1541 = vmatpush1.bf16.msra.mxu0 %v1532
      %1542 = vmatprep.subr.bf16.mxu0 0
      %1543 = vmatpush1.bf16.msra.mxu0 %v1533
      %1544 = vmatprep.subr.bf16.mxu0 0
      %1545 = vmatpush1.bf16.msra.mxu0 %v1534
      %1546 = vmatprep.subr.bf16.mxu0 0
      %1547 = vmatpush1.bf16.msra.mxu0 %v1535
      %1548 = vmatprep.subr.bf16.mxu0 0
      %1549 = vmatpush1.bf16.msra.mxu0 0
      %1550 = vmatprep.subr.bf16.mxu0 0
      %1551 = vmatpush1.bf16.msra.mxu0 0
      %1552 = vmatprep.subr.bf16.mxu0 0
      %1553 = vmatpush1.bf16.msra.mxu0 0
      %1554 = vmatprep.subr.bf16.mxu0 0
      %1555 = vmatpush1.bf16.msra.mxu0 0
      %1556 = vmatprep.subr.bf16.mxu0 0
      %1557 = vmatpush1.bf16.msra.mxu0 0
      %1558 = vmatprep.subr.bf16.mxu0 0
      %1559 = vmatpush1.bf16.msra.mxu0 0
      %1560 = vmatprep.subr.bf16.mxu0 0
      %1561 = vmatpush1.bf16.msra.mxu0 0
      %1562 = vmatprep.subr.bf16.mxu0 0
      %1563 = vmatpush1.bf16.msra.mxu0 0
      %1564 = vmatprep.subr.bf16.mxu0 0
      %1565 = vmatpush1.bf16.msra.mxu0 0
      %1566 = vmatprep.subr.bf16.mxu0 0
      %1567 = vmatpush1.bf16.msra.mxu0 0
      %1568 = vmatprep.subr.bf16.mxu0 0
      %1569 = vmatpush1.bf16.msra.mxu0 0
      %1570 = vmatprep.subr.bf16.mxu0 0
      %1571 = vmatpush1.bf16.msra.mxu0 0
      %1572 = vmatprep.mubr.bf16.mxu0 0
      %1573 = vmatmul.mubr.bf16.gmra.mrb[0].mxu0 %v1464
      %v1574 = vpop.f32.mrb[0].mxu0
      %v1575 = vadd.f32 %v1515, %v1574
      %v1576 = vpop.f32.mrb[0].mxu0
      %v1577 = vpop.f32.mrb[0].mxu0
      %v1578 = vadd.f32 %v1515, %v1577
      %v1579 = vpop.f32.mrb[0].mxu0
      %1580 = vdwg.mxu0
      %v1581 = vxor.u32 %v1575, 2147483648
      %v1582 = vxor.u32 %v1578, 2147483648
      %v1583 = vmul.f32 %v1581, 1.442695
      %v1584 = vpow.pop %v1583
      %v1585 = vmul.f32 %v1582, 1.442695
      %v1586 = vpow.pop %v1585
      %v1587 = vadd.f32 %v1584, 1.0
      %v1588 = vadd.f32 %v1586, 1.0
      %v1589 = vrcp.pop %v1587
      %v1590 = vmul.f32 1.0, %v1589
      %v1591 = vrcp.pop %v1588
      %v1592 = vmul.f32 1.0, %v1591
      %v1593 = vmul.f32 %v1501, %v1590
      %v1594 = vmul.f32 %v1504, %v1592
      %1595 = vst.msk [vmem:[#allocation2] sm:$0xff] %vm394, 0.0
      %1596 = vst.msk [vmem:[#allocation2 + $0x8] sm:$0xff] %vm394, 0.0
      %1597 = vst.msk [vmem:[#allocation2 + $0x10] sm:$0xff] %vm394, 0.0
      %vm1598 = vcmask 522240
      %1599 = vst.msk [vmem:[#allocation2 + $0x18] sm:$0x7f] %vm1598, 0.0
      %1600 = vst.msk [vmem:[#allocation2 + $0x8] sm:$0xff] %vm394, %v1593
      %1601 = vst.msk [vmem:[#allocation2 + $0x10] sm:$0xff] %vm394, %v1594
      %v1602 = vld [vmem:[#allocation2 + $0x1] sm:$0xff]
      %v1603 = vld [vmem:[#allocation2 + $0x9] sm:$0xff]
      %v1604 = vld [vmem:[%s10 + $0x26] ss:$0 sm:$0xff]
      %v1605 = vmul.f32 %v1602, %v1604
      %v1606 = vmul.f32 %v1603, %v1604
      %v1607 = vadd.f32 %v1605, 0.0
      %v1608 = vadd.f32 %v1606, 0.0
      %v1609 = vld [vmem:[#allocation2 + $0x2] sm:$0xff]
      %v1610 = vld [vmem:[#allocation2 + $0xa] sm:$0xff]
      %v1611 = vld [vmem:[%s10 + $0x27] ss:$0 sm:$0xff]
      %v1612 = vmul.f32 %v1609, %v1611
      %v1613 = vmul.f32 %v1610, %v1611
      %v1614 = vadd.f32 %v1607, %v1612
      %v1615 = vadd.f32 %v1608, %v1613
      %v1616 = vld [vmem:[#allocation2 + $0x3] sm:$0xff]
      %v1617 = vld [vmem:[#allocation2 + $0xb] sm:$0xff]
      %v1618 = vld [vmem:[%s10 + $0x30] ss:$0 sm:$0xff]
      %v1619 = vmul.f32 %v1616, %v1618
      %v1620 = vmul.f32 %v1617, %v1618
      %v1621 = vadd.f32 %v1614, %v1619
      %v1622 = vadd.f32 %v1615, %v1620
      %v1623 = vld [vmem:[#allocation2 + $0x4] sm:$0xff]
      %v1624 = vld [vmem:[#allocation2 + $0xc] sm:$0xff]
      %v1625 = vld [vmem:[%s10 + $0x31] ss:$0 sm:$0xff]
      %v1626 = vmul.f32 %v1623, %v1625
      %v1627 = vmul.f32 %v1624, %v1625
      %v1628 = vadd.f32 %v1621, %v1626
      %v1629 = vadd.f32 %v1622, %v1627
      %v1630 = vld [vmem:[#allocation2 + $0x5] sm:$0xff]
      %v1631 = vld [vmem:[#allocation2 + $0xd] sm:$0xff]
      %v1632 = vld [vmem:[%s10 + $0x32] ss:$0 sm:$0xff]
      %v1633 = vmul.f32 %v1630, %v1632
      %v1634 = vmul.f32 %v1631, %v1632
      %v1635 = vadd.f32 %v1628, %v1633
      %v1636 = vadd.f32 %v1629, %v1634
      %v1637 = vld [vmem:[#allocation2 + $0x6] sm:$0xff]
      %v1638 = vld [vmem:[#allocation2 + $0xe] sm:$0xff]
      %v1639 = vld [vmem:[%s10 + $0x33] ss:$0 sm:$0xff]
      %v1640 = vmul.f32 %v1637, %v1639
      %v1641 = vmul.f32 %v1638, %v1639
      %v1642 = vadd.f32 %v1635, %v1640
      %v1643 = vadd.f32 %v1636, %v1641
      %v1644 = vld [vmem:[#allocation2 + $0x7] sm:$0xff]
      %v1645 = vld [vmem:[#allocation2 + $0xf] sm:$0xff]
      %v1646 = vld [vmem:[%s10 + $0x34] ss:$0 sm:$0xff]
      %v1647 = vmul.f32 %v1644, %v1646
      %v1648 = vmul.f32 %v1645, %v1646
      %v1649 = vadd.f32 %v1642, %v1647
      %v1650 = vadd.f32 %v1643, %v1648
      %v1651 = vld [vmem:[#allocation2 + $0x8] sm:$0xff]
      %v1652 = vld [vmem:[#allocation2 + $0x10] sm:$0xff]
      %v1653 = vld [vmem:[%s10 + $0x35] ss:$0 sm:$0xff]
      %v1654 = vmul.f32 %v1651, %v1653
      %v1655 = vmul.f32 %v1652, %v1653
      %v1656 = vadd.f32 %v1649, %v1654
      %v1657 = vadd.f32 %v1650, %v1655
      %v1658 = vld [vmem:[#allocation2 + $0x11] sm:$0xff]
      %v1659 = vld [vmem:[%s10 + $0x36] ss:$0 sm:$0xff]
      %v1660 = vmul.f32 %v1603, %v1659
      %v1661 = vmul.f32 %v1658, %v1659
      %v1662 = vadd.f32 %v1656, %v1660
      %v1663 = vadd.f32 %v1657, %v1661
      %v1664 = vld [vmem:[#allocation2 + $0x12] sm:$0xff]
      %v1665 = vld [vmem:[%s10 + $0x37] ss:$0 sm:$0xff]
      %v1666 = vmul.f32 %v1610, %v1665
      %v1667 = vmul.f32 %v1664, %v1665
      %v1668 = vadd.f32 %v1662, %v1666
      %v1669 = vadd.f32 %v1663, %v1667
      %v1670 = vld [vmem:[#allocation2 + $0x13] sm:$0xff]
      %v1671 = vld [vmem:[%s10 + $0x40] ss:$0 sm:$0xff]
      %v1672 = vmul.f32 %v1617, %v1671
      %v1673 = vmul.f32 %v1670, %v1671
      %v1674 = vadd.f32 %v1668, %v1672
      %v1675 = vadd.f32 %v1669, %v1673
      %v1676 = vld [vmem:[#allocation2 + $0x14] sm:$0xff]
      %v1677 = vld [vmem:[%s10 + $0x41] ss:$0 sm:$0xff]
      %v1678 = vmul.f32 %v1624, %v1677
      %v1679 = vmul.f32 %v1676, %v1677
      %v1680 = vadd.f32 %v1674, %v1678
      %v1681 = vadd.f32 %v1675, %v1679
      %v1682 = vld [vmem:[#allocation2 + $0x15] sm:$0xff]
      %v1683 = vld [vmem:[%s10 + $0x42] ss:$0 sm:$0xff]
      %v1684 = vmul.f32 %v1631, %v1683
      %v1685 = vmul.f32 %v1682, %v1683
      %v1686 = vadd.f32 %v1680, %v1684
      %v1687 = vadd.f32 %v1681, %v1685
      %v1688 = vld [vmem:[#allocation2 + $0x16] sm:$0xff]
      %v1689 = vld [vmem:[%s10 + $0x43] ss:$0 sm:$0xff]
      %v1690 = vmul.f32 %v1638, %v1689
      %v1691 = vmul.f32 %v1688, %v1689
      %v1692 = vadd.f32 %v1686, %v1690
      %v1693 = vadd.f32 %v1687, %v1691
      %v1694 = vld [vmem:[#allocation2 + $0x17] sm:$0xff]
      %v1695 = vld [vmem:[%s10 + $0x44] ss:$0 sm:$0xff]
      %v1696 = vmul.f32 %v1645, %v1695
      %v1697 = vmul.f32 %v1694, %v1695
      %v1698 = vadd.f32 %v1692, %v1696
      %v1699 = vadd.f32 %v1693, %v1697
      %v1700 = vld [vmem:[%s10 + $0x14] ss:$0 sm:$0xff]
      %v1701 = vadd.f32 %v1698, %v1700
      %v1702 = vadd.f32 %v1699, %v1700
      %v1703 = vld [vmem:[%s10 + $0x15] ss:$0 sm:$0xff]
      %v1704 = vmul.f32 %v1701, %v1703
      %v1705 = vmul.f32 %v1702, %v1703
      %v1706 = vld [vmem:[%s10 + $0x16] ss:$0 sm:$0xff]
      %v1707 = vadd.f32 %v1704, %v1706
      %v1708 = vadd.f32 %v1705, %v1706
      %v1709 = vxor.u32 %v1707, 2147483648
      %v1710 = vxor.u32 %v1708, 2147483648
      %v1711 = vmul.f32 %v1709, 1.442695
      %v1712 = vpow.pop %v1711
      %v1713 = vmul.f32 %v1710, 1.442695
      %v1714 = vpow.pop %v1713
      %v1715 = vadd.f32 %v1712, 1.0
      %v1716 = vadd.f32 %v1714, 1.0
      %v1717 = vrcp.pop %v1715
      %v1718 = vmul.f32 1.0, %v1717
      %v1719 = vrcp.pop %v1716
      %v1720 = vmul.f32 1.0, %v1719
      %v1721 = vmul.f32 %v1707, %v1718
      %v1722 = vmul.f32 %v1708, %v1720
      %v1723 = vld [vmem:[%s10 + $0x17] ss:$0 sm:$0xff]
      %v1724 = vpack.c.bf16 %v1722, %v1721
      %v1725 = vld [vmem:[%s7] sm:$0xf]
      %v1726 = vld [vmem:[%s7 + $0x4] sm:$0xf]
      %v1727 = vld [vmem:[%s7 + $0x8] sm:$0xf]
      %v1728 = vld [vmem:[%s7 + $0xc] sm:$0xf]
      %v1729 = vld [vmem:[%s7 + $0x10] sm:$0xf]
      %v1730 = vld [vmem:[%s7 + $0x14] sm:$0xf]
      %v1731 = vld [vmem:[%s7 + $0x18] sm:$0xf]
      %v1732 = vld [vmem:[%s7 + $0x1c] sm:$0xf]
      %v1741 = vunpack.c.l.b16 %v1725
      %v1742 = vunpack.c.l.b16 %v1726
      %v1743 = vunpack.c.l.b16 %v1727
      %v1744 = vunpack.c.l.b16 %v1728
      %v1745 = vunpack.c.l.b16 %v1729
      %v1746 = vunpack.c.l.b16 %v1730
      %v1747 = vunpack.c.l.b16 %v1731
      %v1748 = vunpack.c.l.b16 %v1732
      %v1749 = vpack.c.b16 %v1742, %v1741
      %v1750 = vpack.c.b16 %v1744, %v1743
      %v1751 = vpack.c.b16 %v1746, %v1745
      %v1752 = vpack.c.b16 %v1748, %v1747
      %v1758 = vsel %vm394, %v1724, 0
      %1760 = vmatprep.subr.bf16.mxu0 0
      %1761 = vmatpush1.bf16.msra.mxu0 %v1749
      %1762 = vmatprep.subr.bf16.mxu0 0
      %1763 = vmatpush1.bf16.msra.mxu0 %v1750
      %1764 = vmatprep.subr.bf16.mxu0 0
      %1765 = vmatpush1.bf16.msra.mxu0 %v1751
      %1766 = vmatprep.subr.bf16.mxu0 0
      %1767 = vmatpush1.bf16.msra.mxu0 %v1752
      %1768 = vmatprep.subr.bf16.mxu0 0
      %1769 = vmatpush1.bf16.msra.mxu0 0
      %1770 = vmatprep.subr.bf16.mxu0 0
      %1771 = vmatpush1.bf16.msra.mxu0 0
      %1772 = vmatprep.subr.bf16.mxu0 0
      %1773 = vmatpush1.bf16.msra.mxu0 0
      %1774 = vmatprep.subr.bf16.mxu0 0
      %1775 = vmatpush1.bf16.msra.mxu0 0
      %1776 = vmatprep.subr.bf16.mxu0 0
      %1777 = vmatpush1.bf16.msra.mxu0 0
      %1778 = vmatprep.subr.bf16.mxu0 0
      %1779 = vmatpush1.bf16.msra.mxu0 0
      %1780 = vmatprep.subr.bf16.mxu0 0
      %1781 = vmatpush1.bf16.msra.mxu0 0
      %1782 = vmatprep.subr.bf16.mxu0 0
      %1783 = vmatpush1.bf16.msra.mxu0 0
      %1784 = vmatprep.subr.bf16.mxu0 0
      %1785 = vmatpush1.bf16.msra.mxu0 0
      %1786 = vmatprep.subr.bf16.mxu0 0
      %1787 = vmatpush1.bf16.msra.mxu0 0
      %1788 = vmatprep.subr.bf16.mxu0 0
      %1789 = vmatpush1.bf16.msra.mxu0 0
      %1790 = vmatprep.subr.bf16.mxu0 0
      %1791 = vmatpush1.bf16.msra.mxu0 0
      %1792 = vmatprep.mubr.bf16.mxu0 0
      %1793 = vmatmul.mubr.bf16.gmra.mrb[0].mxu0 %v1758
      %v1794 = vpop.f32.mrb[0].mxu0
      %v1795 = vadd.f32 %v1723, %v1794
      %v1796 = vpop.f32.mrb[0].mxu0
      %v1797 = vpop.f32.mrb[0].mxu0
      %v1798 = vadd.f32 %v1723, %v1797
      %v1799 = vpop.f32.mrb[0].mxu0
      %1800 = vdwg.mxu0
      %v1801 = vadd.f32 %v1395, %v1795
      %v1802 = vadd.f32 %v1396, %v1798
      %v1803 = vld [vmem:[%s10 + $0x20] ss:$0 sm:$0xff]
      %v1804 = vld [vmem:[%s10 + $0x21] ss:$0 sm:$0xff]
      %v1805 = vsel %vm394, %v1801, 0.0
      %1806 = vadd.xlane.f32.xlu0 %v1805
      %v1807 = vpop.xlane.xlu0 %1806
      %v1808 = vsel %vm394, %v1802, 0.0
      %1809 = vadd.xlane.f32.xlu0 %v1808
      %v1810 = vpop.xlane.xlu0 %1809
      %v1811 = vmul.f32 %v1807, %v401
      %v1812 = vmul.f32 %v1810, %v401
      %v1813 = vsub.f32 %v1801, %v1811
      %v1814 = vsub.f32 %v1802, %v1812
      %v1815 = vmul.f32 %v1813, %v1813
      %v1816 = vmul.f32 %v1814, %v1814
      %v1817 = vsel %vm394, %v1815, 0.0
      %1818 = vadd.xlane.f32.xlu0 %v1817
      %v1819 = vpop.xlane.xlu0 %1818
      %v1820 = vsel %vm394, %v1816, 0.0
      %1821 = vadd.xlane.f32.xlu0 %v1820
      %v1822 = vpop.xlane.xlu0 %1821
      %v1823 = vmul.f32 %v1819, %v401
      %v1824 = vmul.f32 %v1822, %v401
      %v1825 = vadd.f32 %v1823, 1e-05
      %v1826 = vadd.f32 %v1824, 1e-05
      %v1827 = vrsqrt.pop %v1825
      %v1828 = vrsqrt.pop %v1826
      %v1829 = vmul.f32 %v1813, %v1827
      %v1830 = vmul.f32 %v1814, %v1828
      %v1831 = vmul.f32 %v1829, %v1803
      %v1832 = vmul.f32 %v1830, %v1803
      %v1833 = vadd.f32 %v1831, %v1804
      %v1834 = vadd.f32 %v1832, %v1804
      %v1835 = vld [vmem:[%s10 + $0x22] ss:$0 sm:$0xff]
      %v1836 = vpack.c.bf16 %v1834, %v1833
      %v1837 = vld [vmem:[%s8] sm:$0xf]
      %v1838 = vld [vmem:[%s8 + $0x4] sm:$0xf]
      %v1839 = vld [vmem:[%s8 + $0x8] sm:$0xf]
      %v1840 = vld [vmem:[%s8 + $0xc] sm:$0xf]
      %v1841 = vld [vmem:[%s8 + $0x10] sm:$0xf]
      %v1842 = vld [vmem:[%s8 + $0x14] sm:$0xf]
      %v1843 = vld [vmem:[%s8 + $0x18] sm:$0xf]
      %v1844 = vld [vmem:[%s8 + $0x1c] sm:$0xf]
      %v1853 = vunpack.c.l.b16 %v1837
      %v1854 = vunpack.c.l.b16 %v1838
      %v1855 = vunpack.c.l.b16 %v1839
      %v1856 = vunpack.c.l.b16 %v1840
      %v1857 = vunpack.c.l.b16 %v1841
      %v1858 = vunpack.c.l.b16 %v1842
      %v1859 = vunpack.c.l.b16 %v1843
      %v1860 = vunpack.c.l.b16 %v1844
      %v1861 = vpack.c.b16 %v1854, %v1853
      %v1862 = vpack.c.b16 %v1856, %v1855
      %v1863 = vpack.c.b16 %v1858, %v1857
      %v1864 = vpack.c.b16 %v1860, %v1859
      %v1870 = vsel %vm394, %v1836, 0
      %1872 = vmatprep.subr.bf16.mxu0 0
      %1873 = vmatpush1.bf16.msra.mxu0 %v1861
      %1874 = vmatprep.subr.bf16.mxu0 0
      %1875 = vmatpush1.bf16.msra.mxu0 %v1862
      %1876 = vmatprep.subr.bf16.mxu0 0
      %1877 = vmatpush1.bf16.msra.mxu0 %v1863
      %1878 = vmatprep.subr.bf16.mxu0 0
      %1879 = vmatpush1.bf16.msra.mxu0 %v1864
      %1880 = vmatprep.subr.bf16.mxu0 0
      %1881 = vmatpush1.bf16.msra.mxu0 0
      %1882 = vmatprep.subr.bf16.mxu0 0
      %1883 = vmatpush1.bf16.msra.mxu0 0
      %1884 = vmatprep.subr.bf16.mxu0 0
      %1885 = vmatpush1.bf16.msra.mxu0 0
      %1886 = vmatprep.subr.bf16.mxu0 0
      %1887 = vmatpush1.bf16.msra.mxu0 0
      %1888 = vmatprep.subr.bf16.mxu0 0
      %1889 = vmatpush1.bf16.msra.mxu0 0
      %1890 = vmatprep.subr.bf16.mxu0 0
      %1891 = vmatpush1.bf16.msra.mxu0 0
      %1892 = vmatprep.subr.bf16.mxu0 0
      %1893 = vmatpush1.bf16.msra.mxu0 0
      %1894 = vmatprep.subr.bf16.mxu0 0
      %1895 = vmatpush1.bf16.msra.mxu0 0
      %1896 = vmatprep.subr.bf16.mxu0 0
      %1897 = vmatpush1.bf16.msra.mxu0 0
      %1898 = vmatprep.subr.bf16.mxu0 0
      %1899 = vmatpush1.bf16.msra.mxu0 0
      %1900 = vmatprep.subr.bf16.mxu0 0
      %1901 = vmatpush1.bf16.msra.mxu0 0
      %1902 = vmatprep.subr.bf16.mxu0 0
      %1903 = vmatpush1.bf16.msra.mxu0 0
      %1904 = vmatprep.mubr.bf16.mxu0 0
      %1905 = vmatmul.mubr.bf16.gmra.mrb[0].mxu0 %v1870
      %v1906 = vpop.f32.mrb[0].mxu0
      %v1907 = vadd.f32 %v1835, %v1906
      %v1908 = vpop.f32.mrb[0].mxu0
      %v1909 = vpop.f32.mrb[0].mxu0
      %v1910 = vadd.f32 %v1835, %v1909
      %v1911 = vpop.f32.mrb[0].mxu0
      %1912 = vdwg.mxu0
      %v1913 = vxor.u32 %v1907, 2147483648
      %v1914 = vxor.u32 %v1910, 2147483648
      %v1915 = vmul.f32 %v1913, 1.442695
      %v1916 = vpow.pop %v1915
      %v1917 = vmul.f32 %v1914, 1.442695
      %v1918 = vpow.pop %v1917
      %v1919 = vadd.f32 %v1916, 1.0
      %v1920 = vadd.f32 %v1918, 1.0
      %v1921 = vrcp.pop %v1919
      %v1922 = vmul.f32 1.0, %v1921
      %v1923 = vrcp.pop %v1920
      %v1924 = vmul.f32 1.0, %v1923
      %v1925 = vmul.f32 %v1907, %v1922
      %v1926 = vmul.f32 %v1910, %v1924
      %v1927 = vld [vmem:[%s10 + $0x23] ss:$0 sm:$0xff]
      %v1928 = vpack.c.bf16 %v1926, %v1925
      %v1929 = vld [vmem:[%s9] sm:$0xf]
      %v1930 = vld [vmem:[%s9 + $0x4] sm:$0xf]
      %v1931 = vld [vmem:[%s9 + $0x8] sm:$0xf]
      %v1932 = vld [vmem:[%s9 + $0xc] sm:$0xf]
      %v1933 = vld [vmem:[%s9 + $0x10] sm:$0xf]
      %v1934 = vld [vmem:[%s9 + $0x14] sm:$0xf]
      %v1935 = vld [vmem:[%s9 + $0x18] sm:$0xf]
      %v1936 = vld [vmem:[%s9 + $0x1c] sm:$0xf]
      %v1937 = vld [vmem:[%s9 + $0x20] sm:$0xf]
      %v1938 = vld [vmem:[%s9 + $0x24] sm:$0xf]
      %v1939 = vld [vmem:[%s9 + $0x28] sm:$0xf]
      %v1940 = vld [vmem:[%s9 + $0x2c] sm:$0xf]
      %v1941 = vld [vmem:[%s9 + $0x30] sm:$0xf]
      %v1942 = vld [vmem:[%s9 + $0x34] sm:$0xf]
      %v1943 = vld [vmem:[%s9 + $0x38] sm:$0xf]
      %v1944 = vld [vmem:[%s9 + $0x3c] sm:$0xf]
      %v1961 = vunpack.c.l.b16 %v1929
      %v1962 = vunpack.c.l.b16 %v1930
      %v1963 = vunpack.c.l.b16 %v1931
      %v1964 = vunpack.c.l.b16 %v1932
      %v1965 = vunpack.c.l.b16 %v1933
      %v1966 = vunpack.c.l.b16 %v1934
      %v1967 = vunpack.c.l.b16 %v1935
      %v1968 = vunpack.c.l.b16 %v1936
      %v1969 = vunpack.c.l.b16 %v1937
      %v1970 = vunpack.c.l.b16 %v1938
      %v1971 = vunpack.c.l.b16 %v1939
      %v1972 = vunpack.c.l.b16 %v1940
      %v1973 = vunpack.c.l.b16 %v1941
      %v1974 = vunpack.c.l.b16 %v1942
      %v1975 = vunpack.c.l.b16 %v1943
      %v1976 = vunpack.c.l.b16 %v1944
      %v1977 = vpack.c.b16 %v1962, %v1961
      %v1978 = vpack.c.b16 %v1964, %v1963
      %v1979 = vpack.c.b16 %v1966, %v1965
      %v1980 = vpack.c.b16 %v1968, %v1967
      %v1981 = vpack.c.b16 %v1970, %v1969
      %v1982 = vpack.c.b16 %v1972, %v1971
      %v1983 = vpack.c.b16 %v1974, %v1973
      %v1984 = vpack.c.b16 %v1976, %v1975
      %1993 = vmatprep.subr.bf16.mxu0 0
      %1994 = vmatpush1.bf16.msra.mxu0 %v1977
      %1995 = vmatprep.subr.bf16.mxu0 0
      %1996 = vmatpush1.bf16.msra.mxu0 %v1978
      %1997 = vmatprep.subr.bf16.mxu0 0
      %1998 = vmatpush1.bf16.msra.mxu0 %v1979
      %1999 = vmatprep.subr.bf16.mxu0 0
      %2000 = vmatpush1.bf16.msra.mxu0 %v1980
      %2001 = vmatprep.subr.bf16.mxu0 0
      %2002 = vmatpush1.bf16.msra.mxu0 %v1981
      %2003 = vmatprep.subr.bf16.mxu0 0
      %2004 = vmatpush1.bf16.msra.mxu0 %v1982
      %2005 = vmatprep.subr.bf16.mxu0 0
      %2006 = vmatpush1.bf16.msra.mxu0 %v1983
      %2007 = vmatprep.subr.bf16.mxu0 0
      %2008 = vmatpush1.bf16.msra.mxu0 %v1984
      %2009 = vmatprep.subr.bf16.mxu0 0
      %2010 = vmatpush1.bf16.msra.mxu0 0
      %2011 = vmatprep.subr.bf16.mxu0 0
      %2012 = vmatpush1.bf16.msra.mxu0 0
      %2013 = vmatprep.subr.bf16.mxu0 0
      %2014 = vmatpush1.bf16.msra.mxu0 0
      %2015 = vmatprep.subr.bf16.mxu0 0
      %2016 = vmatpush1.bf16.msra.mxu0 0
      %2017 = vmatprep.subr.bf16.mxu0 0
      %2018 = vmatpush1.bf16.msra.mxu0 0
      %2019 = vmatprep.subr.bf16.mxu0 0
      %2020 = vmatpush1.bf16.msra.mxu0 0
      %2021 = vmatprep.subr.bf16.mxu0 0
      %2022 = vmatpush1.bf16.msra.mxu0 0
      %2023 = vmatprep.subr.bf16.mxu0 0
      %2024 = vmatpush1.bf16.msra.mxu0 0
      %2025 = vmatprep.mubr.bf16.mxu0 0
      %2026 = vmatmul.mubr.bf16.gmra.mrb[0].mxu0 %v1928
      %v2027 = vpop.f32.mrb[0].mxu0
      %v2028 = vadd.f32 %v1927, %v2027
      %v2029 = vpop.f32.mrb[0].mxu0
      %v2030 = vpop.f32.mrb[0].mxu0
      %v2031 = vadd.f32 %v1927, %v2030
      %v2032 = vpop.f32.mrb[0].mxu0
      %2033 = vdwg.mxu0
      %v2034 = vmul.f32 %v2028, 0.5
      %v2035 = vmul.f32 %v2031, 0.5
      %v2036 = vadd.f32 %v1801, %v2034
      %v2037 = vadd.f32 %v1802, %v2035
      %v2038 = vld [vmem:[%s10 + $0x24] ss:$0 sm:$0xff]
      %v2039 = vld [vmem:[%s10 + $0x25] ss:$0 sm:$0xff]
      %v2040 = vsel %vm394, %v2036, 0.0
      %2041 = vadd.xlane.f32.xlu0 %v2040
      %v2042 = vpop.xlane.xlu0 %2041
      %v2043 = vsel %vm394, %v2037, 0.0
      %2044 = vadd.xlane.f32.xlu0 %v2043
      %v2045 = vpop.xlane.xlu0 %2044
      %v2046 = vmul.f32 %v2042, %v401
      %v2047 = vmul.f32 %v2045, %v401
      %v2048 = vsub.f32 %v2036, %v2046
      %v2049 = vsub.f32 %v2037, %v2047
      %v2050 = vmul.f32 %v2048, %v2048
      %v2051 = vmul.f32 %v2049, %v2049
      %v2052 = vsel %vm394, %v2050, 0.0
      %2053 = vadd.xlane.f32.xlu0 %v2052
      %v2054 = vpop.xlane.xlu0 %2053
      %v2055 = vsel %vm394, %v2051, 0.0
      %2056 = vadd.xlane.f32.xlu0 %v2055
      %v2057 = vpop.xlane.xlu0 %2056
      %v2058 = vmul.f32 %v2054, %v401
      %v2059 = vmul.f32 %v2057, %v401
      %v2060 = vadd.f32 %v2058, 1e-05
      %v2061 = vadd.f32 %v2059, 1e-05
      %v2062 = vrsqrt.pop %v2060
      %v2063 = vrsqrt.pop %v2061
      %v2064 = vmul.f32 %v2048, %v2062
      %v2065 = vmul.f32 %v2049, %v2063
      %v2066 = vmul.f32 %v2064, %v2038
      %v2067 = vmul.f32 %v2065, %v2038
      %v2068 = vadd.f32 %v2066, %v2039
      %v2069 = vadd.f32 %v2067, %v2039
      %v2070 = vpack.c.bf16 %v2069, %v2068
      %v2072 = vunpack.c.l.b16 %v2070
      %v2073 = vunpack.c.h.b16 %v2070
      %v2074 = vpack.c.b16 %v2072, %v2072
      %v2075 = vpack.c.b16 %v2073, %v2073
      %vm2078 = vcmask 519168
      %2079 = vst.msk [vmem:[%s386] sm:$0xf] %vm2078, %v2074
      %2080 = vst.msk [vmem:[%s386 + $0x4] sm:$0xf] %vm2078, %v2075
      %p2081 = scmp.lt.s32.totalorder %s22, 1
      %s2082 = scalar_select %p2081, %s22, 1
      %s2083 = smul.addr %s2082, 2
      %s2084 = smul.addr %s2083, 4
      %s2085 = scalar_lea.vmem %s11, %s2084
      // Predicated region
      $region65: #{streaming_conformer_forward.5} parent=63 // pred_check
        %p2086 = pneg %p276
      $region66: #{streaming_conformer_forward.5} parent=63 // pred_check_branch
        %2088 = sbr.rel (%p2086) target = $region68
      $region67: #{streaming_conformer_forward.5} parent=63 // pred_region
        _
      $region68: #{streaming_conformer_forward.5} parent=63 // pred_fallthru
        _
    $region64: #{streaming_conformer_forward.5} parent=5 // pred_fallthru
      _
    %p2089 = scmp.le.s32.totalorder 2, %s17
    // Predicated region
    $region69: #{streaming_conformer_forward.5} parent=5 // pred_check
      %p2090 = pneg %p2089
    $region70: #{streaming_conformer_forward.5} parent=5 // pred_check_branch
      %2092 = sbr.rel (%p2090) target = $region72
    $region71: #{streaming_conformer_forward.5} parent=5 // pred_region
      %s2093 = ssub.s32 %s17, 2
      // Predicated region
      $region73: #{streaming_conformer_forward.5} parent=71 // pred_check
        %p2094 = pneg %p282
      $region74: #{streaming_conformer_forward.5} parent=71 // pred_check_branch
        %2096 = sbr.rel (%p2094) target = $region76
      $region75: #{streaming_conformer_forward.5} parent=71 // pred_region
        %p2097 = scmp.lt.s32.totalorder %s23, 1
        %s2098 = scalar_select %p2097, %s23, 1
        %s2099 = smul.addr %s2098, 2
        %s2100 = smul.addr %s2099, 4
        %s2101 = scalar_lea.vmem %s11, %s2100
      $region76: #{streaming_conformer_forward.5} parent=71 // pred_fallthru
        _
    $region72: #{streaming_conformer_forward.5} parent=5 // pred_fallthru
      _
  $region6: #{streaming_conformer_forward.5} parent=0 // loop_footer
    %s21 = sadd.s32 1, %s17
  $region7: #{streaming_conformer_forward.5} parent=0 // loop_footer_branch
    %16 = sbr.rel target = $region3
  $region8: #{streaming_conformer_forward.5} parent=0 // loop_exit
    _

</llo_original>
